<compile_context>
chip_gen: v7x
topology: tpu7x:2x2x1
jax: 0.10.0
libtpu: 0.0.40
codegen_flags: <defaults>
</compile_context>

<pallas_src>
import functools
import math

import jax
import jax.numpy as jnp
from jax.experimental import pallas as pl
from jax.experimental.pallas import tpu as pltpu

NEG_INF = -1000000000.0          # matches masked_fill(-1e9) in the reference
_LN_EPS = 1e-12                  # reference LayerNorm eps


def _vmem_capacity_bytes():
    try:
        cap = int(pltpu.get_tpu_info().vmem_capacity_bytes)
        if cap >= 32 * 1024 * 1024:
            return cap
    except Exception:
        pass
    return 64 * 1024 * 1024      # v7x-safe fallback


_VMEM_CAP = _vmem_capacity_bytes()
_VMEM_LIMIT = int(min(0.75 * _VMEM_CAP, 112 * 1024 * 1024))   # ~96 MiB on 128 MiB chips, 48 MiB on v7x
_ROW_TILE_CAP = 1024 if _VMEM_CAP >= (100 << 20) else 256


# ----------------------------- in-kernel math helpers -----------------------------

def _softmax_last(x):
    m = jnp.max(x, axis=-1, keepdims=True)
    e = jnp.exp(x - m)
    return e * pl.reciprocal(jnp.sum(e, axis=-1, keepdims=True), approx=True)


def _erf(x):
    # TODO(synk): Mosaic has no erf primitive; Abramowitz&Stegun 7.1.26 rational
    # approximation (abs err <= 1.5e-7, f32-level agreement with torch.erf).
    a1, a2, a3, a4, a5 = 0.254829592, -0.284496736, 1.421413741, -1.453152027, 1.061405429
    pp = 0.3275911
    ax = jnp.abs(x)
    t = 1.0 / (1.0 + pp * ax)
    poly = ((((a5 * t + a4) * t + a3) * t + a2) * t + a1) * t
    y = 1.0 - poly * jnp.exp(-ax * ax)
    return jnp.where(x < 0.0, -y, y)


def _gelu(x):
    # erf-based GELU, as in the reference `gelu()` (kept in f32 on the VPU)
    return x * 0.5 * (1.0 + _erf(x / math.sqrt(2.0)))


def _layernorm(x, g, b):
    mean = jnp.mean(x, axis=-1, keepdims=True)
    var = jnp.mean((x - mean) ** 2, axis=-1, keepdims=True)
    return g * ((x - mean) / jnp.sqrt(var + _LN_EPS)) + b


def _bf16(x):
    return x.astype(jnp.bfloat16)


def _row_tile(rows, cap):
    """Row tile (multiple of 8 or full) <= cap, preferring an even number of tiles."""
    if rows <= cap:
        if rows % 16 == 0:
            return rows // 2          # two tiles -> both v7x cores get work
        return rows
    best = None
    t = cap - (cap % 8)
    while t >= 8:
        if rows % t == 0:
            if (rows // t) % 2 == 0:
                return t
            if best is None:
                best = t
        t -= 8
    return best if best is not None else rows


def _batch_tile(B, cap=8):
    """Largest divisor of B <= cap leaving an even grid (v7x has 2 TCs); else largest divisor."""
    best_even, best_any = None, 1
    for d in range(1, min(B, cap) + 1):
        if B % d == 0:
            best_any = d
            if (B // d) % 2 == 0:
                best_even = d
    return best_even if best_even is not None else best_any


def _cparams(dims):
    return pltpu.CompilerParams(dimension_semantics=dims, vmem_limit_bytes=_VMEM_LIMIT)


# ----------------------------- Pallas kernels -----------------------------

def _pos_ln_kernel(x_ref, pos_ref, g_ref, b_ref, o_ref):
    # x: (bb, T, D), pos: (T, D)  ->  LN(x + pos)
    y = x_ref[...] + pos_ref[...]
    o_ref[...] = _layernorm(y, g_ref[...], b_ref[...])


def _attn_block_kernel(x_ref, m_ref, wqkv_ref, bqkv_ref, wo_ref, bo_ref, x1_ref,
                       *, heads, d_model, scale):
    # Block of bb batch elements: fused QKV projection + per-head attention
    # (batched over bb) + per-head output projection accumulate + residual.
    # Outputs x1 = x + MHA(x); norm_in is folded into the following FFN kernel.
    bb, T, D = x_ref.shape
    dk = d_model // heads
    x = x_ref[...]                                          # [bb, T, D] f32
    bias = jnp.where(m_ref[...] == 0.0, NEG_INF, 0.0)       # [bb, 1, T] additive key mask
    qkv = jnp.dot(_bf16(x), wqkv_ref[...],
                  preferred_element_type=jnp.float32) + bqkv_ref[...]   # [bb, T, 3D]
    wo = wo_ref[...]                                        # [D, D] bf16
    y = jnp.zeros((bb, T, D), jnp.float32)
    for hh in range(heads):                                 # static unroll; heads is tiny
        qh = qkv[:, :, hh * dk:(hh + 1) * dk] * scale       # scale folded into q (T*dk elems)
        kh = qkv[:, :, d_model + hh * dk:d_model + (hh + 1) * dk]
        vh = qkv[:, :, 2 * d_model + hh * dk:2 * d_model + (hh + 1) * dk]
        s = jnp.einsum('bqd,bkd->bqk', _bf16(qh), _bf16(kh),
                       preferred_element_type=jnp.float32) + bias        # [bb, T, T]
        p = _softmax_last(s)
        ph = jnp.einsum('bqk,bkd->bqd', _bf16(p), _bf16(vh),
                        preferred_element_type=jnp.float32)              # [bb, T, dk]
        # concat(heads) @ Wo == sum_h head_h @ Wo[h*dk:(h+1)*dk]  (no concat)
        y = y + jnp.dot(_bf16(ph), wo[hh * dk:(hh + 1) * dk, :],
                        preferred_element_type=jnp.float32)              # [bb, T, D]
    x1_ref[...] = x + y + bo_ref[...]


def _ffn_block_kernel(x1_ref, w1_ref, b1_ref, w2_ref, b2_ref,
                      gin_ref, bin_ref, gout_ref, bout_ref, o_ref):
    # h = LN_in(x1) (folded here); LN_out(x1 + ff2(gelu(ff1(h))));
    # the [tm, dff] intermediate never touches HBM.
    x1 = x1_ref[...]
    h = _layernorm(x1, gin_ref[...], bin_ref[...])
    t = _gelu(jnp.dot(_bf16(h), w1_ref[...],
                      preferred_element_type=jnp.float32) + b1_ref[...])
    y = x1 + jnp.dot(_bf16(t), w2_ref[...],
                     preferred_element_type=jnp.float32) + b2_ref[...]
    o_ref[...] = _layernorm(y, gout_ref[...], bout_ref[...])


def _coattn_kernel(q_ref, k_ref, v_ref, rel_ref, m_ref,
                   wq_ref, bq_ref, wk_ref, bk_ref, emb_ref, o_ref, *, scale):
    # Reproduces SimAttn + concept_attention for bb batch elements:
    #   align[t1] = sum_t2 p[t1,t2] * (value[t2] + rel[t1,:,t2] . emb)
    # rel block is (bb, T1, C, T2); hL/hR ([B,T,T,D]) are never materialized.
    q = jnp.dot(_bf16(q_ref[...]), wq_ref[...],
                preferred_element_type=jnp.float32) + bq_ref[...]        # [bb, T1, D]
    k = jnp.dot(_bf16(k_ref[...]), wk_ref[...],
                preferred_element_type=jnp.float32) + bk_ref[...]        # [bb, T2, D]
    bias = jnp.where(m_ref[...] == 0.0, NEG_INF, 0.0)                    # [bb, 1, T2]
    q = q * scale                                                        # 1/sqrt(D) folded into q
    s = jnp.einsum('bqd,bkd->bqk', _bf16(q), _bf16(k),
                   preferred_element_type=jnp.float32) + bias            # [bb, T1, T2]
    p = _softmax_last(s)
    align = jnp.einsum('bqk,bkd->bqd', _bf16(p), _bf16(v_ref[...]),
                       preferred_element_type=jnp.float32)               # [bb, T1, D]
    # fused concept contraction: one reduce + one small MXU matmul
    wc = jnp.sum(p[:, :, None, :] * rel_ref[...], axis=-1)               # [bb, T1, C]
    align = align + jnp.dot(_bf16(wc), emb_ref[...],
                            preferred_element_type=jnp.float32)          # [bb, T1, D]
    o_ref[...] = align


def _fuse_proj_kernel(x_ref, a_ref, w_ref, o_ref, *, d):
    # cat([x, a, x-a, x*a], -1) @ W  ==  4 accumulating matmuls (no concat)
    x = x_ref[...]
    al = a_ref[...]
    w = w_ref[...]                                          # [4D, Dout] bf16

    def mm(v, lo):
        return jnp.dot(_bf16(v), w[lo:lo + d, :], preferred_element_type=jnp.float32)

    o_ref[...] = mm(x, 0) + mm(al, d) + mm(x - al, 2 * d) + mm(x * al, 3 * d)


def _pool_head_kernel(x_ref, m_ref, wfc_ref, bfc_ref, ww_ref, bw_ref, ave_ref, max_ref):
    # Block of bb batch elements: uw = weight(gelu(fc(x))); masked softmax pooling
    # over T (lane axis) + unmasked max pooling.  The [B,T,1] activation never
    # touches HBM.
    x = x_ref[...]                                          # [bb, T, D] f32
    h = _gelu(jnp.dot(_bf16(x), wfc_ref[...],
                      preferred_element_type=jnp.float32) + bfc_ref[...])   # [bb, T, H]
    uw = jnp.sum(h * ww_ref[...], axis=-1) + bw_ref[...]    # [bb, T]
    m = m_ref[:, 0, :]                                      # [bb, T]
    s = jnp.where(m == 0.0, NEG_INF, uw)
    smax = jnp.max(s, axis=-1, keepdims=True)
    e = jnp.exp(s - smax)
    w = e * pl.reciprocal(jnp.sum(e, axis=-1, keepdims=True), approx=True)  # [bb, T]
    ave_ref[...] = jnp.einsum('bqt,btd->bqd', w[:, None, :], x,
                              preferred_element_type=jnp.float32)           # [bb, 1, D]
    max_ref[...] = jnp.max(x, axis=1, keepdims=True)        # [bb, 1, D] (unmasked, as in reference)


def _tail_kernel(qa_ref, qm_ref, aa_ref, am_ref, wp_ref, wc1_ref, bc1_ref, wc2_ref, bc2_ref,
                 o_ref, *, d):
    # final = cat(q_ave, q_max, a_ave, a_max) @ proj (no bias, no concat); classifier.
    wp = wp_ref[...]                                        # [4D, H] bf16

    def mm(v, lo):
        return jnp.dot(_bf16(v), wp[lo:lo + d, :], preferred_element_type=jnp.float32)

    f = mm(qa_ref[...], 0) + mm(qm_ref[...], d) + mm(aa_ref[...], 2 * d) + mm(am_ref[...], 3 * d)
    h = jnp.tanh(jnp.dot(_bf16(f), wc1_ref[...],
                         preferred_element_type=jnp.float32) + bc1_ref[...])
    o_ref[...] = jnp.dot(_bf16(h), wc2_ref[...],
                         preferred_element_type=jnp.float32) + bc2_ref[...]


# ----------------------------- wrappers (glue) -----------------------------

def positional_encoding(x, params):
    B, T, D = x.shape
    bb = _batch_tile(B)
    pos = params["pos_emb"][:T]
    return pl.pallas_call(
        _pos_ln_kernel,
        grid=(B // bb,),
        in_specs=[pl.BlockSpec((bb, T, D), lambda b: (b, 0, 0)),
                  pl.BlockSpec((T, D), lambda b: (0, 0)),
                  pl.BlockSpec((1, D), lambda b: (0, 0)),
                  pl.BlockSpec((1, D), lambda b: (0, 0))],
        out_specs=pl.BlockSpec((bb, T, D), lambda b: (b, 0, 0)),
        out_shape=jax.ShapeDtypeStruct((B, T, D), jnp.float32),
        compiler_params=_cparams(("parallel",)),
    )(x, pos, params["pos_ln_g"].reshape(1, D), params["pos_ln_b"].reshape(1, D))


def ffn_block(x1, p):
    B, T, D = x1.shape
    dff = p["ff1"]["w"].shape[1]
    rows = B * T
    tm = _row_tile(rows, _ROW_TILE_CAP)
    out = pl.pallas_call(
        _ffn_block_kernel,
        grid=(rows // tm,),
        in_specs=[pl.BlockSpec((tm, D), lambda i: (i, 0)),
                  pl.BlockSpec((D, dff), lambda i: (0, 0)),
                  pl.BlockSpec((1, dff), lambda i: (0, 0)),
                  pl.BlockSpec((dff, D), lambda i: (0, 0)),
                  pl.BlockSpec((1, D), lambda i: (0, 0)),
                  pl.BlockSpec((1, D), lambda i: (0, 0)),
                  pl.BlockSpec((1, D), lambda i: (0, 0)),
                  pl.BlockSpec((1, D), lambda i: (0, 0)),
                  pl.BlockSpec((1, D), lambda i: (0, 0))],
        out_specs=pl.BlockSpec((tm, D), lambda i: (i, 0)),
        out_shape=jax.ShapeDtypeStruct((rows, D), jnp.float32),
        compiler_params=_cparams(("parallel",)),
    )(x1.reshape(rows, D),
      p["ff1"]["w"], p["ff1"]["b"].reshape(1, dff),
      p["ff2"]["w"], p["ff2"]["b"].reshape(1, D),
      p["ln_in_g"].reshape(1, D), p["ln_in_b"].reshape(1, D),
      p["ln_out_g"].reshape(1, D), p["ln_out_b"].reshape(1, D))
    return out.reshape(B, T, D)


def encoder_layer(x, mask3, p, heads):
    B, T, D = x.shape
    assert D % heads == 0
    dk = D // heads
    bb = _batch_tile(B)
    x1 = pl.pallas_call(
        functools.partial(_attn_block_kernel, heads=heads, d_model=D,
                          scale=1.0 / math.sqrt(dk)),
        grid=(B // bb,),
        in_specs=[pl.BlockSpec((bb, T, D), lambda b: (b, 0, 0)),
                  pl.BlockSpec((bb, 1, T), lambda b: (b, 0, 0)),
                  pl.BlockSpec((D, 3 * D), lambda b: (0, 0)),
                  pl.BlockSpec((1, 3 * D), lambda b: (0, 0)),
                  pl.BlockSpec((D, D), lambda b: (0, 0)),
                  pl.BlockSpec((1, D), lambda b: (0, 0))],
        out_specs=pl.BlockSpec((bb, T, D), lambda b: (b, 0, 0)),
        out_shape=jax.ShapeDtypeStruct((B, T, D), jnp.float32),
        compiler_params=_cparams(("parallel",)),
    )(x, mask3, p["wqkv"], p["bqkv"].reshape(1, 3 * D),
      p["wo"]["w"], p["wo"]["b"].reshape(1, D))
    return ffn_block(x1, p)


def coattention(query, key, value, rel, key_mask3, params):
    # rel: [B, T1, C, T2] with rel[b, t1, c, t2] = original_concept[b, t2, t1, c]
    B, T1, D = query.shape
    T2 = key.shape[1]
    C = rel.shape[2]
    bb = _batch_tile(B)
    return pl.pallas_call(
        functools.partial(_coattn_kernel, scale=1.0 / math.sqrt(D)),
        grid=(B // bb,),
        in_specs=[pl.BlockSpec((bb, T1, D), lambda b: (b, 0, 0)),
                  pl.BlockSpec((bb, T2, D), lambda b: (b, 0, 0)),
                  pl.BlockSpec((bb, T2, D), lambda b: (b, 0, 0)),
                  pl.BlockSpec((bb, T1, C, T2), lambda b: (b, 0, 0, 0)),
                  pl.BlockSpec((bb, 1, T2), lambda b: (b, 0, 0)),
                  pl.BlockSpec((D, D), lambda b: (0, 0)),
                  pl.BlockSpec((1, D), lambda b: (0, 0)),
                  pl.BlockSpec((D, D), lambda b: (0, 0)),
                  pl.BlockSpec((1, D), lambda b: (0, 0)),
                  pl.BlockSpec((C, D), lambda b: (0, 0))],
        out_specs=pl.BlockSpec((bb, T1, D), lambda b: (b, 0, 0)),
        out_shape=jax.ShapeDtypeStruct((B, T1, D), jnp.float32),
        compiler_params=_cparams(("parallel",)),
    )(query, key, value, rel, key_mask3,
      params["co_fwQ"]["w"], params["co_fwQ"]["b"].reshape(1, D),
      params["co_fwK"]["w"], params["co_fwK"]["b"].reshape(1, D),
      params["concept_emb"])


def fuse_proj(x, x_align, w):
    B, T, D = x.shape
    dout = w.shape[1]
    rows = B * T
    tm = _row_tile(rows, _ROW_TILE_CAP)
    out = pl.pallas_call(
        functools.partial(_fuse_proj_kernel, d=D),
        grid=(rows // tm,),
        in_specs=[pl.BlockSpec((tm, D), lambda i: (i, 0)),
                  pl.BlockSpec((tm, D), lambda i: (i, 0)),
                  pl.BlockSpec((4 * D, dout), lambda i: (0, 0))],
        out_specs=pl.BlockSpec((tm, dout), lambda i: (i, 0)),
        out_shape=jax.ShapeDtypeStruct((rows, dout), jnp.float32),
        compiler_params=_cparams(("parallel",)),
    )(x.reshape(rows, D), x_align.reshape(rows, D), w)
    return out.reshape(B, T, dout)


def pool_head(x, mask, fc, weight):
    B, T, D = x.shape
    H = fc["w"].shape[1]
    bb = _batch_tile(B)
    mask3 = mask.reshape(B, 1, T).astype(jnp.float32)
    ave, mx = pl.pallas_call(
        _pool_head_kernel,
        grid=(B // bb,),
        in_specs=[pl.BlockSpec((bb, T, D), lambda b: (b, 0, 0)),
                  pl.BlockSpec((bb, 1, T), lambda b: (b, 0, 0)),
                  pl.BlockSpec((D, H), lambda b: (0, 0)),
                  pl.BlockSpec((1, H), lambda b: (0, 0)),
                  pl.BlockSpec((1, H), lambda b: (0, 0)),
                  pl.BlockSpec((1, 1), lambda b: (0, 0))],
        out_specs=(pl.BlockSpec((bb, 1, D), lambda b: (b, 0, 0)),
                   pl.BlockSpec((bb, 1, D), lambda b: (b, 0, 0))),
        out_shape=(jax.ShapeDtypeStruct((B, 1, D), jnp.float32),
                   jax.ShapeDtypeStruct((B, 1, D), jnp.float32)),
        compiler_params=_cparams(("parallel",)),
    )(x, mask3, fc["w"], fc["b"].reshape(1, H),
      weight["w"].reshape(1, H), weight["b"].reshape(1, 1))
    return ave.reshape(B, D), mx.reshape(B, D)


def tail(q_ave, q_max, a_ave, a_max, params):
    B, D = q_ave.shape
    H = params["cls1"]["w"].shape[0]
    return pl.pallas_call(
        functools.partial(_tail_kernel, d=D),
        out_shape=jax.ShapeDtypeStruct((B, 3), jnp.float32),
        compiler_params=pltpu.CompilerParams(vmem_limit_bytes=_VMEM_LIMIT),
    )(q_ave, q_max, a_ave, a_max,
      params["proj"]["w"],
      params["cls1"]["w"], params["cls1"]["b"].reshape(1, H),
      params["cls2"]["w"], params["cls2"]["b"].reshape(1, 3))


# ----------------------------- full forward -----------------------------

def qaeasyconcept_forward(params, question, answer, qmask, amask,
                          qa_concept, aq_concept, *, heads):
    B, Tq, D = question.shape
    Ta = answer.shape[1]
    qmask3 = qmask.reshape(B, 1, Tq).astype(jnp.float32)
    amask3 = amask.reshape(B, 1, Ta).astype(jnp.float32)

    question = positional_encoding(question, params)
    answer = positional_encoding(answer, params)
    for lp in params["enc_q"]:
        question = encoder_layer(question, qmask3, lp, heads)
    for lp in params["enc_a"]:
        answer = encoder_layer(answer, amask3, lp, heads)

    # Concept relations in the kernel-canonical [B, T1, C, T2] layout; hL/hR
    # ([B,T,T,D]) are never materialized in HBM -- the emb contraction happens
    # inside the co-attention kernel.
    # TODO(synk): callers can supply the concept tensors pre-transposed to avoid
    # this (small) wrapper-side HBM round trip.
    aq_rel = jnp.transpose(aq_concept, (0, 2, 3, 1))   # [B, Tq, C, Ta]
    qa_rel = jnp.transpose(qa_concept, (0, 2, 3, 1))   # [B, Ta, C, Tq]

    q_align = coattention(question, answer, answer, aq_rel, amask3, params)
    a_align = coattention(answer, question, question, qa_rel, qmask3, params)

    question = fuse_proj(question, q_align, params["proj_q"]["w"])
    answer = fuse_proj(answer, a_align, params["proj_a"]["w"])

    for lp in params["enc_qq"]:
        question = encoder_layer(question, qmask3, lp, heads)
    for lp in params["enc_aa"]:
        answer = encoder_layer(answer, amask3, lp, heads)

    q_ave, q_max = pool_head(question, qmask, params["fc_q"], params["weight_q"])
    a_ave, a_max = pool_head(answer, amask, params["fc_a"], params["weight_a"])

    score = tail(q_ave, q_max, a_ave, a_max, params)
    return score, None, None


# ----------------------------- deterministic parameter init -----------------------------

def _init_dense(key, din, dout, std=0.02, dtype=jnp.bfloat16):
    # Matmul weights stored in bf16 (MXU-native, halves weight DMA); biases f32.
    # (Orthogonal-init layers of the reference use the same normal init here.)
    return {"w": (std * jax.random.normal(key, (din, dout), jnp.float32)).astype(dtype),
            "b": jnp.zeros((dout,), jnp.float32)}


def _init_encoder_layer(key, d, dff):
    ks = jax.random.split(key, 6)
    wq = 0.02 * jax.random.normal(ks[0], (d, d), jnp.float32)
    wk = 0.02 * jax.random.normal(ks[1], (d, d), jnp.float32)
    wv = 0.02 * jax.random.normal(ks[2], (d, d), jnp.float32)
    return {
        "wqkv": jnp.concatenate([wq, wk, wv], axis=1).astype(jnp.bfloat16),   # fused [d, 3d]
        "bqkv": jnp.zeros((3 * d,), jnp.float32),
        "wo": _init_dense(ks[3], d, d),
        "ff1": _init_dense(ks[4], d, dff),
        "ff2": _init_dense(ks[5], dff, d),
        "ln_in_g": jnp.ones((d,), jnp.float32), "ln_in_b": jnp.zeros((d,), jnp.float32),
        "ln_out_g": jnp.ones((d,), jnp.float32), "ln_out_b": jnp.zeros((d,), jnp.float32),
    }


def init_params(key, *, d, hidden, num_layers, num_layers_cross, num_concepts, max_len):
    ks = jax.random.split(key, 17)
    return {
        "pos_emb": 0.02 * jax.random.normal(ks[0], (max_len, d), jnp.float32),
        "pos_ln_g": jnp.ones((d,), jnp.float32),
        "pos_ln_b": jnp.zeros((d,), jnp.float32),
        "concept_emb": (0.02 * jax.random.normal(ks[1], (num_concepts, d), jnp.float32)
                        ).astype(jnp.bfloat16),
        "co_fwQ": _init_dense(ks[2], d, d),
        "co_fwK": _init_dense(ks[3], d, d),
        "proj_q": _init_dense(ks[4], 4 * d, d),
        "proj_a": _init_dense(ks[5], 4 * d, d),
        "fc_q": _init_dense(ks[6], d, hidden),
        "fc_a": _init_dense(ks[7], d, hidden),
        # weight_q/a are used elementwise (VPU), keep f32
        "weight_q": _init_dense(ks[8], hidden, 1, dtype=jnp.float32),
        "weight_a": _init_dense(ks[9], hidden, 1, dtype=jnp.float32),
        "proj": _init_dense(ks[10], 4 * d, hidden),
        "cls1": _init_dense(ks[11], hidden, hidden),
        "cls2": _init_dense(ks[12], hidden, 3),
        "enc_q": [_init_encoder_layer(k, d, hidden) for k in jax.random.split(ks[13], num_layers)],
        "enc_a": [_init_encoder_layer(k, d, hidden) for k in jax.random.split(ks[14], num_layers)],
        "enc_qq": [_init_encoder_layer(k, d, hidden)
                   for k in jax.random.split(ks[15], num_layers_cross)],
        "enc_aa": [_init_encoder_layer(k, d, hidden)
                   for k in jax.random.split(ks[16], num_layers_cross)],
    }


# ----------------------------- demo -----------------------------

if __name__ == "__main__":
    B, Tq, Ta = 2, 8, 8
    D, HID, HEADS, C = 32, 32, 4, 5          # embd_dim, hidden_size, heads, num_concepts
    NUM_LAYERS, NUM_LAYERS_CROSS = 2, 2

    params = init_params(jax.random.PRNGKey(0), d=D, hidden=HID,
                         num_layers=NUM_LAYERS, num_layers_cross=NUM_LAYERS_CROSS,
                         num_concepts=C, max_len=64)

    kq, ka, kc1, kc2 = jax.random.split(jax.random.PRNGKey(0), 4)
    question = jax.random.normal(kq, (B, Tq, D), jnp.float32)
    answer = jax.random.normal(ka, (B, Ta, D), jnp.float32)
    qa_concept = (jax.random.uniform(kc1, (B, Tq, Ta, C)) < 0.3).astype(jnp.float32)
    aq_concept = (jax.random.uniform(kc2, (B, Ta, Tq, C)) < 0.3).astype(jnp.float32)
    qmask = jnp.ones((B, Tq), jnp.float32).at[:, -1].set(0.0)
    amask = jnp.ones((B, Ta), jnp.float32).at[:, -2:].set(0.0)

    fwd = jax.jit(qaeasyconcept_forward, static_argnames=("heads",))
    score, _, _ = fwd(params, question, answer, qmask, amask,
                      qa_concept, aq_concept, heads=HEADS)
    jax.block_until_ready(score)
    assert score.shape == (B, 3) and score.dtype == jnp.float32
    print("KERNEL_OK")
</pallas_src>

<mosaic_0001>
module attributes {stable_mosaic.version = 11 : i64} {
  func.func @_pos_ln_kernel(%arg0: i32, %arg1: memref<1x8x32xf32, #tpu.memory_space<vmem>>, %arg2: memref<8x32xf32, #tpu.memory_space<vmem>>, %arg3: memref<1x32xf32, #tpu.memory_space<vmem>>, %arg4: memref<1x32xf32, #tpu.memory_space<vmem>>, %arg5: memref<1x8x32xf32, #tpu.memory_space<vmem>>) attributes {dimension_semantics = [#tpu.dimension_semantics<parallel>], iteration_bounds = array<i64: 2>, scalar_prefetch = 0 : i64, scratch_operands = 0 : i64, tpu.core_type = #tpu.core_type<tc>, window_params = [{transform_indices = @transform_0, window_bounds = array<i64: 1, 8, 32>}, {pipeline_mode = #tpu.pipeline_mode<synchronous>, transform_indices = @transform_1, window_bounds = array<i64: 8, 32>}, {pipeline_mode = #tpu.pipeline_mode<synchronous>, transform_indices = @transform_2, window_bounds = array<i64: 1, 32>}, {pipeline_mode = #tpu.pipeline_mode<synchronous>, transform_indices = @transform_3, window_bounds = array<i64: 1, 32>}, {transform_indices = @transform_4, window_bounds = array<i64: 1, 8, 32>}]} {
    %c0 = arith.constant 0 : index
    %c0_0 = arith.constant 0 : index
    %c0_1 = arith.constant 0 : index
    %0 = vector.load %arg1[%c0, %c0_0, %c0_1] : memref<1x8x32xf32, #tpu.memory_space<vmem>>, vector<1x8x32xf32>
    %c0_2 = arith.constant 0 : index
    %c0_3 = arith.constant 0 : index
    %1 = vector.load %arg2[%c0_2, %c0_3] : memref<8x32xf32, #tpu.memory_space<vmem>>, vector<8x32xf32>
    %2 = vector.shape_cast %1 : vector<8x32xf32> to vector<1x8x32xf32>
    %3 = arith.addf %0, %2 : vector<1x8x32xf32>
    %c0_4 = arith.constant 0 : index
    %c0_5 = arith.constant 0 : index
    %4 = vector.load %arg3[%c0_4, %c0_5] : memref<1x32xf32, #tpu.memory_space<vmem>>, vector<1x32xf32>
    %c0_6 = arith.constant 0 : index
    %c0_7 = arith.constant 0 : index
    %5 = vector.load %arg4[%c0_6, %c0_7] : memref<1x32xf32, #tpu.memory_space<vmem>>, vector<1x32xf32>
    %cst = arith.constant dense<0.000000e+00> : vector<1x8xf32>
    %6 = vector.multi_reduction <add>, %3, %cst [2] : vector<1x8x32xf32> to vector<1x8xf32>
    %7 = vector.shape_cast %6 : vector<1x8xf32> to vector<1x8x1xf32>
    %cst_8 = arith.constant 3.200000e+01 : f32
    %8 = vector.broadcast %cst_8 : f32 to vector<1x8x1xf32>
    %9 = arith.divf %7, %8 : vector<1x8x1xf32>
    %10 = vector.broadcast %9 : vector<1x8x1xf32> to vector<1x8x32xf32>
    %11 = arith.subf %3, %10 : vector<1x8x32xf32>
    %12 = arith.mulf %11, %11 : vector<1x8x32xf32>
    %cst_9 = arith.constant dense<0.000000e+00> : vector<1x8xf32>
    %13 = vector.multi_reduction <add>, %12, %cst_9 [2] : vector<1x8x32xf32> to vector<1x8xf32>
    %14 = vector.shape_cast %13 : vector<1x8xf32> to vector<1x8x1xf32>
    %cst_10 = arith.constant 3.200000e+01 : f32
    %15 = vector.broadcast %cst_10 : f32 to vector<1x8x1xf32>
    %16 = arith.divf %14, %15 : vector<1x8x1xf32>
    %17 = vector.broadcast %9 : vector<1x8x1xf32> to vector<1x8x32xf32>
    %18 = arith.subf %3, %17 : vector<1x8x32xf32>
    %cst_11 = arith.constant 9.99999996E-13 : f32
    %19 = vector.broadcast %cst_11 : f32 to vector<1x8x1xf32>
    %20 = arith.addf %16, %19 : vector<1x8x1xf32>
    %21 = math.sqrt %20 : vector<1x8x1xf32>
    %22 = vector.broadcast %21 : vector<1x8x1xf32> to vector<1x8x32xf32>
    %23 = arith.divf %18, %22 : vector<1x8x32xf32>
    %24 = vector.shape_cast %4 : vector<1x32xf32> to vector<1x1x32xf32>
    %25 = vector.broadcast %24 : vector<1x1x32xf32> to vector<1x8x32xf32>
    %26 = arith.mulf %25, %23 : vector<1x8x32xf32>
    %27 = vector.shape_cast %5 : vector<1x32xf32> to vector<1x1x32xf32>
    %28 = vector.broadcast %27 : vector<1x1x32xf32> to vector<1x8x32xf32>
    %29 = arith.addf %26, %28 : vector<1x8x32xf32>
    %c0_12 = arith.constant 0 : index
    %c0_13 = arith.constant 0 : index
    %c0_14 = arith.constant 0 : index
    %30 = vector.load %arg5[%c0_12, %c0_13, %c0_14] : memref<1x8x32xf32, #tpu.memory_space<vmem>>, vector<1x8x32xf32>
    tpu.vector_store %arg5[%c0_12, %c0_13, %c0_14], %29 {strides = array<i32>} : memref<1x8x32xf32, #tpu.memory_space<vmem>>, vector<1x8x32xf32>,
    return
  }
  func.func @transform_0(%arg0: i32) -> (i32, i32, i32) {
    %c0_i32 = arith.constant 0 : i32
    %c0_i32_0 = arith.constant 0 : i32
    %c0_i32_1 = arith.constant 0 : i32
    return %arg0, %c0_i32, %c0_i32_0 : i32, i32, i32
  }
  func.func @transform_1(%arg0: i32) -> (i32, i32) {
    %c0_i32 = arith.constant 0 : i32
    %c0_i32_0 = arith.constant 0 : i32
    %c0_i32_1 = arith.constant 0 : i32
    return %c0_i32, %c0_i32_0 : i32, i32
  }
  func.func @transform_2(%arg0: i32) -> (i32, i32) {
    %c0_i32 = arith.constant 0 : i32
    %c0_i32_0 = arith.constant 0 : i32
    %c0_i32_1 = arith.constant 0 : i32
    return %c0_i32, %c0_i32_0 : i32, i32
  }
  func.func @transform_3(%arg0: i32) -> (i32, i32) {
    %c0_i32 = arith.constant 0 : i32
    %c0_i32_0 = arith.constant 0 : i32
    %c0_i32_1 = arith.constant 0 : i32
    return %c0_i32, %c0_i32_0 : i32, i32
  }
  func.func @transform_4(%arg0: i32) -> (i32, i32, i32) {
    %c0_i32 = arith.constant 0 : i32
    %c0_i32_0 = arith.constant 0 : i32
    %c0_i32_1 = arith.constant 0 : i32
    return %arg0, %c0_i32, %c0_i32_0 : i32, i32, i32
  }
}

module attributes {stable_mosaic.version = 11 : i64} {
  func.func @_ffn_block_kernel(%arg0: i32, %arg1: memref<8x32xf32, #tpu.memory_space<vmem>>, %arg2: memref<32x32xbf16, #tpu.memory_space<vmem>>, %arg3: memref<1x32xf32, #tpu.memory_space<vmem>>, %arg4: memref<32x32xbf16, #tpu.memory_space<vmem>>, %arg5: memref<1x32xf32, #tpu.memory_space<vmem>>, %arg6: memref<1x32xf32, #tpu.memory_space<vmem>>, %arg7: memref<1x32xf32, #tpu.memory_space<vmem>>, %arg8: memref<1x32xf32, #tpu.memory_space<vmem>>, %arg9: memref<1x32xf32, #tpu.memory_space<vmem>>, %arg10: memref<8x32xf32, #tpu.memory_space<vmem>>) attributes {dimension_semantics = [#tpu.dimension_semantics<parallel>], iteration_bounds = array<i64: 2>, scalar_prefetch = 0 : i64, scratch_operands = 0 : i64, tpu.core_type = #tpu.core_type<tc>, window_params = [{transform_indices = @transform_0, window_bounds = array<i64: 8, 32>}, {pipeline_mode = #tpu.pipeline_mode<synchronous>, transform_indices = @transform_1, window_bounds = array<i64: 32, 32>}, {pipeline_mode = #tpu.pipeline_mode<synchronous>, transform_indices = @transform_2, window_bounds = array<i64: 1, 32>}, {pipeline_mode = #tpu.pipeline_mode<synchronous>, transform_indices = @transform_3, window_bounds = array<i64: 32, 32>}, {pipeline_mode = #tpu.pipeline_mode<synchronous>, transform_indices = @transform_4, window_bounds = array<i64: 1, 32>}, {pipeline_mode = #tpu.pipeline_mode<synchronous>, transform_indices = @transform_5, window_bounds = array<i64: 1, 32>}, {pipeline_mode = #tpu.pipeline_mode<synchronous>, transform_indices = @transform_6, window_bounds = array<i64: 1, 32>}, {pipeline_mode = #tpu.pipeline_mode<synchronous>, transform_indices = @transform_7, window_bounds = array<i64: 1, 32>}, {pipeline_mode = #tpu.pipeline_mode<synchronous>, transform_indices = @transform_8, window_bounds = array<i64: 1, 32>}, {transform_indices = @transform_9, window_bounds = array<i64: 8, 32>}]} {
    %c0 = arith.constant 0 : index
    %c0_0 = arith.constant 0 : index
    %0 = vector.load %arg1[%c0, %c0_0] : memref<8x32xf32, #tpu.memory_space<vmem>>, vector<8x32xf32>
    %c0_1 = arith.constant 0 : index
    %c0_2 = arith.constant 0 : index
    %1 = vector.load %arg6[%c0_1, %c0_2] : memref<1x32xf32, #tpu.memory_space<vmem>>, vector<1x32xf32>
    %c0_3 = arith.constant 0 : index
    %c0_4 = arith.constant 0 : index
    %2 = vector.load %arg7[%c0_3, %c0_4] : memref<1x32xf32, #tpu.memory_space<vmem>>, vector<1x32xf32>
    %cst = arith.constant dense<0.000000e+00> : vector<8xf32>
    %3 = vector.multi_reduction <add>, %0, %cst [1] : vector<8x32xf32> to vector<8xf32>
    %4 = vector.shape_cast %3 : vector<8xf32> to vector<8x1xf32>
    %cst_5 = arith.constant 3.200000e+01 : f32
    %5 = vector.broadcast %cst_5 : f32 to vector<8x1xf32>
    %6 = arith.divf %4, %5 : vector<8x1xf32>
    %7 = vector.broadcast %6 : vector<8x1xf32> to vector<8x32xf32>
    %8 = arith.subf %0, %7 : vector<8x32xf32>
    %9 = arith.mulf %8, %8 : vector<8x32xf32>
    %cst_6 = arith.constant dense<0.000000e+00> : vector<8xf32>
    %10 = vector.multi_reduction <add>, %9, %cst_6 [1] : vector<8x32xf32> to vector<8xf32>
    %11 = vector.shape_cast %10 : vector<8xf32> to vector<8x1xf32>
    %cst_7 = arith.constant 3.200000e+01 : f32
    %12 = vector.broadcast %cst_7 : f32 to vector<8x1xf32>
    %13 = arith.divf %11, %12 : vector<8x1xf32>
    %14 = vector.broadcast %6 : vector<8x1xf32> to vector<8x32xf32>
    %15 = arith.subf %0, %14 : vector<8x32xf32>
    %cst_8 = arith.constant 9.99999996E-13 : f32
    %16 = vector.broadcast %cst_8 : f32 to vector<8x1xf32>
    %17 = arith.addf %13, %16 : vector<8x1xf32>
    %18 = math.sqrt %17 : vector<8x1xf32>
    %19 = vector.broadcast %18 : vector<8x1xf32> to vector<8x32xf32>
    %20 = arith.divf %15, %19 : vector<8x32xf32>
    %21 = vector.broadcast %1 : vector<1x32xf32> to vector<8x32xf32>
    %22 = arith.mulf %21, %20 : vector<8x32xf32>
    %23 = vector.broadcast %2 : vector<1x32xf32> to vector<8x32xf32>
    %24 = arith.addf %22, %23 : vector<8x32xf32>
    %25 = arith.truncf %24 : vector<8x32xf32> to vector<8x32xbf16>
    %c0_9 = arith.constant 0 : index
    %c0_10 = arith.constant 0 : index
    %26 = vector.load %arg2[%c0_9, %c0_10] : memref<32x32xbf16, #tpu.memory_space<vmem>>, vector<32x32xbf16>
    %cst_11 = arith.constant dense<0.000000e+00> : vector<8x32xf32>
    %27 = tpu.matmul %25, %26, %cst_11 {dimension_numbers = #tpu.dot_dimension_numbers<[1], [0], [0], [1], [0, 0, 1, 1], [], []>} : vector<8x32xbf16>, vector<32x32xbf16>, vector<8x32xf32> -> vector<8x32xf32>
    %c0_12 = arith.constant 0 : index
    %c0_13 = arith.constant 0 : index
    %28 = vector.load %arg3[%c0_12, %c0_13] : memref<1x32xf32, #tpu.memory_space<vmem>>, vector<1x32xf32>
    %29 = vector.broadcast %28 : vector<1x32xf32> to vector<8x32xf32>
    %30 = arith.addf %27, %29 : vector<8x32xf32>
    %cst_14 = arith.constant 5.000000e-01 : f32
    %31 = vector.broadcast %cst_14 : f32 to vector<8x32xf32>
    %32 = arith.mulf %30, %31 : vector<8x32xf32>
    %cst_15 = arith.constant 1.41421354 : f32
    %33 = vector.broadcast %cst_15 : f32 to vector<8x32xf32>
    %34 = arith.divf %30, %33 : vector<8x32xf32>
    %35 = math.absf %34 : vector<8x32xf32>
    %cst_16 = arith.constant 0.327591091 : f32
    %36 = vector.broadcast %cst_16 : f32 to vector<8x32xf32>
    %37 = arith.mulf %36, %35 : vector<8x32xf32>
    %cst_17 = arith.constant 1.000000e+00 : f32
    %38 = vector.broadcast %cst_17 : f32 to vector<8x32xf32>
    %39 = arith.addf %38, %37 : vector<8x32xf32>
    %cst_18 = arith.constant 1.000000e+00 : f32
    %40 = vector.broadcast %cst_18 : f32 to vector<8x32xf32>
    %41 = arith.divf %40, %39 : vector<8x32xf32>
    %cst_19 = arith.constant 1.06140542 : f32
    %42 = vector.broadcast %cst_19 : f32 to vector<8x32xf32>
    %43 = arith.mulf %42, %41 : vector<8x32xf32>
    %cst_20 = arith.constant -1.45315206 : f32
    %44 = vector.broadcast %cst_20 : f32 to vector<8x32xf32>
    %45 = arith.addf %43, %44 : vector<8x32xf32>
    %46 = arith.mulf %45, %41 : vector<8x32xf32>
    %cst_21 = arith.constant 1.42141378 : f32
    %47 = vector.broadcast %cst_21 : f32 to vector<8x32xf32>
    %48 = arith.addf %46, %47 : vector<8x32xf32>
    %49 = arith.mulf %48, %41 : vector<8x32xf32>
    %cst_22 = arith.constant -0.284496725 : f32
    %50 = vector.broadcast %cst_22 : f32 to vector<8x32xf32>
    %51 = arith.addf %49, %50 : vector<8x32xf32>
    %52 = arith.mulf %51, %41 : vector<8x32xf32>
    %cst_23 = arith.constant 0.254829586 : f32
    %53 = vector.broadcast %cst_23 : f32 to vector<8x32xf32>
    %54 = arith.addf %52, %53 : vector<8x32xf32>
    %55 = arith.mulf %54, %41 : vector<8x32xf32>
    %cst_24 = arith.constant 0.000000e+00 : f32
    %56 = vector.broadcast %cst_24 : f32 to vector<8x32xf32>
    %57 = arith.subf %56, %35 : vector<8x32xf32>
    %58 = arith.mulf %57, %35 : vector<8x32xf32>
    %59 = math.exp %58 : vector<8x32xf32>
    %60 = arith.mulf %55, %59 : vector<8x32xf32>
    %cst_25 = arith.constant 1.000000e+00 : f32
    %61 = vector.broadcast %cst_25 : f32 to vector<8x32xf32>
    %62 = arith.subf %61, %60 : vector<8x32xf32>
    %cst_26 = arith.constant 0.000000e+00 : f32
    %63 = vector.broadcast %cst_26 : f32 to vector<8x32xf32>
    %64 = arith.cmpf olt, %34, %63 : vector<8x32xf32>
    %cst_27 = arith.constant 0.000000e+00 : f32
    %65 = vector.broadcast %cst_27 : f32 to vector<8x32xf32>
    %66 = arith.subf %65, %62 : vector<8x32xf32>
    %67 = arith.select %64, %66, %62 : vector<8x32xi1>, vector<8x32xf32>
    %cst_28 = arith.constant 1.000000e+00 : f32
    %68 = vector.broadcast %cst_28 : f32 to vector<8x32xf32>
    %69 = arith.addf %68, %67 : vector<8x32xf32>
    %70 = arith.mulf %32, %69 : vector<8x32xf32>
    %71 = arith.truncf %70 : vector<8x32xf32> to vector<8x32xbf16>
    %c0_29 = arith.constant 0 : index
    %c0_30 = arith.constant 0 : index
    %72 = vector.load %arg4[%c0_29, %c0_30] : memref<32x32xbf16, #tpu.memory_space<vmem>>, vector<32x32xbf16>
    %cst_31 = arith.constant dense<0.000000e+00> : vector<8x32xf32>
    %73 = tpu.matmul %71, %72, %cst_31 {dimension_numbers = #tpu.dot_dimension_numbers<[1], [0], [0], [1], [0, 0, 1, 1], [], []>} : vector<8x32xbf16>, vector<32x32xbf16>, vector<8x32xf32> -> vector<8x32xf32>
    %74 = arith.addf %0, %73 : vector<8x32xf32>
    %c0_32 = arith.constant 0 : index
    %c0_33 = arith.constant 0 : index
    %75 = vector.load %arg5[%c0_32, %c0_33] : memref<1x32xf32, #tpu.memory_space<vmem>>, vector<1x32xf32>
    %76 = vector.broadcast %75 : vector<1x32xf32> to vector<8x32xf32>
    %77 = arith.addf %74, %76 : vector<8x32xf32>
    %c0_34 = arith.constant 0 : index
    %c0_35 = arith.constant 0 : index
    %78 = vector.load %arg8[%c0_34, %c0_35] : memref<1x32xf32, #tpu.memory_space<vmem>>, vector<1x32xf32>
    %c0_36 = arith.constant 0 : index
    %c0_37 = arith.constant 0 : index
    %79 = vector.load %arg9[%c0_36, %c0_37] : memref<1x32xf32, #tpu.memory_space<vmem>>, vector<1x32xf32>
    %cst_38 = arith.constant dense<0.000000e+00> : vector<8xf32>
    %80 = vector.multi_reduction <add>, %77, %cst_38 [1] : vector<8x32xf32> to vector<8xf32>
    %81 = vector.shape_cast %80 : vector<8xf32> to vector<8x1xf32>
    %cst_39 = arith.constant 3.200000e+01 : f32
    %82 = vector.broadcast %cst_39 : f32 to vector<8x1xf32>
    %83 = arith.divf %81, %82 : vector<8x1xf32>
    %84 = vector.broadcast %83 : vector<8x1xf32> to vector<8x32xf32>
    %85 = arith.subf %77, %84 : vector<8x32xf32>
    %86 = arith.mulf %85, %85 : vector<8x32xf32>
    %cst_40 = arith.constant dense<0.000000e+00> : vector<8xf32>
    %87 = vector.multi_reduction <add>, %86, %cst_40 [1] : vector<8x32xf32> to vector<8xf32>
    %88 = vector.shape_cast %87 : vector<8xf32> to vector<8x1xf32>
    %cst_41 = arith.constant 3.200000e+01 : f32
    %89 = vector.broadcast %cst_41 : f32 to vector<8x1xf32>
    %90 = arith.divf %88, %89 : vector<8x1xf32>
    %91 = vector.broadcast %83 : vector<8x1xf32> to vector<8x32xf32>
    %92 = arith.subf %77, %91 : vector<8x32xf32>
    %cst_42 = arith.constant 9.99999996E-13 : f32
    %93 = vector.broadcast %cst_42 : f32 to vector<8x1xf32>
    %94 = arith.addf %90, %93 : vector<8x1xf32>
    %95 = math.sqrt %94 : vector<8x1xf32>
    %96 = vector.broadcast %95 : vector<8x1xf32> to vector<8x32xf32>
    %97 = arith.divf %92, %96 : vector<8x32xf32>
    %98 = vector.broadcast %78 : vector<1x32xf32> to vector<8x32xf32>
    %99 = arith.mulf %98, %97 : vector<8x32xf32>
    %100 = vector.broadcast %79 : vector<1x32xf32> to vector<8x32xf32>
    %101 = arith.addf %99, %100 : vector<8x32xf32>
    %c0_43 = arith.constant 0 : index
    %c0_44 = arith.constant 0 : index
    %102 = vector.load %arg10[%c0_43, %c0_44] : memref<8x32xf32, #tpu.memory_space<vmem>>, vector<8x32xf32>
    tpu.vector_store %arg10[%c0_43, %c0_44], %101 {strides = array<i32>} : memref<8x32xf32, #tpu.memory_space<vmem>>, vector<8x32xf32>,
    return
  }
  func.func @transform_0(%arg0: i32) -> (i32, i32) {
    %c0_i32 = arith.constant 0 : i32
    %c0_i32_0 = arith.constant 0 : i32
    return %arg0, %c0_i32 : i32, i32
  }
  func.func @transform_1(%arg0: i32) -> (i32, i32) {
    %c0_i32 = arith.constant 0 : i32
    %c0_i32_0 = arith.constant 0 : i32
    %c0_i32_1 = arith.constant 0 : i32
    return %c0_i32, %c0_i32_0 : i32, i32
  }
  func.func @transform_2(%arg0: i32) -> (i32, i32) {
    %c0_i32 = arith.constant 0 : i32
    %c0_i32_0 = arith.constant 0 : i32
    %c0_i32_1 = arith.constant 0 : i32
    return %c0_i32, %c0_i32_0 : i32, i32
  }
  func.func @transform_3(%arg0: i32) -> (i32, i32) {
    %c0_i32 = arith.constant 0 : i32
    %c0_i32_0 = arith.constant 0 : i32
    %c0_i32_1 = arith.constant 0 : i32
    return %c0_i32, %c0_i32_0 : i32, i32
  }
  func.func @transform_4(%arg0: i32) -> (i32, i32) {
    %c0_i32 = arith.constant 0 : i32
    %c0_i32_0 = arith.constant 0 : i32
    %c0_i32_1 = arith.constant 0 : i32
    return %c0_i32, %c0_i32_0 : i32, i32
  }
  func.func @transform_5(%arg0: i32) -> (i32, i32) {
    %c0_i32 = arith.constant 0 : i32
    %c0_i32_0 = arith.constant 0 : i32
    %c0_i32_1 = arith.constant 0 : i32
    return %c0_i32, %c0_i32_0 : i32, i32
  }
  func.func @transform_6(%arg0: i32) -> (i32, i32) {
    %c0_i32 = arith.constant 0 : i32
    %c0_i32_0 = arith.constant 0 : i32
    %c0_i32_1 = arith.constant 0 : i32
    return %c0_i32, %c0_i32_0 : i32, i32
  }
  func.func @transform_7(%arg0: i32) -> (i32, i32) {
    %c0_i32 = arith.constant 0 : i32
    %c0_i32_0 = arith.constant 0 : i32
    %c0_i32_1 = arith.constant 0 : i32
    return %c0_i32, %c0_i32_0 : i32, i32
  }
  func.func @transform_8(%arg0: i32) -> (i32, i32) {
    %c0_i32 = arith.constant 0 : i32
    %c0_i32_0 = arith.constant 0 : i32
    %c0_i32_1 = arith.constant 0 : i32
    return %c0_i32, %c0_i32_0 : i32, i32
  }
  func.func @transform_9(%arg0: i32) -> (i32, i32) {
    %c0_i32 = arith.constant 0 : i32
    %c0_i32_0 = arith.constant 0 : i32
    return %arg0, %c0_i32 : i32, i32
  }
}

module attributes {stable_mosaic.version = 11 : i64} {
  func.func @_attn_block_kernel(%arg0: i32, %arg1: memref<1x8x32xf32, #tpu.memory_space<vmem>>, %arg2: memref<1x1x8xf32, #tpu.memory_space<vmem>>, %arg3: memref<32x96xbf16, #tpu.memory_space<vmem>>, %arg4: memref<1x96xf32, #tpu.memory_space<vmem>>, %arg5: memref<32x32xbf16, #tpu.memory_space<vmem>>, %arg6: memref<1x32xf32, #tpu.memory_space<vmem>>, %arg7: memref<1x8x32xf32, #tpu.memory_space<vmem>>) attributes {dimension_semantics = [#tpu.dimension_semantics<parallel>], iteration_bounds = array<i64: 2>, scalar_prefetch = 0 : i64, scratch_operands = 0 : i64, tpu.core_type = #tpu.core_type<tc>, window_params = [{transform_indices = @transform_0, window_bounds = array<i64: 1, 8, 32>}, {transform_indices = @transform_1, window_bounds = array<i64: 1, 1, 8>}, {pipeline_mode = #tpu.pipeline_mode<synchronous>, transform_indices = @transform_2, window_bounds = array<i64: 32, 96>}, {pipeline_mode = #tpu.pipeline_mode<synchronous>, transform_indices = @transform_3, window_bounds = array<i64: 1, 96>}, {pipeline_mode = #tpu.pipeline_mode<synchronous>, transform_indices = @transform_4, window_bounds = array<i64: 32, 32>}, {pipeline_mode = #tpu.pipeline_mode<synchronous>, transform_indices = @transform_5, window_bounds = array<i64: 1, 32>}, {transform_indices = @transform_6, window_bounds = array<i64: 1, 8, 32>}]} {
    %c0 = arith.constant 0 : index
    %c0_0 = arith.constant 0 : index
    %c0_1 = arith.constant 0 : index
    %0 = vector.load %arg1[%c0, %c0_0, %c0_1] : memref<1x8x32xf32, #tpu.memory_space<vmem>>, vector<1x8x32xf32>
    %c0_2 = arith.constant 0 : index
    %c0_3 = arith.constant 0 : index
    %c0_4 = arith.constant 0 : index
    %1 = vector.load %arg2[%c0_2, %c0_3, %c0_4] : memref<1x1x8xf32, #tpu.memory_space<vmem>>, vector<1x1x8xf32>
    %cst = arith.constant 0.000000e+00 : f32
    %2 = vector.broadcast %cst : f32 to vector<1x1x8xf32>
    %3 = arith.cmpf oeq, %1, %2 : vector<1x1x8xf32>
    %cst_5 = arith.constant -1.000000e+09 : f32
    %cst_6 = arith.constant 0.000000e+00 : f32
    %4 = vector.broadcast %cst_5 : f32 to vector<1x1x8xf32>
    %5 = vector.broadcast %cst_6 : f32 to vector<1x1x8xf32>
    %6 = arith.select %3, %4, %5 : vector<1x1x8xi1>, vector<1x1x8xf32>
    %7 = arith.truncf %0 : vector<1x8x32xf32> to vector<1x8x32xbf16>
    %c0_7 = arith.constant 0 : index
    %c0_8 = arith.constant 0 : index
    %8 = vector.load %arg3[%c0_7, %c0_8] : memref<32x96xbf16, #tpu.memory_space<vmem>>, vector<32x96xbf16>
    %cst_9 = arith.constant dense<0.000000e+00> : vector<1x8x96xf32>
    %9 = tpu.matmul %7, %8, %cst_9 {dimension_numbers = #tpu.dot_dimension_numbers<[2], [0], [0, 1], [1], [0, 0, 0, 1, 1, 1], [], []>} : vector<1x8x32xbf16>, vector<32x96xbf16>, vector<1x8x96xf32> -> vector<1x8x96xf32>
    %c0_10 = arith.constant 0 : index
    %c0_11 = arith.constant 0 : index
    %10 = vector.load %arg4[%c0_10, %c0_11] : memref<1x96xf32, #tpu.memory_space<vmem>>, vector<1x96xf32>
    %11 = vector.shape_cast %10 : vector<1x96xf32> to vector<1x1x96xf32>
    %12 = vector.broadcast %11 : vector<1x1x96xf32> to vector<1x8x96xf32>
    %13 = arith.addf %9, %12 : vector<1x8x96xf32>
    %c0_12 = arith.constant 0 : index
    %c0_13 = arith.constant 0 : index
    %14 = vector.load %arg5[%c0_12, %c0_13] : memref<32x32xbf16, #tpu.memory_space<vmem>>, vector<32x32xbf16>
    %cst_14 = arith.constant 0.000000e+00 : f32
    %15 = vector.broadcast %cst_14 : f32 to vector<1x8x32xf32>
    %16 = vector.extract_strided_slice %13 {offsets = [0, 0, 0], sizes = [1, 8, 8], strides = [1, 1, 1]} : vector<1x8x96xf32> to vector<1x8x8xf32>
    %cst_15 = arith.constant 0.353553385 : f32
    %17 = vector.broadcast %cst_15 : f32 to vector<1x8x8xf32>
    %18 = arith.mulf %16, %17 : vector<1x8x8xf32>
    %19 = vector.extract_strided_slice %13 {offsets = [0, 0, 32], sizes = [1, 8, 8], strides = [1, 1, 1]} : vector<1x8x96xf32> to vector<1x8x8xf32>
    %20 = vector.extract_strided_slice %13 {offsets = [0, 0, 64], sizes = [1, 8, 8], strides = [1, 1, 1]} : vector<1x8x96xf32> to vector<1x8x8xf32>
    %21 = arith.truncf %18 : vector<1x8x8xf32> to vector<1x8x8xbf16>
    %22 = arith.truncf %19 : vector<1x8x8xf32> to vector<1x8x8xbf16>
    "tpu.trace_start"() <{level = 10 : i32, message = "bqd,bkd->bqk"}> : () -> ()
    %cst_16 = arith.constant dense<0.000000e+00> : vector<1x8x8xf32>
    %23 = tpu.matmul %21, %22, %cst_16 {dimension_numbers = #tpu.dot_dimension_numbers<[2], [2], [1], [1], [0, 0, 0, 1, 1, 1], [0], [0]>} : vector<1x8x8xbf16>, vector<1x8x8xbf16>, vector<1x8x8xf32> -> vector<1x8x8xf32>
    "tpu.trace_stop"() : () -> ()
    %24 = vector.broadcast %6 : vector<1x1x8xf32> to vector<1x8x8xf32>
    %25 = arith.addf %23, %24 : vector<1x8x8xf32>
    %cst_17 = arith.constant dense<0xFF800000> : vector<1x8xf32>
    %26 = vector.multi_reduction <maximumf>, %25, %cst_17 [2] : vector<1x8x8xf32> to vector<1x8xf32>
    %27 = vector.shape_cast %26 : vector<1x8xf32> to vector<1x8x1xf32>
    %28 = vector.broadcast %27 : vector<1x8x1xf32> to vector<1x8x8xf32>
    %29 = arith.subf %25, %28 : vector<1x8x8xf32>
    %30 = math.exp %29 : vector<1x8x8xf32>
    %cst_18 = arith.constant dense<0.000000e+00> : vector<1x8xf32>
    %31 = vector.multi_reduction <add>, %30, %cst_18 [2] : vector<1x8x8xf32> to vector<1x8xf32>
    %32 = vector.shape_cast %31 : vector<1x8xf32> to vector<1x8x1xf32>
    %33 = tpu.reciprocal %32 {approx = true} : vector<1x8x1xf32> -> vector<1x8x1xf32>
    %34 = vector.broadcast %33 : vector<1x8x1xf32> to vector<1x8x8xf32>
    %35 = arith.mulf %30, %34 : vector<1x8x8xf32>
    %36 = arith.truncf %35 : vector<1x8x8xf32> to vector<1x8x8xbf16>
    %37 = arith.truncf %20 : vector<1x8x8xf32> to vector<1x8x8xbf16>
    "tpu.trace_start"() <{level = 10 : i32, message = "bqk,bkd->bqd"}> : () -> ()
    %cst_19 = arith.constant dense<0.000000e+00> : vector<1x8x8xf32>
    %38 = tpu.matmul %36, %37, %cst_19 {dimension_numbers = #tpu.dot_dimension_numbers<[2], [1], [1], [2], [0, 0, 0, 1, 1, 2], [0], [0]>} : vector<1x8x8xbf16>, vector<1x8x8xbf16>, vector<1x8x8xf32> -> vector<1x8x8xf32>
    "tpu.trace_stop"() : () -> ()
    %39 = arith.truncf %38 : vector<1x8x8xf32> to vector<1x8x8xbf16>
    %40 = vector.extract_strided_slice %14 {offsets = [0, 0], sizes = [8, 32], strides = [1, 1]} : vector<32x32xbf16> to vector<8x32xbf16>
    %cst_20 = arith.constant dense<0.000000e+00> : vector<1x8x32xf32>
    %41 = tpu.matmul %39, %40, %cst_20 {dimension_numbers = #tpu.dot_dimension_numbers<[2], [0], [0, 1], [1], [0, 0, 0, 1, 1, 1], [], []>} : vector<1x8x8xbf16>, vector<8x32xbf16>, vector<1x8x32xf32> -> vector<1x8x32xf32>
    %42 = arith.addf %15, %41 : vector<1x8x32xf32>
    %43 = vector.extract_strided_slice %13 {offsets = [0, 0, 8], sizes = [1, 8, 8], strides = [1, 1, 1]} : vector<1x8x96xf32> to vector<1x8x8xf32>
    %cst_21 = arith.constant 0.353553385 : f32
    %44 = vector.broadcast %cst_21 : f32 to vector<1x8x8xf32>
    %45 = arith.mulf %43, %44 : vector<1x8x8xf32>
    %46 = vector.extract_strided_slice %13 {offsets = [0, 0, 40], sizes = [1, 8, 8], strides = [1, 1, 1]} : vector<1x8x96xf32> to vector<1x8x8xf32>
    %47 = vector.extract_strided_slice %13 {offsets = [0, 0, 72], sizes = [1, 8, 8], strides = [1, 1, 1]} : vector<1x8x96xf32> to vector<1x8x8xf32>
    %48 = arith.truncf %45 : vector<1x8x8xf32> to vector<1x8x8xbf16>
    %49 = arith.truncf %46 : vector<1x8x8xf32> to vector<1x8x8xbf16>
    "tpu.trace_start"() <{level = 10 : i32, message = "bqd,bkd->bqk"}> : () -> ()
    %cst_22 = arith.constant dense<0.000000e+00> : vector<1x8x8xf32>
    %50 = tpu.matmul %48, %49, %cst_22 {dimension_numbers = #tpu.dot_dimension_numbers<[2], [2], [1], [1], [0, 0, 0, 1, 1, 1], [0], [0]>} : vector<1x8x8xbf16>, vector<1x8x8xbf16>, vector<1x8x8xf32> -> vector<1x8x8xf32>
    "tpu.trace_stop"() : () -> ()
    %51 = vector.broadcast %6 : vector<1x1x8xf32> to vector<1x8x8xf32>
    %52 = arith.addf %50, %51 : vector<1x8x8xf32>
    %cst_23 = arith.constant dense<0xFF800000> : vector<1x8xf32>
    %53 = vector.multi_reduction <maximumf>, %52, %cst_23 [2] : vector<1x8x8xf32> to vector<1x8xf32>
    %54 = vector.shape_cast %53 : vector<1x8xf32> to vector<1x8x1xf32>
    %55 = vector.broadcast %54 : vector<1x8x1xf32> to vector<1x8x8xf32>
    %56 = arith.subf %52, %55 : vector<1x8x8xf32>
    %57 = math.exp %56 : vector<1x8x8xf32>
    %cst_24 = arith.constant dense<0.000000e+00> : vector<1x8xf32>
    %58 = vector.multi_reduction <add>, %57, %cst_24 [2] : vector<1x8x8xf32> to vector<1x8xf32>
    %59 = vector.shape_cast %58 : vector<1x8xf32> to vector<1x8x1xf32>
    %60 = tpu.reciprocal %59 {approx = true} : vector<1x8x1xf32> -> vector<1x8x1xf32>
    %61 = vector.broadcast %60 : vector<1x8x1xf32> to vector<1x8x8xf32>
    %62 = arith.mulf %57, %61 : vector<1x8x8xf32>
    %63 = arith.truncf %62 : vector<1x8x8xf32> to vector<1x8x8xbf16>
    %64 = arith.truncf %47 : vector<1x8x8xf32> to vector<1x8x8xbf16>
    "tpu.trace_start"() <{level = 10 : i32, message = "bqk,bkd->bqd"}> : () -> ()
    %cst_25 = arith.constant dense<0.000000e+00> : vector<1x8x8xf32>
    %65 = tpu.matmul %63, %64, %cst_25 {dimension_numbers = #tpu.dot_dimension_numbers<[2], [1], [1], [2], [0, 0, 0, 1, 1, 2], [0], [0]>} : vector<1x8x8xbf16>, vector<1x8x8xbf16>, vector<1x8x8xf32> -> vector<1x8x8xf32>
    "tpu.trace_stop"() : () -> ()
    %66 = arith.truncf %65 : vector<1x8x8xf32> to vector<1x8x8xbf16>
    %67 = vector.extract_strided_slice %14 {offsets = [8, 0], sizes = [8, 32], strides = [1, 1]} : vector<32x32xbf16> to vector<8x32xbf16>
    %cst_26 = arith.constant dense<0.000000e+00> : vector<1x8x32xf32>
    %68 = tpu.matmul %66, %67, %cst_26 {dimension_numbers = #tpu.dot_dimension_numbers<[2], [0], [0, 1], [1], [0, 0, 0, 1, 1, 1], [], []>} : vector<1x8x8xbf16>, vector<8x32xbf16>, vector<1x8x32xf32> -> vector<1x8x32xf32>
    %69 = arith.addf %42, %68 : vector<1x8x32xf32>
    %70 = vector.extract_strided_slice %13 {offsets = [0, 0, 16], sizes = [1, 8, 8], strides = [1, 1, 1]} : vector<1x8x96xf32> to vector<1x8x8xf32>
    %cst_27 = arith.constant 0.353553385 : f32
    %71 = vector.broadcast %cst_27 : f32 to vector<1x8x8xf32>
    %72 = arith.mulf %70, %71 : vector<1x8x8xf32>
    %73 = vector.extract_strided_slice %13 {offsets = [0, 0, 48], sizes = [1, 8, 8], strides = [1, 1, 1]} : vector<1x8x96xf32> to vector<1x8x8xf32>
    %74 = vector.extract_strided_slice %13 {offsets = [0, 0, 80], sizes = [1, 8, 8], strides = [1, 1, 1]} : vector<1x8x96xf32> to vector<1x8x8xf32>
    %75 = arith.truncf %72 : vector<1x8x8xf32> to vector<1x8x8xbf16>
    %76 = arith.truncf %73 : vector<1x8x8xf32> to vector<1x8x8xbf16>
    "tpu.trace_start"() <{level = 10 : i32, message = "bqd,bkd->bqk"}> : () -> ()
    %cst_28 = arith.constant dense<0.000000e+00> : vector<1x8x8xf32>
    %77 = tpu.matmul %75, %76, %cst_28 {dimension_numbers = #tpu.dot_dimension_numbers<[2], [2], [1], [1], [0, 0, 0, 1, 1, 1], [0], [0]>} : vector<1x8x8xbf16>, vector<1x8x8xbf16>, vector<1x8x8xf32> -> vector<1x8x8xf32>
    "tpu.trace_stop"() : () -> ()
    %78 = vector.broadcast %6 : vector<1x1x8xf32> to vector<1x8x8xf32>
    %79 = arith.addf %77, %78 : vector<1x8x8xf32>
    %cst_29 = arith.constant dense<0xFF800000> : vector<1x8xf32>
    %80 = vector.multi_reduction <maximumf>, %79, %cst_29 [2] : vector<1x8x8xf32> to vector<1x8xf32>
    %81 = vector.shape_cast %80 : vector<1x8xf32> to vector<1x8x1xf32>
    %82 = vector.broadcast %81 : vector<1x8x1xf32> to vector<1x8x8xf32>
    %83 = arith.subf %79, %82 : vector<1x8x8xf32>
    %84 = math.exp %83 : vector<1x8x8xf32>
    %cst_30 = arith.constant dense<0.000000e+00> : vector<1x8xf32>
    %85 = vector.multi_reduction <add>, %84, %cst_30 [2] : vector<1x8x8xf32> to vector<1x8xf32>
    %86 = vector.shape_cast %85 : vector<1x8xf32> to vector<1x8x1xf32>
    %87 = tpu.reciprocal %86 {approx = true} : vector<1x8x1xf32> -> vector<1x8x1xf32>
    %88 = vector.broadcast %87 : vector<1x8x1xf32> to vector<1x8x8xf32>
    %89 = arith.mulf %84, %88 : vector<1x8x8xf32>
    %90 = arith.truncf %89 : vector<1x8x8xf32> to vector<1x8x8xbf16>
    %91 = arith.truncf %74 : vector<1x8x8xf32> to vector<1x8x8xbf16>
    "tpu.trace_start"() <{level = 10 : i32, message = "bqk,bkd->bqd"}> : () -> ()
    %cst_31 = arith.constant dense<0.000000e+00> : vector<1x8x8xf32>
    %92 = tpu.matmul %90, %91, %cst_31 {dimension_numbers = #tpu.dot_dimension_numbers<[2], [1], [1], [2], [0, 0, 0, 1, 1, 2], [0], [0]>} : vector<1x8x8xbf16>, vector<1x8x8xbf16>, vector<1x8x8xf32> -> vector<1x8x8xf32>
    "tpu.trace_stop"() : () -> ()
    %93 = arith.truncf %92 : vector<1x8x8xf32> to vector<1x8x8xbf16>
    %94 = vector.extract_strided_slice %14 {offsets = [16, 0], sizes = [8, 32], strides = [1, 1]} : vector<32x32xbf16> to vector<8x32xbf16>
    %cst_32 = arith.constant dense<0.000000e+00> : vector<1x8x32xf32>
    %95 = tpu.matmul %93, %94, %cst_32 {dimension_numbers = #tpu.dot_dimension_numbers<[2], [0], [0, 1], [1], [0, 0, 0, 1, 1, 1], [], []>} : vector<1x8x8xbf16>, vector<8x32xbf16>, vector<1x8x32xf32> -> vector<1x8x32xf32>
    %96 = arith.addf %69, %95 : vector<1x8x32xf32>
    %97 = vector.extract_strided_slice %13 {offsets = [0, 0, 24], sizes = [1, 8, 8], strides = [1, 1, 1]} : vector<1x8x96xf32> to vector<1x8x8xf32>
    %cst_33 = arith.constant 0.353553385 : f32
    %98 = vector.broadcast %cst_33 : f32 to vector<1x8x8xf32>
    %99 = arith.mulf %97, %98 : vector<1x8x8xf32>
    %100 = vector.extract_strided_slice %13 {offsets = [0, 0, 56], sizes = [1, 8, 8], strides = [1, 1, 1]} : vector<1x8x96xf32> to vector<1x8x8xf32>
    %101 = vector.extract_strided_slice %13 {offsets = [0, 0, 88], sizes = [1, 8, 8], strides = [1, 1, 1]} : vector<1x8x96xf32> to vector<1x8x8xf32>
    %102 = arith.truncf %99 : vector<1x8x8xf32> to vector<1x8x8xbf16>
    %103 = arith.truncf %100 : vector<1x8x8xf32> to vector<1x8x8xbf16>
    "tpu.trace_start"() <{level = 10 : i32, message = "bqd,bkd->bqk"}> : () -> ()
    %cst_34 = arith.constant dense<0.000000e+00> : vector<1x8x8xf32>
    %104 = tpu.matmul %102, %103, %cst_34 {dimension_numbers = #tpu.dot_dimension_numbers<[2], [2], [1], [1], [0, 0, 0, 1, 1, 1], [0], [0]>} : vector<1x8x8xbf16>, vector<1x8x8xbf16>, vector<1x8x8xf32> -> vector<1x8x8xf32>
    "tpu.trace_stop"() : () -> ()
    %105 = vector.broadcast %6 : vector<1x1x8xf32> to vector<1x8x8xf32>
    %106 = arith.addf %104, %105 : vector<1x8x8xf32>
    %cst_35 = arith.constant dense<0xFF800000> : vector<1x8xf32>
    %107 = vector.multi_reduction <maximumf>, %106, %cst_35 [2] : vector<1x8x8xf32> to vector<1x8xf32>
    %108 = vector.shape_cast %107 : vector<1x8xf32> to vector<1x8x1xf32>
    %109 = vector.broadcast %108 : vector<1x8x1xf32> to vector<1x8x8xf32>
    %110 = arith.subf %106, %109 : vector<1x8x8xf32>
    %111 = math.exp %110 : vector<1x8x8xf32>
    %cst_36 = arith.constant dense<0.000000e+00> : vector<1x8xf32>
    %112 = vector.multi_reduction <add>, %111, %cst_36 [2] : vector<1x8x8xf32> to vector<1x8xf32>
    %113 = vector.shape_cast %112 : vector<1x8xf32> to vector<1x8x1xf32>
    %114 = tpu.reciprocal %113 {approx = true} : vector<1x8x1xf32> -> vector<1x8x1xf32>
    %115 = vector.broadcast %114 : vector<1x8x1xf32> to vector<1x8x8xf32>
    %116 = arith.mulf %111, %115 : vector<1x8x8xf32>
    %117 = arith.truncf %116 : vector<1x8x8xf32> to vector<1x8x8xbf16>
    %118 = arith.truncf %101 : vector<1x8x8xf32> to vector<1x8x8xbf16>
    "tpu.trace_start"() <{level = 10 : i32, message = "bqk,bkd->bqd"}> : () -> ()
    %cst_37 = arith.constant dense<0.000000e+00> : vector<1x8x8xf32>
    %119 = tpu.matmul %117, %118, %cst_37 {dimension_numbers = #tpu.dot_dimension_numbers<[2], [1], [1], [2], [0, 0, 0, 1, 1, 2], [0], [0]>} : vector<1x8x8xbf16>, vector<1x8x8xbf16>, vector<1x8x8xf32> -> vector<1x8x8xf32>
    "tpu.trace_stop"() : () -> ()
    %120 = arith.truncf %119 : vector<1x8x8xf32> to vector<1x8x8xbf16>
    %121 = vector.extract_strided_slice %14 {offsets = [24, 0], sizes = [8, 32], strides = [1, 1]} : vector<32x32xbf16> to vector<8x32xbf16>
    %cst_38 = arith.constant dense<0.000000e+00> : vector<1x8x32xf32>
    %122 = tpu.matmul %120, %121, %cst_38 {dimension_numbers = #tpu.dot_dimension_numbers<[2], [0], [0, 1], [1], [0, 0, 0, 1, 1, 1], [], []>} : vector<1x8x8xbf16>, vector<8x32xbf16>, vector<1x8x32xf32> -> vector<1x8x32xf32>
    %123 = arith.addf %96, %122 : vector<1x8x32xf32>
    %124 = arith.addf %0, %123 : vector<1x8x32xf32>
    %c0_39 = arith.constant 0 : index
    %c0_40 = arith.constant 0 : index
    %125 = vector.load %arg6[%c0_39, %c0_40] : memref<1x32xf32, #tpu.memory_space<vmem>>, vector<1x32xf32>
    %126 = vector.shape_cast %125 : vector<1x32xf32> to vector<1x1x32xf32>
    %127 = vector.broadcast %126 : vector<1x1x32xf32> to vector<1x8x32xf32>
    %128 = arith.addf %124, %127 : vector<1x8x32xf32>
    %c0_41 = arith.constant 0 : index
    %c0_42 = arith.constant 0 : index
    %c0_43 = arith.constant 0 : index
    %129 = vector.load %arg7[%c0_41, %c0_42, %c0_43] : memref<1x8x32xf32, #tpu.memory_space<vmem>>, vector<1x8x32xf32>
    tpu.vector_store %arg7[%c0_41, %c0_42, %c0_43], %128 {strides = array<i32>} : memref<1x8x32xf32, #tpu.memory_space<vmem>>, vector<1x8x32xf32>,
    return
  }
  func.func @transform_0(%arg0: i32) -> (i32, i32, i32) {
    %c0_i32 = arith.constant 0 : i32
    %c0_i32_0 = arith.constant 0 : i32
    %c0_i32_1 = arith.constant 0 : i32
    return %arg0, %c0_i32, %c0_i32_0 : i32, i32, i32
  }
  func.func @transform_1(%arg0: i32) -> (i32, i32, i32) {
    %c0_i32 = arith.constant 0 : i32
    %c0_i32_0 = arith.constant 0 : i32
    %c0_i32_1 = arith.constant 0 : i32
    return %arg0, %c0_i32, %c0_i32_0 : i32, i32, i32
  }
  func.func @transform_2(%arg0: i32) -> (i32, i32) {
    %c0_i32 = arith.constant 0 : i32
    %c0_i32_0 = arith.constant 0 : i32
    %c0_i32_1 = arith.constant 0 : i32
    return %c0_i32, %c0_i32_0 : i32, i32
  }
  func.func @transform_3(%arg0: i32) -> (i32, i32) {
    %c0_i32 = arith.constant 0 : i32
    %c0_i32_0 = arith.constant 0 : i32
    %c0_i32_1 = arith.constant 0 : i32
    return %c0_i32, %c0_i32_0 : i32, i32
  }
  func.func @transform_4(%arg0: i32) -> (i32, i32) {
    %c0_i32 = arith.constant 0 : i32
    %c0_i32_0 = arith.constant 0 : i32
    %c0_i32_1 = arith.constant 0 : i32
    return %c0_i32, %c0_i32_0 : i32, i32
  }
  func.func @transform_5(%arg0: i32) -> (i32, i32) {
    %c0_i32 = arith.constant 0 : i32
    %c0_i32_0 = arith.constant 0 : i32
    %c0_i32_1 = arith.constant 0 : i32
    return %c0_i32, %c0_i32_0 : i32, i32
  }
  func.func @transform_6(%arg0: i32) -> (i32, i32, i32) {
    %c0_i32 = arith.constant 0 : i32
    %c0_i32_0 = arith.constant 0 : i32
    %c0_i32_1 = arith.constant 0 : i32
    return %arg0, %c0_i32, %c0_i32_0 : i32, i32, i32
  }
}

module attributes {stable_mosaic.version = 11 : i64} {
  func.func @_coattn_kernel(%arg0: i32, %arg1: memref<1x8x32xf32, #tpu.memory_space<vmem>>, %arg2: memref<1x8x32xf32, #tpu.memory_space<vmem>>, %arg3: memref<1x8x32xf32, #tpu.memory_space<vmem>>, %arg4: memref<1x8x5x8xf32, #tpu.memory_space<vmem>>, %arg5: memref<1x1x8xf32, #tpu.memory_space<vmem>>, %arg6: memref<32x32xbf16, #tpu.memory_space<vmem>>, %arg7: memref<1x32xf32, #tpu.memory_space<vmem>>, %arg8: memref<32x32xbf16, #tpu.memory_space<vmem>>, %arg9: memref<1x32xf32, #tpu.memory_space<vmem>>, %arg10: memref<5x32xbf16, #tpu.memory_space<vmem>>, %arg11: memref<1x8x32xf32, #tpu.memory_space<vmem>>) attributes {dimension_semantics = [#tpu.dimension_semantics<parallel>], iteration_bounds = array<i64: 2>, scalar_prefetch = 0 : i64, scratch_operands = 0 : i64, tpu.core_type = #tpu.core_type<tc>, window_params = [{transform_indices = @transform_0, window_bounds = array<i64: 1, 8, 32>}, {transform_indices = @transform_1, window_bounds = array<i64: 1, 8, 32>}, {transform_indices = @transform_2, window_bounds = array<i64: 1, 8, 32>}, {transform_indices = @transform_3, window_bounds = array<i64: 1, 8, 5, 8>}, {transform_indices = @transform_4, window_bounds = array<i64: 1, 1, 8>}, {pipeline_mode = #tpu.pipeline_mode<synchronous>, transform_indices = @transform_5, window_bounds = array<i64: 32, 32>}, {pipeline_mode = #tpu.pipeline_mode<synchronous>, transform_indices = @transform_6, window_bounds = array<i64: 1, 32>}, {pipeline_mode = #tpu.pipeline_mode<synchronous>, transform_indices = @transform_7, window_bounds = array<i64: 32, 32>}, {pipeline_mode = #tpu.pipeline_mode<synchronous>, transform_indices = @transform_8, window_bounds = array<i64: 1, 32>}, {pipeline_mode = #tpu.pipeline_mode<synchronous>, transform_indices = @transform_9, window_bounds = array<i64: 5, 32>}, {transform_indices = @transform_10, window_bounds = array<i64: 1, 8, 32>}]} {
    %c0 = arith.constant 0 : index
    %c0_0 = arith.constant 0 : index
    %c0_1 = arith.constant 0 : index
    %0 = vector.load %arg1[%c0, %c0_0, %c0_1] : memref<1x8x32xf32, #tpu.memory_space<vmem>>, vector<1x8x32xf32>
    %1 = arith.truncf %0 : vector<1x8x32xf32> to vector<1x8x32xbf16>
    %c0_2 = arith.constant 0 : index
    %c0_3 = arith.constant 0 : index
    %2 = vector.load %arg6[%c0_2, %c0_3] : memref<32x32xbf16, #tpu.memory_space<vmem>>, vector<32x32xbf16>
    %cst = arith.constant dense<0.000000e+00> : vector<1x8x32xf32>
    %3 = tpu.matmul %1, %2, %cst {dimension_numbers = #tpu.dot_dimension_numbers<[2], [0], [0, 1], [1], [0, 0, 0, 1, 1, 1], [], []>} : vector<1x8x32xbf16>, vector<32x32xbf16>, vector<1x8x32xf32> -> vector<1x8x32xf32>
    %c0_4 = arith.constant 0 : index
    %c0_5 = arith.constant 0 : index
    %4 = vector.load %arg7[%c0_4, %c0_5] : memref<1x32xf32, #tpu.memory_space<vmem>>, vector<1x32xf32>
    %5 = vector.shape_cast %4 : vector<1x32xf32> to vector<1x1x32xf32>
    %6 = vector.broadcast %5 : vector<1x1x32xf32> to vector<1x8x32xf32>
    %7 = arith.addf %3, %6 : vector<1x8x32xf32>
    %c0_6 = arith.constant 0 : index
    %c0_7 = arith.constant 0 : index
    %c0_8 = arith.constant 0 : index
    %8 = vector.load %arg2[%c0_6, %c0_7, %c0_8] : memref<1x8x32xf32, #tpu.memory_space<vmem>>, vector<1x8x32xf32>
    %9 = arith.truncf %8 : vector<1x8x32xf32> to vector<1x8x32xbf16>
    %c0_9 = arith.constant 0 : index
    %c0_10 = arith.constant 0 : index
    %10 = vector.load %arg8[%c0_9, %c0_10] : memref<32x32xbf16, #tpu.memory_space<vmem>>, vector<32x32xbf16>
    %cst_11 = arith.constant dense<0.000000e+00> : vector<1x8x32xf32>
    %11 = tpu.matmul %9, %10, %cst_11 {dimension_numbers = #tpu.dot_dimension_numbers<[2], [0], [0, 1], [1], [0, 0, 0, 1, 1, 1], [], []>} : vector<1x8x32xbf16>, vector<32x32xbf16>, vector<1x8x32xf32> -> vector<1x8x32xf32>
    %c0_12 = arith.constant 0 : index
    %c0_13 = arith.constant 0 : index
    %12 = vector.load %arg9[%c0_12, %c0_13] : memref<1x32xf32, #tpu.memory_space<vmem>>, vector<1x32xf32>
    %13 = vector.shape_cast %12 : vector<1x32xf32> to vector<1x1x32xf32>
    %14 = vector.broadcast %13 : vector<1x1x32xf32> to vector<1x8x32xf32>
    %15 = arith.addf %11, %14 : vector<1x8x32xf32>
    %c0_14 = arith.constant 0 : index
    %c0_15 = arith.constant 0 : index
    %c0_16 = arith.constant 0 : index
    %16 = vector.load %arg5[%c0_14, %c0_15, %c0_16] : memref<1x1x8xf32, #tpu.memory_space<vmem>>, vector<1x1x8xf32>
    %cst_17 = arith.constant 0.000000e+00 : f32
    %17 = vector.broadcast %cst_17 : f32 to vector<1x1x8xf32>
    %18 = arith.cmpf oeq, %16, %17 : vector<1x1x8xf32>
    %cst_18 = arith.constant -1.000000e+09 : f32
    %cst_19 = arith.constant 0.000000e+00 : f32
    %19 = vector.broadcast %cst_18 : f32 to vector<1x1x8xf32>
    %20 = vector.broadcast %cst_19 : f32 to vector<1x1x8xf32>
    %21 = arith.select %18, %19, %20 : vector<1x1x8xi1>, vector<1x1x8xf32>
    %cst_20 = arith.constant 0.176776692 : f32
    %22 = vector.broadcast %cst_20 : f32 to vector<1x8x32xf32>
    %23 = arith.mulf %7, %22 : vector<1x8x32xf32>
    %24 = arith.truncf %23 : vector<1x8x32xf32> to vector<1x8x32xbf16>
    %25 = arith.truncf %15 : vector<1x8x32xf32> to vector<1x8x32xbf16>
    "tpu.trace_start"() <{level = 10 : i32, message = "bqd,bkd->bqk"}> : () -> ()
    %cst_21 = arith.constant dense<0.000000e+00> : vector<1x8x8xf32>
    %26 = tpu.matmul %24, %25, %cst_21 {dimension_numbers = #tpu.dot_dimension_numbers<[2], [2], [1], [1], [0, 0, 0, 1, 1, 1], [0], [0]>} : vector<1x8x32xbf16>, vector<1x8x32xbf16>, vector<1x8x8xf32> -> vector<1x8x8xf32>
    "tpu.trace_stop"() : () -> ()
    %27 = vector.broadcast %21 : vector<1x1x8xf32> to vector<1x8x8xf32>
    %28 = arith.addf %26, %27 : vector<1x8x8xf32>
    %cst_22 = arith.constant dense<0xFF800000> : vector<1x8xf32>
    %29 = vector.multi_reduction <maximumf>, %28, %cst_22 [2] : vector<1x8x8xf32> to vector<1x8xf32>
    %30 = vector.shape_cast %29 : vector<1x8xf32> to vector<1x8x1xf32>
    %31 = vector.broadcast %30 : vector<1x8x1xf32> to vector<1x8x8xf32>
    %32 = arith.subf %28, %31 : vector<1x8x8xf32>
    %33 = math.exp %32 : vector<1x8x8xf32>
    %cst_23 = arith.constant dense<0.000000e+00> : vector<1x8xf32>
    %34 = vector.multi_reduction <add>, %33, %cst_23 [2] : vector<1x8x8xf32> to vector<1x8xf32>
    %35 = vector.shape_cast %34 : vector<1x8xf32> to vector<1x8x1xf32>
    %36 = tpu.reciprocal %35 {approx = true} : vector<1x8x1xf32> -> vector<1x8x1xf32>
    %37 = vector.broadcast %36 : vector<1x8x1xf32> to vector<1x8x8xf32>
    %38 = arith.mulf %33, %37 : vector<1x8x8xf32>
    %39 = arith.truncf %38 : vector<1x8x8xf32> to vector<1x8x8xbf16>
    %c0_24 = arith.constant 0 : index
    %c0_25 = arith.constant 0 : index
    %c0_26 = arith.constant 0 : index
    %40 = vector.load %arg3[%c0_24, %c0_25, %c0_26] : memref<1x8x32xf32, #tpu.memory_space<vmem>>, vector<1x8x32xf32>
    %41 = arith.truncf %40 : vector<1x8x32xf32> to vector<1x8x32xbf16>
    "tpu.trace_start"() <{level = 10 : i32, message = "bqk,bkd->bqd"}> : () -> ()
    %cst_27 = arith.constant dense<0.000000e+00> : vector<1x8x32xf32>
    %42 = tpu.matmul %39, %41, %cst_27 {dimension_numbers = #tpu.dot_dimension_numbers<[2], [1], [1], [2], [0, 0, 0, 1, 1, 2], [0], [0]>} : vector<1x8x8xbf16>, vector<1x8x32xbf16>, vector<1x8x32xf32> -> vector<1x8x32xf32>
    "tpu.trace_stop"() : () -> ()
    %43 = vector.shape_cast %38 : vector<1x8x8xf32> to vector<1x8x1x8xf32>
    %c0_28 = arith.constant 0 : index
    %c0_29 = arith.constant 0 : index
    %c0_30 = arith.constant 0 : index
    %c0_31 = arith.constant 0 : index
    %44 = vector.load %arg4[%c0_28, %c0_29, %c0_30, %c0_31] : memref<1x8x5x8xf32, #tpu.memory_space<vmem>>, vector<1x8x5x8xf32>
    %45 = vector.broadcast %43 : vector<1x8x1x8xf32> to vector<1x8x5x8xf32>
    %46 = arith.mulf %45, %44 : vector<1x8x5x8xf32>
    %cst_32 = arith.constant dense<0.000000e+00> : vector<1x8x5xf32>
    %47 = vector.multi_reduction <add>, %46, %cst_32 [3] : vector<1x8x5x8xf32> to vector<1x8x5xf32>
    %48 = arith.truncf %47 : vector<1x8x5xf32> to vector<1x8x5xbf16>
    %c0_33 = arith.constant 0 : index
    %c0_34 = arith.constant 0 : index
    %49 = vector.load %arg10[%c0_33, %c0_34] : memref<5x32xbf16, #tpu.memory_space<vmem>>, vector<5x32xbf16>
    %cst_35 = arith.constant dense<0.000000e+00> : vector<1x8x32xf32>
    %50 = tpu.matmul %48, %49, %cst_35 {dimension_numbers = #tpu.dot_dimension_numbers<[2], [0], [0, 1], [1], [0, 0, 0, 1, 1, 1], [], []>} : vector<1x8x5xbf16>, vector<5x32xbf16>, vector<1x8x32xf32> -> vector<1x8x32xf32>
    %51 = arith.addf %42, %50 : vector<1x8x32xf32>
    %c0_36 = arith.constant 0 : index
    %c0_37 = arith.constant 0 : index
    %c0_38 = arith.constant 0 : index
    %52 = vector.load %arg11[%c0_36, %c0_37, %c0_38] : memref<1x8x32xf32, #tpu.memory_space<vmem>>, vector<1x8x32xf32>
    tpu.vector_store %arg11[%c0_36, %c0_37, %c0_38], %51 {strides = array<i32>} : memref<1x8x32xf32, #tpu.memory_space<vmem>>, vector<1x8x32xf32>,
    return
  }
  func.func @transform_0(%arg0: i32) -> (i32, i32, i32) {
    %c0_i32 = arith.constant 0 : i32
    %c0_i32_0 = arith.constant 0 : i32
    %c0_i32_1 = arith.constant 0 : i32
    return %arg0, %c0_i32, %c0_i32_0 : i32, i32, i32
  }
  func.func @transform_1(%arg0: i32) -> (i32, i32, i32) {
    %c0_i32 = arith.constant 0 : i32
    %c0_i32_0 = arith.constant 0 : i32
    %c0_i32_1 = arith.constant 0 : i32
    return %arg0, %c0_i32, %c0_i32_0 : i32, i32, i32
  }
  func.func @transform_2(%arg0: i32) -> (i32, i32, i32) {
    %c0_i32 = arith.constant 0 : i32
    %c0_i32_0 = arith.constant 0 : i32
    %c0_i32_1 = arith.constant 0 : i32
    return %arg0, %c0_i32, %c0_i32_0 : i32, i32, i32
  }
  func.func @transform_3(%arg0: i32) -> (i32, i32, i32, i32) {
    %c0_i32 = arith.constant 0 : i32
    %c0_i32_0 = arith.constant 0 : i32
    %c0_i32_1 = arith.constant 0 : i32
    %c0_i32_2 = arith.constant 0 : i32
    return %arg0, %c0_i32, %c0_i32_0, %c0_i32_1 : i32, i32, i32, i32
  }
  func.func @transform_4(%arg0: i32) -> (i32, i32, i32) {
    %c0_i32 = arith.constant 0 : i32
    %c0_i32_0 = arith.constant 0 : i32
    %c0_i32_1 = arith.constant 0 : i32
    return %arg0, %c0_i32, %c0_i32_0 : i32, i32, i32
  }
  func.func @transform_5(%arg0: i32) -> (i32, i32) {
    %c0_i32 = arith.constant 0 : i32
    %c0_i32_0 = arith.constant 0 : i32
    %c0_i32_1 = arith.constant 0 : i32
    return %c0_i32, %c0_i32_0 : i32, i32
  }
  func.func @transform_6(%arg0: i32) -> (i32, i32) {
    %c0_i32 = arith.constant 0 : i32
    %c0_i32_0 = arith.constant 0 : i32
    %c0_i32_1 = arith.constant 0 : i32
    return %c0_i32, %c0_i32_0 : i32, i32
  }
  func.func @transform_7(%arg0: i32) -> (i32, i32) {
    %c0_i32 = arith.constant 0 : i32
    %c0_i32_0 = arith.constant 0 : i32
    %c0_i32_1 = arith.constant 0 : i32
    return %c0_i32, %c0_i32_0 : i32, i32
  }
  func.func @transform_8(%arg0: i32) -> (i32, i32) {
    %c0_i32 = arith.constant 0 : i32
    %c0_i32_0 = arith.constant 0 : i32
    %c0_i32_1 = arith.constant 0 : i32
    return %c0_i32, %c0_i32_0 : i32, i32
  }
  func.func @transform_9(%arg0: i32) -> (i32, i32) {
    %c0_i32 = arith.constant 0 : i32
    %c0_i32_0 = arith.constant 0 : i32
    %c0_i32_1 = arith.constant 0 : i32
    return %c0_i32, %c0_i32_0 : i32, i32
  }
  func.func @transform_10(%arg0: i32) -> (i32, i32, i32) {
    %c0_i32 = arith.constant 0 : i32
    %c0_i32_0 = arith.constant 0 : i32
    %c0_i32_1 = arith.constant 0 : i32
    return %arg0, %c0_i32, %c0_i32_0 : i32, i32, i32
  }
}

module attributes {stable_mosaic.version = 11 : i64} {
  func.func @_fuse_proj_kernel(%arg0: i32, %arg1: memref<8x32xf32, #tpu.memory_space<vmem>>, %arg2: memref<8x32xf32, #tpu.memory_space<vmem>>, %arg3: memref<128x32xbf16, #tpu.memory_space<vmem>>, %arg4: memref<8x32xf32, #tpu.memory_space<vmem>>) attributes {dimension_semantics = [#tpu.dimension_semantics<parallel>], iteration_bounds = array<i64: 2>, scalar_prefetch = 0 : i64, scratch_operands = 0 : i64, tpu.core_type = #tpu.core_type<tc>, window_params = [{transform_indices = @transform_0, window_bounds = array<i64: 8, 32>}, {transform_indices = @transform_1, window_bounds = array<i64: 8, 32>}, {pipeline_mode = #tpu.pipeline_mode<synchronous>, transform_indices = @transform_2, window_bounds = array<i64: 128, 32>}, {transform_indices = @transform_3, window_bounds = array<i64: 8, 32>}]} {
    %c0 = arith.constant 0 : index
    %c0_0 = arith.constant 0 : index
    %0 = vector.load %arg1[%c0, %c0_0] : memref<8x32xf32, #tpu.memory_space<vmem>>, vector<8x32xf32>
    %c0_1 = arith.constant 0 : index
    %c0_2 = arith.constant 0 : index
    %1 = vector.load %arg2[%c0_1, %c0_2] : memref<8x32xf32, #tpu.memory_space<vmem>>, vector<8x32xf32>
    %c0_3 = arith.constant 0 : index
    %c0_4 = arith.constant 0 : index
    %2 = vector.load %arg3[%c0_3, %c0_4] : memref<128x32xbf16, #tpu.memory_space<vmem>>, vector<128x32xbf16>
    %3 = arith.truncf %0 : vector<8x32xf32> to vector<8x32xbf16>
    %4 = vector.extract_strided_slice %2 {offsets = [0, 0], sizes = [32, 32], strides = [1, 1]} : vector<128x32xbf16> to vector<32x32xbf16>
    %cst = arith.constant dense<0.000000e+00> : vector<8x32xf32>
    %5 = tpu.matmul %3, %4, %cst {dimension_numbers = #tpu.dot_dimension_numbers<[1], [0], [0], [1], [0, 0, 1, 1], [], []>} : vector<8x32xbf16>, vector<32x32xbf16>, vector<8x32xf32> -> vector<8x32xf32>
    %6 = arith.truncf %1 : vector<8x32xf32> to vector<8x32xbf16>
    %7 = vector.extract_strided_slice %2 {offsets = [32, 0], sizes = [32, 32], strides = [1, 1]} : vector<128x32xbf16> to vector<32x32xbf16>
    %cst_5 = arith.constant dense<0.000000e+00> : vector<8x32xf32>
    %8 = tpu.matmul %6, %7, %cst_5 {dimension_numbers = #tpu.dot_dimension_numbers<[1], [0], [0], [1], [0, 0, 1, 1], [], []>} : vector<8x32xbf16>, vector<32x32xbf16>, vector<8x32xf32> -> vector<8x32xf32>
    %9 = arith.addf %5, %8 : vector<8x32xf32>
    %10 = arith.subf %0, %1 : vector<8x32xf32>
    %11 = arith.truncf %10 : vector<8x32xf32> to vector<8x32xbf16>
    %12 = vector.extract_strided_slice %2 {offsets = [64, 0], sizes = [32, 32], strides = [1, 1]} : vector<128x32xbf16> to vector<32x32xbf16>
    %cst_6 = arith.constant dense<0.000000e+00> : vector<8x32xf32>
    %13 = tpu.matmul %11, %12, %cst_6 {dimension_numbers = #tpu.dot_dimension_numbers<[1], [0], [0], [1], [0, 0, 1, 1], [], []>} : vector<8x32xbf16>, vector<32x32xbf16>, vector<8x32xf32> -> vector<8x32xf32>
    %14 = arith.addf %9, %13 : vector<8x32xf32>
    %15 = arith.mulf %0, %1 : vector<8x32xf32>
    %16 = arith.truncf %15 : vector<8x32xf32> to vector<8x32xbf16>
    %17 = vector.extract_strided_slice %2 {offsets = [96, 0], sizes = [32, 32], strides = [1, 1]} : vector<128x32xbf16> to vector<32x32xbf16>
    %cst_7 = arith.constant dense<0.000000e+00> : vector<8x32xf32>
    %18 = tpu.matmul %16, %17, %cst_7 {dimension_numbers = #tpu.dot_dimension_numbers<[1], [0], [0], [1], [0, 0, 1, 1], [], []>} : vector<8x32xbf16>, vector<32x32xbf16>, vector<8x32xf32> -> vector<8x32xf32>
    %19 = arith.addf %14, %18 : vector<8x32xf32>
    %c0_8 = arith.constant 0 : index
    %c0_9 = arith.constant 0 : index
    %20 = vector.load %arg4[%c0_8, %c0_9] : memref<8x32xf32, #tpu.memory_space<vmem>>, vector<8x32xf32>
    tpu.vector_store %arg4[%c0_8, %c0_9], %19 {strides = array<i32>} : memref<8x32xf32, #tpu.memory_space<vmem>>, vector<8x32xf32>,
    return
  }
  func.func @transform_0(%arg0: i32) -> (i32, i32) {
    %c0_i32 = arith.constant 0 : i32
    %c0_i32_0 = arith.constant 0 : i32
    return %arg0, %c0_i32 : i32, i32
  }
  func.func @transform_1(%arg0: i32) -> (i32, i32) {
    %c0_i32 = arith.constant 0 : i32
    %c0_i32_0 = arith.constant 0 : i32
    return %arg0, %c0_i32 : i32, i32
  }
  func.func @transform_2(%arg0: i32) -> (i32, i32) {
    %c0_i32 = arith.constant 0 : i32
    %c0_i32_0 = arith.constant 0 : i32
    %c0_i32_1 = arith.constant 0 : i32
    return %c0_i32, %c0_i32_0 : i32, i32
  }
  func.func @transform_3(%arg0: i32) -> (i32, i32) {
    %c0_i32 = arith.constant 0 : i32
    %c0_i32_0 = arith.constant 0 : i32
    return %arg0, %c0_i32 : i32, i32
  }
}

module attributes {stable_mosaic.version = 11 : i64} {
  func.func @_pool_head_kernel(%arg0: i32, %arg1: memref<1x8x32xf32, #tpu.memory_space<vmem>>, %arg2: memref<1x1x8xf32, #tpu.memory_space<vmem>>, %arg3: memref<32x32xbf16, #tpu.memory_space<vmem>>, %arg4: memref<1x32xf32, #tpu.memory_space<vmem>>, %arg5: memref<1x32xf32, #tpu.memory_space<vmem>>, %arg6: memref<1x1xf32, #tpu.memory_space<vmem>>, %arg7: memref<1x1x32xf32, #tpu.memory_space<vmem>>, %arg8: memref<1x1x32xf32, #tpu.memory_space<vmem>>) attributes {dimension_semantics = [#tpu.dimension_semantics<parallel>], iteration_bounds = array<i64: 2>, scalar_prefetch = 0 : i64, scratch_operands = 0 : i64, tpu.core_type = #tpu.core_type<tc>, window_params = [{transform_indices = @transform_0, window_bounds = array<i64: 1, 8, 32>}, {transform_indices = @transform_1, window_bounds = array<i64: 1, 1, 8>}, {pipeline_mode = #tpu.pipeline_mode<synchronous>, transform_indices = @transform_2, window_bounds = array<i64: 32, 32>}, {pipeline_mode = #tpu.pipeline_mode<synchronous>, transform_indices = @transform_3, window_bounds = array<i64: 1, 32>}, {pipeline_mode = #tpu.pipeline_mode<synchronous>, transform_indices = @transform_4, window_bounds = array<i64: 1, 32>}, {pipeline_mode = #tpu.pipeline_mode<synchronous>, transform_indices = @transform_5, window_bounds = array<i64: 1, 1>}, {transform_indices = @transform_6, window_bounds = array<i64: 1, 1, 32>}, {transform_indices = @transform_7, window_bounds = array<i64: 1, 1, 32>}]} {
    %c0 = arith.constant 0 : index
    %c0_0 = arith.constant 0 : index
    %c0_1 = arith.constant 0 : index
    %0 = vector.load %arg1[%c0, %c0_0, %c0_1] : memref<1x8x32xf32, #tpu.memory_space<vmem>>, vector<1x8x32xf32>
    %1 = arith.truncf %0 : vector<1x8x32xf32> to vector<1x8x32xbf16>
    %c0_2 = arith.constant 0 : index
    %c0_3 = arith.constant 0 : index
    %2 = vector.load %arg3[%c0_2, %c0_3] : memref<32x32xbf16, #tpu.memory_space<vmem>>, vector<32x32xbf16>
    %cst = arith.constant dense<0.000000e+00> : vector<1x8x32xf32>
    %3 = tpu.matmul %1, %2, %cst {dimension_numbers = #tpu.dot_dimension_numbers<[2], [0], [0, 1], [1], [0, 0, 0, 1, 1, 1], [], []>} : vector<1x8x32xbf16>, vector<32x32xbf16>, vector<1x8x32xf32> -> vector<1x8x32xf32>
    %c0_4 = arith.constant 0 : index
    %c0_5 = arith.constant 0 : index
    %4 = vector.load %arg4[%c0_4, %c0_5] : memref<1x32xf32, #tpu.memory_space<vmem>>, vector<1x32xf32>
    %5 = vector.shape_cast %4 : vector<1x32xf32> to vector<1x1x32xf32>
    %6 = vector.broadcast %5 : vector<1x1x32xf32> to vector<1x8x32xf32>
    %7 = arith.addf %3, %6 : vector<1x8x32xf32>
    %cst_6 = arith.constant 5.000000e-01 : f32
    %8 = vector.broadcast %cst_6 : f32 to vector<1x8x32xf32>
    %9 = arith.mulf %7, %8 : vector<1x8x32xf32>
    %cst_7 = arith.constant 1.41421354 : f32
    %10 = vector.broadcast %cst_7 : f32 to vector<1x8x32xf32>
    %11 = arith.divf %7, %10 : vector<1x8x32xf32>
    %12 = math.absf %11 : vector<1x8x32xf32>
    %cst_8 = arith.constant 0.327591091 : f32
    %13 = vector.broadcast %cst_8 : f32 to vector<1x8x32xf32>
    %14 = arith.mulf %13, %12 : vector<1x8x32xf32>
    %cst_9 = arith.constant 1.000000e+00 : f32
    %15 = vector.broadcast %cst_9 : f32 to vector<1x8x32xf32>
    %16 = arith.addf %15, %14 : vector<1x8x32xf32>
    %cst_10 = arith.constant 1.000000e+00 : f32
    %17 = vector.broadcast %cst_10 : f32 to vector<1x8x32xf32>
    %18 = arith.divf %17, %16 : vector<1x8x32xf32>
    %cst_11 = arith.constant 1.06140542 : f32
    %19 = vector.broadcast %cst_11 : f32 to vector<1x8x32xf32>
    %20 = arith.mulf %19, %18 : vector<1x8x32xf32>
    %cst_12 = arith.constant -1.45315206 : f32
    %21 = vector.broadcast %cst_12 : f32 to vector<1x8x32xf32>
    %22 = arith.addf %20, %21 : vector<1x8x32xf32>
    %23 = arith.mulf %22, %18 : vector<1x8x32xf32>
    %cst_13 = arith.constant 1.42141378 : f32
    %24 = vector.broadcast %cst_13 : f32 to vector<1x8x32xf32>
    %25 = arith.addf %23, %24 : vector<1x8x32xf32>
    %26 = arith.mulf %25, %18 : vector<1x8x32xf32>
    %cst_14 = arith.constant -0.284496725 : f32
    %27 = vector.broadcast %cst_14 : f32 to vector<1x8x32xf32>
    %28 = arith.addf %26, %27 : vector<1x8x32xf32>
    %29 = arith.mulf %28, %18 : vector<1x8x32xf32>
    %cst_15 = arith.constant 0.254829586 : f32
    %30 = vector.broadcast %cst_15 : f32 to vector<1x8x32xf32>
    %31 = arith.addf %29, %30 : vector<1x8x32xf32>
    %32 = arith.mulf %31, %18 : vector<1x8x32xf32>
    %cst_16 = arith.constant 0.000000e+00 : f32
    %33 = vector.broadcast %cst_16 : f32 to vector<1x8x32xf32>
    %34 = arith.subf %33, %12 : vector<1x8x32xf32>
    %35 = arith.mulf %34, %12 : vector<1x8x32xf32>
    %36 = math.exp %35 : vector<1x8x32xf32>
    %37 = arith.mulf %32, %36 : vector<1x8x32xf32>
    %cst_17 = arith.constant 1.000000e+00 : f32
    %38 = vector.broadcast %cst_17 : f32 to vector<1x8x32xf32>
    %39 = arith.subf %38, %37 : vector<1x8x32xf32>
    %cst_18 = arith.constant 0.000000e+00 : f32
    %40 = vector.broadcast %cst_18 : f32 to vector<1x8x32xf32>
    %41 = arith.cmpf olt, %11, %40 : vector<1x8x32xf32>
    %cst_19 = arith.constant 0.000000e+00 : f32
    %42 = vector.broadcast %cst_19 : f32 to vector<1x8x32xf32>
    %43 = arith.subf %42, %39 : vector<1x8x32xf32>
    %44 = arith.select %41, %43, %39 : vector<1x8x32xi1>, vector<1x8x32xf32>
    %cst_20 = arith.constant 1.000000e+00 : f32
    %45 = vector.broadcast %cst_20 : f32 to vector<1x8x32xf32>
    %46 = arith.addf %45, %44 : vector<1x8x32xf32>
    %47 = arith.mulf %9, %46 : vector<1x8x32xf32>
    %c0_21 = arith.constant 0 : index
    %c0_22 = arith.constant 0 : index
    %48 = vector.load %arg5[%c0_21, %c0_22] : memref<1x32xf32, #tpu.memory_space<vmem>>, vector<1x32xf32>
    %49 = vector.shape_cast %48 : vector<1x32xf32> to vector<1x1x32xf32>
    %50 = vector.broadcast %49 : vector<1x1x32xf32> to vector<1x8x32xf32>
    %51 = arith.mulf %47, %50 : vector<1x8x32xf32>
    %cst_23 = arith.constant dense<0.000000e+00> : vector<1x8xf32>
    %52 = vector.multi_reduction <add>, %51, %cst_23 [2] : vector<1x8x32xf32> to vector<1x8xf32>
    %c0_24 = arith.constant 0 : index
    %c0_25 = arith.constant 0 : index
    %53 = vector.load %arg6[%c0_24, %c0_25] : memref<1x1xf32, #tpu.memory_space<vmem>>, vector<1x1xf32>
    %54 = vector.broadcast %53 : vector<1x1xf32> to vector<1x8xf32>
    %55 = arith.addf %52, %54 : vector<1x8xf32>
    %c0_26 = arith.constant 0 : index
    %c0_27 = arith.constant 0 : index
    %c0_28 = arith.constant 0 : index
    %56 = vector.load %arg2[%c0_26, %c0_27, %c0_28] : memref<1x1x8xf32, #tpu.memory_space<vmem>>, vector<1x1x8xf32>
    %57 = vector.shape_cast %56 : vector<1x1x8xf32> to vector<1x8xf32>
    %cst_29 = arith.constant 0.000000e+00 : f32
    %58 = vector.broadcast %cst_29 : f32 to vector<1x8xf32>
    %59 = arith.cmpf oeq, %57, %58 : vector<1x8xf32>
    %cst_30 = arith.constant -1.000000e+09 : f32
    %60 = vector.broadcast %cst_30 : f32 to vector<1x8xf32>
    %61 = arith.select %59, %60, %55 : vector<1x8xi1>, vector<1x8xf32>
    %cst_31 = arith.constant dense<0xFF800000> : vector<1xf32>
    %62 = vector.multi_reduction <maximumf>, %61, %cst_31 [1] : vector<1x8xf32> to vector<1xf32>
    %63 = vector.shape_cast %62 : vector<1xf32> to vector<1x1xf32>
    %64 = vector.broadcast %63 : vector<1x1xf32> to vector<1x8xf32>
    %65 = arith.subf %61, %64 : vector<1x8xf32>
    %66 = math.exp %65 : vector<1x8xf32>
    %cst_32 = arith.constant dense<0.000000e+00> : vector<1xf32>
    %67 = vector.multi_reduction <add>, %66, %cst_32 [1] : vector<1x8xf32> to vector<1xf32>
    %68 = vector.shape_cast %67 : vector<1xf32> to vector<1x1xf32>
    %69 = tpu.reciprocal %68 {approx = true} : vector<1x1xf32> -> vector<1x1xf32>
    %70 = vector.broadcast %69 : vector<1x1xf32> to vector<1x8xf32>
    %71 = arith.mulf %66, %70 : vector<1x8xf32>
    %72 = vector.shape_cast %71 : vector<1x8xf32> to vector<1x1x8xf32>
    "tpu.trace_start"() <{level = 10 : i32, message = "bqt,btd->bqd"}> : () -> ()
    %cst_33 = arith.constant dense<0.000000e+00> : vector<1x1x32xf32>
    %73 = tpu.matmul %72, %0, %cst_33 {dimension_numbers = #tpu.dot_dimension_numbers<[2], [1], [1], [2], [0, 0, 0, 1, 1, 2], [0], [0]>} : vector<1x1x8xf32>, vector<1x8x32xf32>, vector<1x1x32xf32> -> vector<1x1x32xf32>
    "tpu.trace_stop"() : () -> ()
    %c0_34 = arith.constant 0 : index
    %c0_35 = arith.constant 0 : index
    %c0_36 = arith.constant 0 : index
    %74 = vector.load %arg7[%c0_34, %c0_35, %c0_36] : memref<1x1x32xf32, #tpu.memory_space<vmem>>, vector<1x1x32xf32>
    tpu.vector_store %arg7[%c0_34, %c0_35, %c0_36], %73 {strides = array<i32>} : memref<1x1x32xf32, #tpu.memory_space<vmem>>, vector<1x1x32xf32>,
    %cst_37 = arith.constant dense<0xFF800000> : vector<1x32xf32>
    %75 = vector.multi_reduction <maximumf>, %0, %cst_37 [1] : vector<1x8x32xf32> to vector<1x32xf32>
    %76 = vector.shape_cast %75 : vector<1x32xf32> to vector<1x1x32xf32>
    %c0_38 = arith.constant 0 : index
    %c0_39 = arith.constant 0 : index
    %c0_40 = arith.constant 0 : index
    %77 = vector.load %arg8[%c0_38, %c0_39, %c0_40] : memref<1x1x32xf32, #tpu.memory_space<vmem>>, vector<1x1x32xf32>
    tpu.vector_store %arg8[%c0_38, %c0_39, %c0_40], %76 {strides = array<i32>} : memref<1x1x32xf32, #tpu.memory_space<vmem>>, vector<1x1x32xf32>,
    return
  }
  func.func @transform_0(%arg0: i32) -> (i32, i32, i32) {
    %c0_i32 = arith.constant 0 : i32
    %c0_i32_0 = arith.constant 0 : i32
    %c0_i32_1 = arith.constant 0 : i32
    return %arg0, %c0_i32, %c0_i32_0 : i32, i32, i32
  }
  func.func @transform_1(%arg0: i32) -> (i32, i32, i32) {
    %c0_i32 = arith.constant 0 : i32
    %c0_i32_0 = arith.constant 0 : i32
    %c0_i32_1 = arith.constant 0 : i32
    return %arg0, %c0_i32, %c0_i32_0 : i32, i32, i32
  }
  func.func @transform_2(%arg0: i32) -> (i32, i32) {
    %c0_i32 = arith.constant 0 : i32
    %c0_i32_0 = arith.constant 0 : i32
    %c0_i32_1 = arith.constant 0 : i32
    return %c0_i32, %c0_i32_0 : i32, i32
  }
  func.func @transform_3(%arg0: i32) -> (i32, i32) {
    %c0_i32 = arith.constant 0 : i32
    %c0_i32_0 = arith.constant 0 : i32
    %c0_i32_1 = arith.constant 0 : i32
    return %c0_i32, %c0_i32_0 : i32, i32
  }
  func.func @transform_4(%arg0: i32) -> (i32, i32) {
    %c0_i32 = arith.constant 0 : i32
    %c0_i32_0 = arith.constant 0 : i32
    %c0_i32_1 = arith.constant 0 : i32
    return %c0_i32, %c0_i32_0 : i32, i32
  }
  func.func @transform_5(%arg0: i32) -> (i32, i32) {
    %c0_i32 = arith.constant 0 : i32
    %c0_i32_0 = arith.constant 0 : i32
    %c0_i32_1 = arith.constant 0 : i32
    return %c0_i32, %c0_i32_0 : i32, i32
  }
  func.func @transform_6(%arg0: i32) -> (i32, i32, i32) {
    %c0_i32 = arith.constant 0 : i32
    %c0_i32_0 = arith.constant 0 : i32
    %c0_i32_1 = arith.constant 0 : i32
    return %arg0, %c0_i32, %c0_i32_0 : i32, i32, i32
  }
  func.func @transform_7(%arg0: i32) -> (i32, i32, i32) {
    %c0_i32 = arith.constant 0 : i32
    %c0_i32_0 = arith.constant 0 : i32
    %c0_i32_1 = arith.constant 0 : i32
    return %arg0, %c0_i32, %c0_i32_0 : i32, i32, i32
  }
}

module attributes {stable_mosaic.version = 11 : i64} {
  func.func @_tail_kernel(%arg0: memref<2x32xf32, #tpu.memory_space<vmem>>, %arg1: memref<2x32xf32, #tpu.memory_space<vmem>>, %arg2: memref<2x32xf32, #tpu.memory_space<vmem>>, %arg3: memref<2x32xf32, #tpu.memory_space<vmem>>, %arg4: memref<128x32xbf16, #tpu.memory_space<vmem>>, %arg5: memref<32x32xbf16, #tpu.memory_space<vmem>>, %arg6: memref<1x32xf32, #tpu.memory_space<vmem>>, %arg7: memref<32x3xbf16, #tpu.memory_space<vmem>>, %arg8: memref<1x3xf32, #tpu.memory_space<vmem>>, %arg9: memref<2x3xf32, #tpu.memory_space<vmem>>) attributes {dimension_semantics = [], scalar_prefetch = 0 : i64, scratch_operands = 0 : i64, tpu.core_type = #tpu.core_type<tc>} {
    %c0 = arith.constant 0 : index
    %c0_0 = arith.constant 0 : index
    %0 = vector.load %arg4[%c0, %c0_0] : memref<128x32xbf16, #tpu.memory_space<vmem>>, vector<128x32xbf16>
    %c0_1 = arith.constant 0 : index
    %c0_2 = arith.constant 0 : index
    %1 = vector.load %arg0[%c0_1, %c0_2] : memref<2x32xf32, #tpu.memory_space<vmem>>, vector<2x32xf32>
    %2 = arith.truncf %1 : vector<2x32xf32> to vector<2x32xbf16>
    %3 = vector.extract_strided_slice %0 {offsets = [0, 0], sizes = [32, 32], strides = [1, 1]} : vector<128x32xbf16> to vector<32x32xbf16>
    %cst = arith.constant dense<0.000000e+00> : vector<2x32xf32>
    %4 = tpu.matmul %2, %3, %cst {dimension_numbers = #tpu.dot_dimension_numbers<[1], [0], [0], [1], [0, 0, 1, 1], [], []>} : vector<2x32xbf16>, vector<32x32xbf16>, vector<2x32xf32> -> vector<2x32xf32>
    %c0_3 = arith.constant 0 : index
    %c0_4 = arith.constant 0 : index
    %5 = vector.load %arg1[%c0_3, %c0_4] : memref<2x32xf32, #tpu.memory_space<vmem>>, vector<2x32xf32>
    %6 = arith.truncf %5 : vector<2x32xf32> to vector<2x32xbf16>
    %7 = vector.extract_strided_slice %0 {offsets = [32, 0], sizes = [32, 32], strides = [1, 1]} : vector<128x32xbf16> to vector<32x32xbf16>
    %cst_5 = arith.constant dense<0.000000e+00> : vector<2x32xf32>
    %8 = tpu.matmul %6, %7, %cst_5 {dimension_numbers = #tpu.dot_dimension_numbers<[1], [0], [0], [1], [0, 0, 1, 1], [], []>} : vector<2x32xbf16>, vector<32x32xbf16>, vector<2x32xf32> -> vector<2x32xf32>
    %9 = arith.addf %4, %8 : vector<2x32xf32>
    %c0_6 = arith.constant 0 : index
    %c0_7 = arith.constant 0 : index
    %10 = vector.load %arg2[%c0_6, %c0_7] : memref<2x32xf32, #tpu.memory_space<vmem>>, vector<2x32xf32>
    %11 = arith.truncf %10 : vector<2x32xf32> to vector<2x32xbf16>
    %12 = vector.extract_strided_slice %0 {offsets = [64, 0], sizes = [32, 32], strides = [1, 1]} : vector<128x32xbf16> to vector<32x32xbf16>
    %cst_8 = arith.constant dense<0.000000e+00> : vector<2x32xf32>
    %13 = tpu.matmul %11, %12, %cst_8 {dimension_numbers = #tpu.dot_dimension_numbers<[1], [0], [0], [1], [0, 0, 1, 1], [], []>} : vector<2x32xbf16>, vector<32x32xbf16>, vector<2x32xf32> -> vector<2x32xf32>
    %14 = arith.addf %9, %13 : vector<2x32xf32>
    %c0_9 = arith.constant 0 : index
    %c0_10 = arith.constant 0 : index
    %15 = vector.load %arg3[%c0_9, %c0_10] : memref<2x32xf32, #tpu.memory_space<vmem>>, vector<2x32xf32>
    %16 = arith.truncf %15 : vector<2x32xf32> to vector<2x32xbf16>
    %17 = vector.extract_strided_slice %0 {offsets = [96, 0], sizes = [32, 32], strides = [1, 1]} : vector<128x32xbf16> to vector<32x32xbf16>
    %cst_11 = arith.constant dense<0.000000e+00> : vector<2x32xf32>
    %18 = tpu.matmul %16, %17, %cst_11 {dimension_numbers = #tpu.dot_dimension_numbers<[1], [0], [0], [1], [0, 0, 1, 1], [], []>} : vector<2x32xbf16>, vector<32x32xbf16>, vector<2x32xf32> -> vector<2x32xf32>
    %19 = arith.addf %14, %18 : vector<2x32xf32>
    %20 = arith.truncf %19 : vector<2x32xf32> to vector<2x32xbf16>
    %c0_12 = arith.constant 0 : index
    %c0_13 = arith.constant 0 : index
    %21 = vector.load %arg5[%c0_12, %c0_13] : memref<32x32xbf16, #tpu.memory_space<vmem>>, vector<32x32xbf16>
    %cst_14 = arith.constant dense<0.000000e+00> : vector<2x32xf32>
    %22 = tpu.matmul %20, %21, %cst_14 {dimension_numbers = #tpu.dot_dimension_numbers<[1], [0], [0], [1], [0, 0, 1, 1], [], []>} : vector<2x32xbf16>, vector<32x32xbf16>, vector<2x32xf32> -> vector<2x32xf32>
    %c0_15 = arith.constant 0 : index
    %c0_16 = arith.constant 0 : index
    %23 = vector.load %arg6[%c0_15, %c0_16] : memref<1x32xf32, #tpu.memory_space<vmem>>, vector<1x32xf32>
    %24 = vector.broadcast %23 : vector<1x32xf32> to vector<2x32xf32>
    %25 = arith.addf %22, %24 : vector<2x32xf32>
    %26 = math.tanh %25 : vector<2x32xf32>
    %27 = arith.truncf %26 : vector<2x32xf32> to vector<2x32xbf16>
    %c0_17 = arith.constant 0 : index
    %c0_18 = arith.constant 0 : index
    %28 = vector.load %arg7[%c0_17, %c0_18] : memref<32x3xbf16, #tpu.memory_space<vmem>>, vector<32x3xbf16>
    %cst_19 = arith.constant dense<0.000000e+00> : vector<2x3xf32>
    %29 = tpu.matmul %27, %28, %cst_19 {dimension_numbers = #tpu.dot_dimension_numbers<[1], [0], [0], [1], [0, 0, 1, 1], [], []>} : vector<2x32xbf16>, vector<32x3xbf16>, vector<2x3xf32> -> vector<2x3xf32>
    %c0_20 = arith.constant 0 : index
    %c0_21 = arith.constant 0 : index
    %30 = vector.load %arg8[%c0_20, %c0_21] : memref<1x3xf32, #tpu.memory_space<vmem>>, vector<1x3xf32>
    %31 = vector.broadcast %30 : vector<1x3xf32> to vector<2x3xf32>
    %32 = arith.addf %29, %31 : vector<2x3xf32>
    %c0_22 = arith.constant 0 : index
    %c0_23 = arith.constant 0 : index
    %33 = vector.load %arg9[%c0_22, %c0_23] : memref<2x3xf32, #tpu.memory_space<vmem>>, vector<2x3xf32>
    tpu.vector_store %arg9[%c0_22, %c0_23], %32 {strides = array<i32>} : memref<2x3xf32, #tpu.memory_space<vmem>>, vector<2x3xf32>,
    return
  }
}

</mosaic_0001>

<llo_original>
// kernel: qaeasyconcept_forward.28
$region0: #{qaeasyconcept_forward.28}
  #allocation0 [shape = 'u32[]', space=smem, size = 0x4, offset = 0x4, fixed_abs, tag = 'smem constant byte address 0x4 - core index']
  #allocation1 [shape = 'u32[144,128]{1,0:T(1,128)}', space=vmem, size = 0x12000, scoped, tag = 'internal scratch']
  %s0 = inlined_call_operand.vmem [shape: f32[16,32], index: 0, kind: input, shape index: {}]
  %s1 = inlined_call_operand.vmem [shape: bf16[32,32], index: 1, kind: input, shape index: {}]
  %s2 = inlined_call_operand.vmem [shape: f32[1,32], index: 2, kind: input, shape index: {}]
  %s3 = inlined_call_operand.vmem [shape: bf16[32,32], index: 3, kind: input, shape index: {}]
  %s4 = inlined_call_operand.vmem [shape: f32[1,32], index: 4, kind: input, shape index: {}]
  %s5 = inlined_call_operand.vmem [shape: f32[1,32], index: 5, kind: input, shape index: {}]
  %s6 = inlined_call_operand.vmem [shape: f32[1,32], index: 6, kind: input, shape index: {}]
  %s7 = inlined_call_operand.vmem [shape: f32[1,32], index: 7, kind: input, shape index: {}]
  %s8 = inlined_call_operand.vmem [shape: f32[1,32], index: 8, kind: input, shape index: {}]
  %s9 = inlined_call_operand.vmem [shape: f32[16,32], index: 9, kind: output, shape index: {}]
  %s10 = sld [smem:[#allocation0]]
  $region69: #{qaeasyconcept_forward.28} parent=0
    _
  %s12 = ssub.s32 1, %s10
  %s13 = scalar_select 0, %s12, %s10
  loop: start=0, step=1, limit=4
  $region2: #{qaeasyconcept_forward.28} parent=0 // loop_pre_header
    _
  $region3: #{qaeasyconcept_forward.28} parent=0 // loop_header
    %s15 = sphi 0, %s19
    %p16 = scmp.ge.s32.totalorder %s15, 4
    %s25 = sphi 0, %s27
    %s28 = sphi 0, %s25
    %s29 = sphi 0, %s28
    %s45 = sphi 0, %s29
    %s49 = sphi 0, %s49
    %s51 = sphi 0, %s49
    %s52 = sphi 0, %s51
    %s66 = sphi 0, %s52
    %s70 = sphi 0, %s70
    %s72 = sphi 0, %s70
    %s73 = sphi 0, %s72
    %s87 = sphi 0, %s73
    %s91 = sphi 0, %s91
    %s93 = sphi 0, %s91
    %s94 = sphi 0, %s93
    %s108 = sphi 0, %s94
    %s112 = sphi 0, %s112
    %s114 = sphi 0, %s112
    %s115 = sphi 0, %s114
    %s129 = sphi 0, %s115
    %s133 = sphi 0, %s133
    %s135 = sphi 0, %s133
    %s136 = sphi 0, %s135
    %s150 = sphi 0, %s136
    %s154 = sphi 0, %s154
    %s156 = sphi 0, %s154
    %s157 = sphi 0, %s156
    %s171 = sphi 0, %s157
    %s175 = sphi 0, %s175
    %s177 = sphi 0, %s175
    %s178 = sphi 0, %s177
    %s192 = sphi 0, %s178
    %s196 = sphi 0, %s196
    %s198 = sphi 0, %s196
    %s199 = sphi 0, %s198
    %s213 = sphi 0, %s199
    %s219 = sphi 0, %s221
    %s222 = sphi 0, %s219
    %s223 = sphi 0, %s222
    %s239 = sphi 0, %s223
  $region4: #{qaeasyconcept_forward.28} parent=0 // loop_header_branch
    %18 = sbr.rel (%p16) target = $region8
  $region5: #{qaeasyconcept_forward.28} parent=0 // loop_body
    %s20 = ssub.s32 %s15, 1
    %s21 = ssub.s32 %s15, 2
    %s22 = sadd.s32 %s15, 1
    %s23 = ssub.s32 %s15, %s22
    %p24 = scmp.eq.s32.totalorder %s23, 0
    %s26 = sadd.s32 %s25, 1
    %s27 = scalar_select %p24, %s25, %s26
    %p30 = pneg %p24
    %p31 = scmp.eq.s32.totalorder %s15, 1
    %p32 = por %p30, %p31
    %p33 = scmp.ne.s32.totalorder %s25, %s28
    %p34 = scmp.eq.s32.totalorder %s15, 0
    %p35 = por %p33, %p34
    %p36 = scmp.ne.s32.totalorder %s25, %s28
    %p37 = scmp.eq.s32.totalorder %s20, 1
    %p38 = por %p36, %p37
    %p39 = scmp.ne.s32.totalorder %s28, %s29
    %p40 = scmp.eq.s32.totalorder %s20, 0
    %p41 = por %p39, %p40
    %p42 = scmp.ne.s32.totalorder %s28, %s29
    %p43 = scmp.eq.s32.totalorder %s21, 1
    %p44 = por %p42, %p43
    %p46 = scmp.ne.s32.totalorder %s29, %s45
    %p47 = scmp.eq.s32.totalorder %s21, 0
    %p48 = por %p46, %p47
    %s50 = sadd.s32 %s49, 1
    %p53 = scmp.eq.s32.totalorder %s15, 1
    %p54 = scmp.ne.s32.totalorder %s49, %s51
    %p55 = scmp.eq.s32.totalorder %s15, 0
    %p56 = por %p54, %p55
    %p57 = scmp.ne.s32.totalorder %s49, %s51
    %p58 = scmp.eq.s32.totalorder %s20, 1
    %p59 = por %p57, %p58
    %p60 = scmp.ne.s32.totalorder %s51, %s52
    %p61 = scmp.eq.s32.totalorder %s20, 0
    %p62 = por %p60, %p61
    %p63 = scmp.ne.s32.totalorder %s51, %s52
    %p64 = scmp.eq.s32.totalorder %s21, 1
    %p65 = por %p63, %p64
    %p67 = scmp.ne.s32.totalorder %s52, %s66
    %p68 = scmp.eq.s32.totalorder %s21, 0
    %p69 = por %p67, %p68
    %s71 = sadd.s32 %s70, 1
    %p74 = scmp.eq.s32.totalorder %s15, 1
    %p75 = scmp.ne.s32.totalorder %s70, %s72
    %p76 = scmp.eq.s32.totalorder %s15, 0
    %p77 = por %p75, %p76
    %p78 = scmp.ne.s32.totalorder %s70, %s72
    %p79 = scmp.eq.s32.totalorder %s20, 1
    %p80 = por %p78, %p79
    %p81 = scmp.ne.s32.totalorder %s72, %s73
    %p82 = scmp.eq.s32.totalorder %s20, 0
    %p83 = por %p81, %p82
    %p84 = scmp.ne.s32.totalorder %s72, %s73
    %p85 = scmp.eq.s32.totalorder %s21, 1
    %p86 = por %p84, %p85
    %p88 = scmp.ne.s32.totalorder %s73, %s87
    %p89 = scmp.eq.s32.totalorder %s21, 0
    %p90 = por %p88, %p89
    %s92 = sadd.s32 %s91, 1
    %p95 = scmp.eq.s32.totalorder %s15, 1
    %p96 = scmp.ne.s32.totalorder %s91, %s93
    %p97 = scmp.eq.s32.totalorder %s15, 0
    %p98 = por %p96, %p97
    %p99 = scmp.ne.s32.totalorder %s91, %s93
    %p100 = scmp.eq.s32.totalorder %s20, 1
    %p101 = por %p99, %p100
    %p102 = scmp.ne.s32.totalorder %s93, %s94
    %p103 = scmp.eq.s32.totalorder %s20, 0
    %p104 = por %p102, %p103
    %p105 = scmp.ne.s32.totalorder %s93, %s94
    %p106 = scmp.eq.s32.totalorder %s21, 1
    %p107 = por %p105, %p106
    %p109 = scmp.ne.s32.totalorder %s94, %s108
    %p110 = scmp.eq.s32.totalorder %s21, 0
    %p111 = por %p109, %p110
    %s113 = sadd.s32 %s112, 1
    %p116 = scmp.eq.s32.totalorder %s15, 1
    %p117 = scmp.ne.s32.totalorder %s112, %s114
    %p118 = scmp.eq.s32.totalorder %s15, 0
    %p119 = por %p117, %p118
    %p120 = scmp.ne.s32.totalorder %s112, %s114
    %p121 = scmp.eq.s32.totalorder %s20, 1
    %p122 = por %p120, %p121
    %p123 = scmp.ne.s32.totalorder %s114, %s115
    %p124 = scmp.eq.s32.totalorder %s20, 0
    %p125 = por %p123, %p124
    %p126 = scmp.ne.s32.totalorder %s114, %s115
    %p127 = scmp.eq.s32.totalorder %s21, 1
    %p128 = por %p126, %p127
    %p130 = scmp.ne.s32.totalorder %s115, %s129
    %p131 = scmp.eq.s32.totalorder %s21, 0
    %p132 = por %p130, %p131
    %s134 = sadd.s32 %s133, 1
    %p137 = scmp.eq.s32.totalorder %s15, 1
    %p138 = scmp.ne.s32.totalorder %s133, %s135
    %p139 = scmp.eq.s32.totalorder %s15, 0
    %p140 = por %p138, %p139
    %p141 = scmp.ne.s32.totalorder %s133, %s135
    %p142 = scmp.eq.s32.totalorder %s20, 1
    %p143 = por %p141, %p142
    %p144 = scmp.ne.s32.totalorder %s135, %s136
    %p145 = scmp.eq.s32.totalorder %s20, 0
    %p146 = por %p144, %p145
    %p147 = scmp.ne.s32.totalorder %s135, %s136
    %p148 = scmp.eq.s32.totalorder %s21, 1
    %p149 = por %p147, %p148
    %p151 = scmp.ne.s32.totalorder %s136, %s150
    %p152 = scmp.eq.s32.totalorder %s21, 0
    %p153 = por %p151, %p152
    %s155 = sadd.s32 %s154, 1
    %p158 = scmp.eq.s32.totalorder %s15, 1
    %p159 = scmp.ne.s32.totalorder %s154, %s156
    %p160 = scmp.eq.s32.totalorder %s15, 0
    %p161 = por %p159, %p160
    %p162 = scmp.ne.s32.totalorder %s154, %s156
    %p163 = scmp.eq.s32.totalorder %s20, 1
    %p164 = por %p162, %p163
    %p165 = scmp.ne.s32.totalorder %s156, %s157
    %p166 = scmp.eq.s32.totalorder %s20, 0
    %p167 = por %p165, %p166
    %p168 = scmp.ne.s32.totalorder %s156, %s157
    %p169 = scmp.eq.s32.totalorder %s21, 1
    %p170 = por %p168, %p169
    %p172 = scmp.ne.s32.totalorder %s157, %s171
    %p173 = scmp.eq.s32.totalorder %s21, 0
    %p174 = por %p172, %p173
    %s176 = sadd.s32 %s175, 1
    %p179 = scmp.eq.s32.totalorder %s15, 1
    %p180 = scmp.ne.s32.totalorder %s175, %s177
    %p181 = scmp.eq.s32.totalorder %s15, 0
    %p182 = por %p180, %p181
    %p183 = scmp.ne.s32.totalorder %s175, %s177
    %p184 = scmp.eq.s32.totalorder %s20, 1
    %p185 = por %p183, %p184
    %p186 = scmp.ne.s32.totalorder %s177, %s178
    %p187 = scmp.eq.s32.totalorder %s20, 0
    %p188 = por %p186, %p187
    %p189 = scmp.ne.s32.totalorder %s177, %s178
    %p190 = scmp.eq.s32.totalorder %s21, 1
    %p191 = por %p189, %p190
    %p193 = scmp.ne.s32.totalorder %s178, %s192
    %p194 = scmp.eq.s32.totalorder %s21, 0
    %p195 = por %p193, %p194
    %s197 = sadd.s32 %s196, 1
    %p200 = scmp.eq.s32.totalorder %s15, 1
    %p201 = scmp.ne.s32.totalorder %s196, %s198
    %p202 = scmp.eq.s32.totalorder %s15, 0
    %p203 = por %p201, %p202
    %p204 = scmp.ne.s32.totalorder %s196, %s198
    %p205 = scmp.eq.s32.totalorder %s20, 1
    %p206 = por %p204, %p205
    %p207 = scmp.ne.s32.totalorder %s198, %s199
    %p208 = scmp.eq.s32.totalorder %s20, 0
    %p209 = por %p207, %p208
    %p210 = scmp.ne.s32.totalorder %s198, %s199
    %p211 = scmp.eq.s32.totalorder %s21, 1
    %p212 = por %p210, %p211
    %p214 = scmp.ne.s32.totalorder %s199, %s213
    %p215 = scmp.eq.s32.totalorder %s21, 0
    %p216 = por %p214, %p215
    %s217 = ssub.s32 %s15, %s22
    %p218 = scmp.eq.s32.totalorder %s217, 0
    %s220 = sadd.s32 %s219, 1
    %s221 = scalar_select %p218, %s219, %s220
    %p224 = pneg %p218
    %p225 = scmp.eq.s32.totalorder %s15, 1
    %p226 = por %p224, %p225
    %p227 = scmp.ne.s32.totalorder %s219, %s222
    %p228 = scmp.eq.s32.totalorder %s15, 0
    %p229 = por %p227, %p228
    %p230 = scmp.ne.s32.totalorder %s219, %s222
    %p231 = scmp.eq.s32.totalorder %s20, 1
    %p232 = por %p230, %p231
    %p233 = scmp.ne.s32.totalorder %s222, %s223
    %p234 = scmp.eq.s32.totalorder %s20, 0
    %p235 = por %p233, %p234
    %p236 = scmp.ne.s32.totalorder %s222, %s223
    %p237 = scmp.eq.s32.totalorder %s21, 1
    %p238 = por %p236, %p237
    %p240 = scmp.ne.s32.totalorder %s223, %s239
    %p241 = scmp.eq.s32.totalorder %s21, 0
    %p242 = por %p240, %p241
    %p243 = scmp.le.s32.totalorder 1, %s15
    %p244 = scmp.lt.s32.totalorder %s15, 3
    %p245 = pnand %p243, %p244
    %p246 = pneg %p245
    // Predicated region
    $region9: #{qaeasyconcept_forward.28} parent=5 // pred_check
      _
    $region10: #{qaeasyconcept_forward.28} parent=5 // pred_check_branch
      %248 = sbr.rel (%p245) target = $region12
    $region11: #{qaeasyconcept_forward.28} parent=5 // pred_region
      %s249 = ssub.s32 %s15, 1
      // Predicated region
      $region13: #{qaeasyconcept_forward.28} parent=11 // pred_check
        %p250 = pneg %p62
      $region14: #{qaeasyconcept_forward.28} parent=11 // pred_check_branch
        %252 = sbr.rel (%p250) target = $region16
      $region15: #{qaeasyconcept_forward.28} parent=11 // pred_region
        _
      $region16: #{qaeasyconcept_forward.28} parent=11 // pred_fallthru
        _
      // Predicated region
      $region17: #{qaeasyconcept_forward.28} parent=11 // pred_check
        %p253 = pneg %p83
      $region18: #{qaeasyconcept_forward.28} parent=11 // pred_check_branch
        %255 = sbr.rel (%p253) target = $region20
      $region19: #{qaeasyconcept_forward.28} parent=11 // pred_region
        _
      $region20: #{qaeasyconcept_forward.28} parent=11 // pred_fallthru
        _
      // Predicated region
      $region21: #{qaeasyconcept_forward.28} parent=11 // pred_check
        %p256 = pneg %p104
      $region22: #{qaeasyconcept_forward.28} parent=11 // pred_check_branch
        %258 = sbr.rel (%p256) target = $region24
      $region23: #{qaeasyconcept_forward.28} parent=11 // pred_region
        _
      $region24: #{qaeasyconcept_forward.28} parent=11 // pred_fallthru
        _
      // Predicated region
      $region25: #{qaeasyconcept_forward.28} parent=11 // pred_check
        %p259 = pneg %p125
      $region26: #{qaeasyconcept_forward.28} parent=11 // pred_check_branch
        %261 = sbr.rel (%p259) target = $region28
      $region27: #{qaeasyconcept_forward.28} parent=11 // pred_region
        _
      $region28: #{qaeasyconcept_forward.28} parent=11 // pred_fallthru
        _
      // Predicated region
      $region29: #{qaeasyconcept_forward.28} parent=11 // pred_check
        %p262 = pneg %p146
      $region30: #{qaeasyconcept_forward.28} parent=11 // pred_check_branch
        %264 = sbr.rel (%p262) target = $region32
      $region31: #{qaeasyconcept_forward.28} parent=11 // pred_region
        _
      $region32: #{qaeasyconcept_forward.28} parent=11 // pred_fallthru
        _
      // Predicated region
      $region33: #{qaeasyconcept_forward.28} parent=11 // pred_check
        %p265 = pneg %p167
      $region34: #{qaeasyconcept_forward.28} parent=11 // pred_check_branch
        %267 = sbr.rel (%p265) target = $region36
      $region35: #{qaeasyconcept_forward.28} parent=11 // pred_region
        _
      $region36: #{qaeasyconcept_forward.28} parent=11 // pred_fallthru
        _
      // Predicated region
      $region37: #{qaeasyconcept_forward.28} parent=11 // pred_check
        %p268 = pneg %p188
      $region38: #{qaeasyconcept_forward.28} parent=11 // pred_check_branch
        %270 = sbr.rel (%p268) target = $region40
      $region39: #{qaeasyconcept_forward.28} parent=11 // pred_region
        _
      $region40: #{qaeasyconcept_forward.28} parent=11 // pred_fallthru
        _
      // Predicated region
      $region41: #{qaeasyconcept_forward.28} parent=11 // pred_check
        %p271 = pneg %p209
      $region42: #{qaeasyconcept_forward.28} parent=11 // pred_check_branch
        %273 = sbr.rel (%p271) target = $region44
      $region43: #{qaeasyconcept_forward.28} parent=11 // pred_region
        _
      $region44: #{qaeasyconcept_forward.28} parent=11 // pred_fallthru
        _
    $region12: #{qaeasyconcept_forward.28} parent=5 // pred_fallthru
      _
    %p274 = scmp.lt.s32.totalorder %s15, 2
    // Predicated region
    $region45: #{qaeasyconcept_forward.28} parent=5 // pred_check
      %p275 = pneg %p274
    $region46: #{qaeasyconcept_forward.28} parent=5 // pred_check_branch
      %277 = sbr.rel (%p275) target = $region48
    $region47: #{qaeasyconcept_forward.28} parent=5 // pred_region
      // Predicated region
      $region49: #{qaeasyconcept_forward.28} parent=47 // pred_check
        %p278 = pneg %p35
      $region50: #{qaeasyconcept_forward.28} parent=47 // pred_check_branch
        %280 = sbr.rel (%p278) target = $region52
      $region51: #{qaeasyconcept_forward.28} parent=47 // pred_region
        %p281 = scmp.lt.s32.totalorder %s15, 1
        %s282 = scalar_select %p281, %s15, 1
        %s283 = smul.addr %s282, 8
        %s284 = scalar_lea.vmem %s0, %s283
      $region52: #{qaeasyconcept_forward.28} parent=47 // pred_fallthru
        _
    $region48: #{qaeasyconcept_forward.28} parent=5 // pred_fallthru
      _
    %p285 = scmp.le.s32.totalorder 1, %s15
    %p286 = scmp.lt.s32.totalorder %s15, 3
    %p287 = pnand %p285, %p286
    %p288 = pneg %p287
    // Predicated region
    $region53: #{qaeasyconcept_forward.28} parent=5 // pred_check
      _
    $region54: #{qaeasyconcept_forward.28} parent=5 // pred_check_branch
      %290 = sbr.rel (%p287) target = $region56
    $region55: #{qaeasyconcept_forward.28} parent=5 // pred_region
      %s291 = ssub.s32 %s15, 1
      %p292 = scmp.lt.s32.totalorder %s20, 1
      %s293 = scalar_select %p292, %s20, 1
      %s294 = smul.addr %s293, 8
      %s295 = scalar_lea.vmem %s0, %s294
      %p296 = pneg %p41
      %p297 = pneg %p38
      %p298 = pneg %p62
      %p299 = pneg %p59
      %p300 = pneg %p83
      %p301 = pneg %p80
      %p302 = pneg %p104
      %p303 = pneg %p101
      %p304 = pneg %p125
      %p305 = pneg %p122
      %p306 = pneg %p146
      %p307 = pneg %p143
      %p308 = pneg %p167
      %p309 = pneg %p164
      %p310 = pneg %p188
      %p311 = pneg %p185
      %p312 = pneg %p209
      %p313 = pneg %p206
      %p314 = pneg %p235
      %p315 = pneg %p232
      %p316 = scmp.lt.s32.totalorder %s20, 1
      %s317 = scalar_select %p316, %s20, 1
      %s318 = smul.addr %s317, 8
      %s319 = scalar_lea.vmem %s9, %s318
      %p320 = scmp.lt.s32.totalorder %s20, 1
      %s321 = scalar_select %p320, %s20, 1
      %s322 = smul.addr %s321, 8
      %s323 = scalar_lea.vmem %s0, %s322
      %p324 = scmp.lt.s32.totalorder %s20, 1
      %s325 = scalar_select %p324, %s20, 1
      %s326 = smul.addr %s325, 8
      %s327 = scalar_lea.vmem %s9, %s326
      %v329 = vld [vmem:[%s323] sm:$0xff]
      %v330 = vld [vmem:[%s5] sm:$0x1]
      %v331 = vld [vmem:[%s6] sm:$0x1]
      %vm332 = vcmask 261120
      %v333 = vsel %vm332, %v329, 0.0
      %334 = vadd.xlane.f32.xlu0 %v333
      %v335 = vpop.xlane.xlu0 %334
      %v336 = vrcp.pop 32.0
      %v337 = vmul.f32 %v335, %v336
      %v338 = vsub.f32 %v329, %v337
      %v339 = vmul.f32 %v338, %v338
      %v340 = vsel %vm332, %v339, 0.0
      %341 = vadd.xlane.f32.xlu0 %v340
      %v342 = vpop.xlane.xlu0 %341
      %v343 = vmul.f32 %v342, %v336
      %v344 = vadd.f32 %v343, 1e-12
      %v345 = vrsqrt.pop %v344
      %v346 = vmul.f32 %v344, %v345
      %vm347 = vcmp.eq.f32.partialorder %v344, inf
      %v348 = vsel %vm347, %v344, %v346
      %vm349 = vcmp.eq.f32.partialorder %v344, 0.0
      %v350 = vand.u32 %v344, 2147483648
      %v351 = vsel %vm349, %v350, %v348
      %v352 = vrcp.pop %v351
      %v353 = vmul.f32 %v338, %v352
      %v355 = vlaneseq
      %v356 = vshrl.u32 %v355, 7
      %v357 = vsub.s32 0, %v356
      %v358 = vrot.slane %v330, %v357
      %v360 = vmul.f32 %v358, %v353
      %v362 = vlaneseq
      %v363 = vshrl.u32 %v362, 7
      %v364 = vsub.s32 0, %v363
      %v365 = vrot.slane %v331, %v364
      %v367 = vadd.f32 %v360, %v365
      %v368 = vpack.c.bf16 %v367, %v367
      %v369 = vld [vmem:[%s1] sm:$0xf]
      %v370 = vld [vmem:[%s1 + $0x4] sm:$0xf]
      %v371 = vld [vmem:[%s1 + $0x8] sm:$0xf]
      %v372 = vld [vmem:[%s1 + $0xc] sm:$0xf]
      %v373 = vld [vmem:[%s2] sm:$0x1]
      %v375 = vlaneseq
      %v376 = vshrl.u32 %v375, 7
      %v377 = vsub.s32 0, %v376
      %v378 = vrot.slane %v373, %v377
      %v384 = vunpack.c.l.b16 %v369
      %v385 = vunpack.c.l.b16 %v370
      %v386 = vunpack.c.l.b16 %v371
      %v387 = vunpack.c.l.b16 %v372
      %v388 = vpack.c.b16 %v385, %v384
      %v389 = vpack.c.b16 %v387, %v386
      %v393 = vsel %vm332, %v368, 0
      %395 = vmatprep.subr.bf16.mxu0 0
      %396 = vmatpush1.bf16.msra.mxu0 %v388
      %397 = vmatprep.subr.bf16.mxu0 0
      %398 = vmatpush1.bf16.msra.mxu0 %v389
      %399 = vmatprep.subr.bf16.mxu0 0
      %400 = vmatpush1.bf16.msra.mxu0 0
      %401 = vmatprep.subr.bf16.mxu0 0
      %402 = vmatpush1.bf16.msra.mxu0 0
      %403 = vmatprep.subr.bf16.mxu0 0
      %404 = vmatpush1.bf16.msra.mxu0 0
      %405 = vmatprep.subr.bf16.mxu0 0
      %406 = vmatpush1.bf16.msra.mxu0 0
      %407 = vmatprep.subr.bf16.mxu0 0
      %408 = vmatpush1.bf16.msra.mxu0 0
      %409 = vmatprep.subr.bf16.mxu0 0
      %410 = vmatpush1.bf16.msra.mxu0 0
      %411 = vmatprep.subr.bf16.mxu0 0
      %412 = vmatpush1.bf16.msra.mxu0 0
      %413 = vmatprep.subr.bf16.mxu0 0
      %414 = vmatpush1.bf16.msra.mxu0 0
      %415 = vmatprep.subr.bf16.mxu0 0
      %416 = vmatpush1.bf16.msra.mxu0 0
      %417 = vmatprep.subr.bf16.mxu0 0
      %418 = vmatpush1.bf16.msra.mxu0 0
      %419 = vmatprep.subr.bf16.mxu0 0
      %420 = vmatpush1.bf16.msra.mxu0 0
      %421 = vmatprep.subr.bf16.mxu0 0
      %422 = vmatpush1.bf16.msra.mxu0 0
      %423 = vmatprep.subr.bf16.mxu0 0
      %424 = vmatpush1.bf16.msra.mxu0 0
      %425 = vmatprep.subr.bf16.mxu0 0
      %426 = vmatpush1.bf16.msra.mxu0 0
      %427 = vmatprep.mubr.bf16.mxu0 0
      %428 = vmatmul.mubr.bf16.gmra.mrb[0].mxu0 %v393
      %v429 = vpop.f32.mrb[0].mxu0
      %v430 = vadd.f32 %v378, %v429
      %v431 = vpop.f32.mrb[0].mxu0
      %v432 = vpop.f32.mrb[0].mxu0
      %v433 = vpop.f32.mrb[0].mxu0
      %434 = vdwg.mxu0
      %v435 = vmul.f32 %v430, 0.5
      %v436 = vrcp.pop 1.4142135
      %v437 = vmul.f32 %v430, %v436
      %v438 = vand.u32 2147483647, %v437
      %v439 = vmul.f32 %v438, 0.3275911
      %v440 = vadd.f32 %v439, 1.0
      %v441 = vrcp.pop %v440
      %v442 = vmul.f32 1.0, %v441
      %v443 = vmul.f32 %v442, 1.0614054
      %v444 = vadd.f32 %v443, -1.4531521
      %v445 = vmul.f32 %v444, %v442
      %v446 = vadd.f32 %v445, 1.4214138
      %v447 = vmul.f32 %v446, %v442
      %v448 = vadd.f32 %v447, -0.28449672
      %v449 = vmul.f32 %v448, %v442
      %v450 = vadd.f32 %v449, 0.2548296
      %v451 = vmul.f32 %v450, %v442
      %v452 = vsub.f32 0.0, %v438
      %v453 = vmul.f32 %v452, %v438
      %v454 = vmul.f32 %v453, 1.442695
      %v455 = vpow.pop %v454
      %v456 = vmul.f32 %v451, %v455
      %v457 = vsub.f32 1.0, %v456
      %vm458 = vcmp.lt.f32.partialorder %v437, 0.0
      %v459 = vsub.f32 0.0, %v457
      %v460 = vsel %vm458, %v459, %v457
      %v461 = vadd.f32 %v460, 1.0
      %v462 = vmul.f32 %v435, %v461
      %v463 = vpack.c.bf16 %v462, %v462
      %v464 = vld [vmem:[%s3] sm:$0xf]
      %v465 = vld [vmem:[%s3 + $0x4] sm:$0xf]
      %v466 = vld [vmem:[%s3 + $0x8] sm:$0xf]
      %v467 = vld [vmem:[%s3 + $0xc] sm:$0xf]
      %v472 = vunpack.c.l.b16 %v464
      %v473 = vunpack.c.l.b16 %v465
      %v474 = vunpack.c.l.b16 %v466
      %v475 = vunpack.c.l.b16 %v467
      %v476 = vpack.c.b16 %v473, %v472
      %v477 = vpack.c.b16 %v475, %v474
      %v481 = vsel %vm332, %v463, 0
      %483 = vmatprep.subr.bf16.mxu0 0
      %484 = vmatpush1.bf16.msra.mxu0 %v476
      %485 = vmatprep.subr.bf16.mxu0 0
      %486 = vmatpush1.bf16.msra.mxu0 %v477
      %487 = vmatprep.subr.bf16.mxu0 0
      %488 = vmatpush1.bf16.msra.mxu0 0
      %489 = vmatprep.subr.bf16.mxu0 0
      %490 = vmatpush1.bf16.msra.mxu0 0
      %491 = vmatprep.subr.bf16.mxu0 0
      %492 = vmatpush1.bf16.msra.mxu0 0
      %493 = vmatprep.subr.bf16.mxu0 0
      %494 = vmatpush1.bf16.msra.mxu0 0
      %495 = vmatprep.subr.bf16.mxu0 0
      %496 = vmatpush1.bf16.msra.mxu0 0
      %497 = vmatprep.subr.bf16.mxu0 0
      %498 = vmatpush1.bf16.msra.mxu0 0
      %499 = vmatprep.subr.bf16.mxu0 0
      %500 = vmatpush1.bf16.msra.mxu0 0
      %501 = vmatprep.subr.bf16.mxu0 0
      %502 = vmatpush1.bf16.msra.mxu0 0
      %503 = vmatprep.subr.bf16.mxu0 0
      %504 = vmatpush1.bf16.msra.mxu0 0
      %505 = vmatprep.subr.bf16.mxu0 0
      %506 = vmatpush1.bf16.msra.mxu0 0
      %507 = vmatprep.subr.bf16.mxu0 0
      %508 = vmatpush1.bf16.msra.mxu0 0
      %509 = vmatprep.subr.bf16.mxu0 0
      %510 = vmatpush1.bf16.msra.mxu0 0
      %511 = vmatprep.subr.bf16.mxu0 0
      %512 = vmatpush1.bf16.msra.mxu0 0
      %513 = vmatprep.subr.bf16.mxu0 0
      %514 = vmatpush1.bf16.msra.mxu0 0
      %515 = vmatprep.mubr.bf16.mxu0 0
      %516 = vmatmul.mubr.bf16.gmra.mrb[0].mxu0 %v481
      %v517 = vpop.f32.mrb[0].mxu0
      %v518 = vadd.f32 0.0, %v517
      %v519 = vpop.f32.mrb[0].mxu0
      %v520 = vpop.f32.mrb[0].mxu0
      %v521 = vpop.f32.mrb[0].mxu0
      %522 = vdwg.mxu0
      %v523 = vadd.f32 %v329, %v518
      %v524 = vld [vmem:[%s4] sm:$0x1]
      %v526 = vlaneseq
      %v527 = vshrl.u32 %v526, 7
      %v528 = vsub.s32 0, %v527
      %v529 = vrot.slane %v524, %v528
      %v531 = vadd.f32 %v523, %v529
      %v532 = vld [vmem:[%s7] sm:$0x1]
      %v533 = vld [vmem:[%s8] sm:$0x1]
      %v534 = vsel %vm332, %v531, 0.0
      %535 = vadd.xlane.f32.xlu0 %v534
      %v536 = vpop.xlane.xlu0 %535
      %v537 = vmul.f32 %v536, %v336
      %v538 = vsub.f32 %v531, %v537
      %v539 = vmul.f32 %v538, %v538
      %v540 = vsel %vm332, %v539, 0.0
      %541 = vadd.xlane.f32.xlu0 %v540
      %v542 = vpop.xlane.xlu0 %541
      %v543 = vmul.f32 %v542, %v336
      %v544 = vadd.f32 %v543, 1e-12
      %v545 = vrsqrt.pop %v544
      %v546 = vmul.f32 %v544, %v545
      %vm547 = vcmp.eq.f32.partialorder %v544, inf
      %v548 = vsel %vm547, %v544, %v546
      %vm549 = vcmp.eq.f32.partialorder %v544, 0.0
      %v550 = vand.u32 %v544, 2147483648
      %v551 = vsel %vm549, %v550, %v548
      %v552 = vrcp.pop %v551
      %v553 = vmul.f32 %v538, %v552
      %v555 = vlaneseq
      %v556 = vshrl.u32 %v555, 7
      %v557 = vsub.s32 0, %v556
      %v558 = vrot.slane %v532, %v557
      %v560 = vmul.f32 %v558, %v553
      %v562 = vlaneseq
      %v563 = vshrl.u32 %v562, 7
      %v564 = vsub.s32 0, %v563
      %v565 = vrot.slane %v533, %v564
      %v567 = vadd.f32 %v560, %v565
      %568 = vst.msk [vmem:[%s327] sm:$0xff] %vm332, %v567
      %p569 = scmp.lt.s32.totalorder %s20, 1
      %s570 = scalar_select %p569, %s20, 1
      %s571 = smul.addr %s570, 8
      %s572 = scalar_lea.vmem %s9, %s571
      // Predicated region
      $region57: #{qaeasyconcept_forward.28} parent=55 // pred_check
        %p573 = pneg %p232
      $region58: #{qaeasyconcept_forward.28} parent=55 // pred_check_branch
        %575 = sbr.rel (%p573) target = $region60
      $region59: #{qaeasyconcept_forward.28} parent=55 // pred_region
        _
      $region60: #{qaeasyconcept_forward.28} parent=55 // pred_fallthru
        _
    $region56: #{qaeasyconcept_forward.28} parent=5 // pred_fallthru
      _
    %p576 = scmp.le.s32.totalorder 2, %s15
    // Predicated region
    $region61: #{qaeasyconcept_forward.28} parent=5 // pred_check
      %p577 = pneg %p576
    $region62: #{qaeasyconcept_forward.28} parent=5 // pred_check_branch
      %579 = sbr.rel (%p577) target = $region64
    $region63: #{qaeasyconcept_forward.28} parent=5 // pred_region
      %s580 = ssub.s32 %s15, 2
      // Predicated region
      $region65: #{qaeasyconcept_forward.28} parent=63 // pred_check
        %p581 = pneg %p238
      $region66: #{qaeasyconcept_forward.28} parent=63 // pred_check_branch
        %583 = sbr.rel (%p581) target = $region68
      $region67: #{qaeasyconcept_forward.28} parent=63 // pred_region
        %p584 = scmp.lt.s32.totalorder %s21, 1
        %s585 = scalar_select %p584, %s21, 1
        %s586 = smul.addr %s585, 8
        %s587 = scalar_lea.vmem %s9, %s586
      $region68: #{qaeasyconcept_forward.28} parent=63 // pred_fallthru
        _
    $region64: #{qaeasyconcept_forward.28} parent=5 // pred_fallthru
      _
  $region6: #{qaeasyconcept_forward.28} parent=0 // loop_footer
    %s19 = sadd.s32 1, %s15
  $region7: #{qaeasyconcept_forward.28} parent=0 // loop_footer_branch
    %14 = sbr.rel target = $region3
  $region8: #{qaeasyconcept_forward.28} parent=0 // loop_exit
    _

// kernel: qaeasyconcept_forward.25
$region0: #{qaeasyconcept_forward.25}
  #allocation0 [shape = 'u32[]', space=smem, size = 0x4, offset = 0x4, fixed_abs, tag = 'smem constant byte address 0x4 - core index']
  #allocation1 [shape = 'u32[144,128]{1,0:T(1,128)}', space=vmem, size = 0x12000, scoped, tag = 'internal scratch']
  %s0 = inlined_call_operand.vmem [shape: f32[2,8,32], index: 0, kind: input, shape index: {}]
  %s1 = inlined_call_operand.vmem [shape: f32[8,32], index: 1, kind: input, shape index: {}]
  %s2 = inlined_call_operand.vmem [shape: f32[1,32], index: 2, kind: input, shape index: {}]
  %s3 = inlined_call_operand.vmem [shape: f32[1,32], index: 3, kind: input, shape index: {}]
  %s4 = inlined_call_operand.vmem [shape: f32[2,8,32], index: 4, kind: output, shape index: {}]
  %s5 = sld [smem:[#allocation0]]
  $region49: #{qaeasyconcept_forward.25} parent=0
    _
  %s7 = ssub.s32 1, %s5
  %s8 = scalar_select 0, %s7, %s5
  loop: start=0, step=1, limit=4
  $region2: #{qaeasyconcept_forward.25} parent=0 // loop_pre_header
    _
  $region3: #{qaeasyconcept_forward.25} parent=0 // loop_header
    %s10 = sphi 0, %s14
    %p11 = scmp.ge.s32.totalorder %s10, 4
    %s20 = sphi 0, %s22
    %s23 = sphi 0, %s20
    %s24 = sphi 0, %s23
    %s40 = sphi 0, %s24
    %s44 = sphi 0, %s44
    %s46 = sphi 0, %s44
    %s47 = sphi 0, %s46
    %s61 = sphi 0, %s47
    %s65 = sphi 0, %s65
    %s67 = sphi 0, %s65
    %s68 = sphi 0, %s67
    %s82 = sphi 0, %s68
    %s86 = sphi 0, %s86
    %s88 = sphi 0, %s86
    %s89 = sphi 0, %s88
    %s103 = sphi 0, %s89
    %s109 = sphi 0, %s111
    %s112 = sphi 0, %s109
    %s113 = sphi 0, %s112
    %s129 = sphi 0, %s113
  $region4: #{qaeasyconcept_forward.25} parent=0 // loop_header_branch
    %13 = sbr.rel (%p11) target = $region8
  $region5: #{qaeasyconcept_forward.25} parent=0 // loop_body
    %s15 = ssub.s32 %s10, 1
    %s16 = ssub.s32 %s10, 2
    %s17 = sadd.s32 %s10, 1
    %s18 = ssub.s32 %s10, %s17
    %p19 = scmp.eq.s32.totalorder %s18, 0
    %s21 = sadd.s32 %s20, 1
    %s22 = scalar_select %p19, %s20, %s21
    %p25 = pneg %p19
    %p26 = scmp.eq.s32.totalorder %s10, 1
    %p27 = por %p25, %p26
    %p28 = scmp.ne.s32.totalorder %s20, %s23
    %p29 = scmp.eq.s32.totalorder %s10, 0
    %p30 = por %p28, %p29
    %p31 = scmp.ne.s32.totalorder %s20, %s23
    %p32 = scmp.eq.s32.totalorder %s15, 1
    %p33 = por %p31, %p32
    %p34 = scmp.ne.s32.totalorder %s23, %s24
    %p35 = scmp.eq.s32.totalorder %s15, 0
    %p36 = por %p34, %p35
    %p37 = scmp.ne.s32.totalorder %s23, %s24
    %p38 = scmp.eq.s32.totalorder %s16, 1
    %p39 = por %p37, %p38
    %p41 = scmp.ne.s32.totalorder %s24, %s40
    %p42 = scmp.eq.s32.totalorder %s16, 0
    %p43 = por %p41, %p42
    %s45 = sadd.s32 %s44, 1
    %p48 = scmp.eq.s32.totalorder %s10, 1
    %p49 = scmp.ne.s32.totalorder %s44, %s46
    %p50 = scmp.eq.s32.totalorder %s10, 0
    %p51 = por %p49, %p50
    %p52 = scmp.ne.s32.totalorder %s44, %s46
    %p53 = scmp.eq.s32.totalorder %s15, 1
    %p54 = por %p52, %p53
    %p55 = scmp.ne.s32.totalorder %s46, %s47
    %p56 = scmp.eq.s32.totalorder %s15, 0
    %p57 = por %p55, %p56
    %p58 = scmp.ne.s32.totalorder %s46, %s47
    %p59 = scmp.eq.s32.totalorder %s16, 1
    %p60 = por %p58, %p59
    %p62 = scmp.ne.s32.totalorder %s47, %s61
    %p63 = scmp.eq.s32.totalorder %s16, 0
    %p64 = por %p62, %p63
    %s66 = sadd.s32 %s65, 1
    %p69 = scmp.eq.s32.totalorder %s10, 1
    %p70 = scmp.ne.s32.totalorder %s65, %s67
    %p71 = scmp.eq.s32.totalorder %s10, 0
    %p72 = por %p70, %p71
    %p73 = scmp.ne.s32.totalorder %s65, %s67
    %p74 = scmp.eq.s32.totalorder %s15, 1
    %p75 = por %p73, %p74
    %p76 = scmp.ne.s32.totalorder %s67, %s68
    %p77 = scmp.eq.s32.totalorder %s15, 0
    %p78 = por %p76, %p77
    %p79 = scmp.ne.s32.totalorder %s67, %s68
    %p80 = scmp.eq.s32.totalorder %s16, 1
    %p81 = por %p79, %p80
    %p83 = scmp.ne.s32.totalorder %s68, %s82
    %p84 = scmp.eq.s32.totalorder %s16, 0
    %p85 = por %p83, %p84
    %s87 = sadd.s32 %s86, 1
    %p90 = scmp.eq.s32.totalorder %s10, 1
    %p91 = scmp.ne.s32.totalorder %s86, %s88
    %p92 = scmp.eq.s32.totalorder %s10, 0
    %p93 = por %p91, %p92
    %p94 = scmp.ne.s32.totalorder %s86, %s88
    %p95 = scmp.eq.s32.totalorder %s15, 1
    %p96 = por %p94, %p95
    %p97 = scmp.ne.s32.totalorder %s88, %s89
    %p98 = scmp.eq.s32.totalorder %s15, 0
    %p99 = por %p97, %p98
    %p100 = scmp.ne.s32.totalorder %s88, %s89
    %p101 = scmp.eq.s32.totalorder %s16, 1
    %p102 = por %p100, %p101
    %p104 = scmp.ne.s32.totalorder %s89, %s103
    %p105 = scmp.eq.s32.totalorder %s16, 0
    %p106 = por %p104, %p105
    %s107 = ssub.s32 %s10, %s17
    %p108 = scmp.eq.s32.totalorder %s107, 0
    %s110 = sadd.s32 %s109, 1
    %s111 = scalar_select %p108, %s109, %s110
    %p114 = pneg %p108
    %p115 = scmp.eq.s32.totalorder %s10, 1
    %p116 = por %p114, %p115
    %p117 = scmp.ne.s32.totalorder %s109, %s112
    %p118 = scmp.eq.s32.totalorder %s10, 0
    %p119 = por %p117, %p118
    %p120 = scmp.ne.s32.totalorder %s109, %s112
    %p121 = scmp.eq.s32.totalorder %s15, 1
    %p122 = por %p120, %p121
    %p123 = scmp.ne.s32.totalorder %s112, %s113
    %p124 = scmp.eq.s32.totalorder %s15, 0
    %p125 = por %p123, %p124
    %p126 = scmp.ne.s32.totalorder %s112, %s113
    %p127 = scmp.eq.s32.totalorder %s16, 1
    %p128 = por %p126, %p127
    %p130 = scmp.ne.s32.totalorder %s113, %s129
    %p131 = scmp.eq.s32.totalorder %s16, 0
    %p132 = por %p130, %p131
    %p133 = scmp.le.s32.totalorder 1, %s10
    %p134 = scmp.lt.s32.totalorder %s10, 3
    %p135 = pnand %p133, %p134
    %p136 = pneg %p135
    // Predicated region
    $region9: #{qaeasyconcept_forward.25} parent=5 // pred_check
      _
    $region10: #{qaeasyconcept_forward.25} parent=5 // pred_check_branch
      %138 = sbr.rel (%p135) target = $region12
    $region11: #{qaeasyconcept_forward.25} parent=5 // pred_region
      %s139 = ssub.s32 %s10, 1
      // Predicated region
      $region13: #{qaeasyconcept_forward.25} parent=11 // pred_check
        %p140 = pneg %p57
      $region14: #{qaeasyconcept_forward.25} parent=11 // pred_check_branch
        %142 = sbr.rel (%p140) target = $region16
      $region15: #{qaeasyconcept_forward.25} parent=11 // pred_region
        _
      $region16: #{qaeasyconcept_forward.25} parent=11 // pred_fallthru
        _
      // Predicated region
      $region17: #{qaeasyconcept_forward.25} parent=11 // pred_check
        %p143 = pneg %p78
      $region18: #{qaeasyconcept_forward.25} parent=11 // pred_check_branch
        %145 = sbr.rel (%p143) target = $region20
      $region19: #{qaeasyconcept_forward.25} parent=11 // pred_region
        _
      $region20: #{qaeasyconcept_forward.25} parent=11 // pred_fallthru
        _
      // Predicated region
      $region21: #{qaeasyconcept_forward.25} parent=11 // pred_check
        %p146 = pneg %p99
      $region22: #{qaeasyconcept_forward.25} parent=11 // pred_check_branch
        %148 = sbr.rel (%p146) target = $region24
      $region23: #{qaeasyconcept_forward.25} parent=11 // pred_region
        _
      $region24: #{qaeasyconcept_forward.25} parent=11 // pred_fallthru
        _
    $region12: #{qaeasyconcept_forward.25} parent=5 // pred_fallthru
      _
    %p149 = scmp.lt.s32.totalorder %s10, 2
    // Predicated region
    $region25: #{qaeasyconcept_forward.25} parent=5 // pred_check
      %p150 = pneg %p149
    $region26: #{qaeasyconcept_forward.25} parent=5 // pred_check_branch
      %152 = sbr.rel (%p150) target = $region28
    $region27: #{qaeasyconcept_forward.25} parent=5 // pred_region
      // Predicated region
      $region29: #{qaeasyconcept_forward.25} parent=27 // pred_check
        %p153 = pneg %p30
      $region30: #{qaeasyconcept_forward.25} parent=27 // pred_check_branch
        %155 = sbr.rel (%p153) target = $region32
      $region31: #{qaeasyconcept_forward.25} parent=27 // pred_region
        %p156 = scmp.lt.s32.totalorder %s10, 1
        %s157 = scalar_select %p156, %s10, 1
        %s158 = smul.addr %s157, 8
        %s159 = scalar_lea.vmem %s0, %s158
      $region32: #{qaeasyconcept_forward.25} parent=27 // pred_fallthru
        _
    $region28: #{qaeasyconcept_forward.25} parent=5 // pred_fallthru
      _
    %p160 = scmp.le.s32.totalorder 1, %s10
    %p161 = scmp.lt.s32.totalorder %s10, 3
    %p162 = pnand %p160, %p161
    %p163 = pneg %p162
    // Predicated region
    $region33: #{qaeasyconcept_forward.25} parent=5 // pred_check
      _
    $region34: #{qaeasyconcept_forward.25} parent=5 // pred_check_branch
      %165 = sbr.rel (%p162) target = $region36
    $region35: #{qaeasyconcept_forward.25} parent=5 // pred_region
      %s166 = ssub.s32 %s10, 1
      %p167 = scmp.lt.s32.totalorder %s15, 1
      %s168 = scalar_select %p167, %s15, 1
      %s169 = smul.addr %s168, 8
      %s170 = scalar_lea.vmem %s0, %s169
      %p171 = pneg %p36
      %p172 = pneg %p33
      %p173 = pneg %p57
      %p174 = pneg %p54
      %p175 = pneg %p78
      %p176 = pneg %p75
      %p177 = pneg %p99
      %p178 = pneg %p96
      %p179 = pneg %p125
      %p180 = pneg %p122
      %p181 = scmp.lt.s32.totalorder %s15, 1
      %s182 = scalar_select %p181, %s15, 1
      %s183 = smul.addr %s182, 8
      %s184 = scalar_lea.vmem %s4, %s183
      %p185 = scmp.lt.s32.totalorder %s15, 1
      %s186 = scalar_select %p185, %s15, 1
      %s187 = smul.addr %s186, 8
      %s188 = scalar_lea.vmem %s0, %s187
      %p189 = scmp.lt.s32.totalorder %s15, 1
      %s190 = scalar_select %p189, %s15, 1
      %s191 = smul.addr %s190, 8
      %s192 = scalar_lea.vmem %s4, %s191
      %v193 = vld [vmem:[%s188] sm:$0xff]
      %v194 = vld [vmem:[%s1] sm:$0xff]
      %v195 = vadd.f32 %v193, %v194
      %v196 = vld [vmem:[%s2] sm:$0x1]
      %v197 = vld [vmem:[%s3] sm:$0x1]
      %vm198 = vcmask 261120
      %v199 = vsel %vm198, %v195, 0.0
      %200 = vadd.xlane.f32.xlu0 %v199
      %v201 = vpop.xlane.xlu0 %200
      %v202 = vrcp.pop 32.0
      %v203 = vmul.f32 %v201, %v202
      %v204 = vsub.f32 %v195, %v203
      %v205 = vmul.f32 %v204, %v204
      %v206 = vsel %vm198, %v205, 0.0
      %207 = vadd.xlane.f32.xlu0 %v206
      %v208 = vpop.xlane.xlu0 %207
      %v209 = vmul.f32 %v208, %v202
      %v210 = vadd.f32 %v209, 1e-12
      %v211 = vrsqrt.pop %v210
      %v212 = vmul.f32 %v210, %v211
      %vm213 = vcmp.eq.f32.partialorder %v210, inf
      %v214 = vsel %vm213, %v210, %v212
      %vm215 = vcmp.eq.f32.partialorder %v210, 0.0
      %v216 = vand.u32 %v210, 2147483648
      %v217 = vsel %vm215, %v216, %v214
      %v218 = vrcp.pop %v217
      %v219 = vmul.f32 %v204, %v218
      %v221 = vlaneseq
      %v222 = vshrl.u32 %v221, 7
      %v223 = vsub.s32 0, %v222
      %v224 = vrot.slane %v196, %v223
      %v226 = vmul.f32 %v224, %v219
      %v228 = vlaneseq
      %v229 = vshrl.u32 %v228, 7
      %v230 = vsub.s32 0, %v229
      %v231 = vrot.slane %v197, %v230
      %v233 = vadd.f32 %v226, %v231
      %234 = vst.msk [vmem:[%s192] sm:$0xff] %vm198, %v233
      %p235 = scmp.lt.s32.totalorder %s15, 1
      %s236 = scalar_select %p235, %s15, 1
      %s237 = smul.addr %s236, 8
      %s238 = scalar_lea.vmem %s4, %s237
      // Predicated region
      $region37: #{qaeasyconcept_forward.25} parent=35 // pred_check
        %p239 = pneg %p122
      $region38: #{qaeasyconcept_forward.25} parent=35 // pred_check_branch
        %241 = sbr.rel (%p239) target = $region40
      $region39: #{qaeasyconcept_forward.25} parent=35 // pred_region
        _
      $region40: #{qaeasyconcept_forward.25} parent=35 // pred_fallthru
        _
    $region36: #{qaeasyconcept_forward.25} parent=5 // pred_fallthru
      _
    %p242 = scmp.le.s32.totalorder 2, %s10
    // Predicated region
    $region41: #{qaeasyconcept_forward.25} parent=5 // pred_check
      %p243 = pneg %p242
    $region42: #{qaeasyconcept_forward.25} parent=5 // pred_check_branch
      %245 = sbr.rel (%p243) target = $region44
    $region43: #{qaeasyconcept_forward.25} parent=5 // pred_region
      %s246 = ssub.s32 %s10, 2
      // Predicated region
      $region45: #{qaeasyconcept_forward.25} parent=43 // pred_check
        %p247 = pneg %p128
      $region46: #{qaeasyconcept_forward.25} parent=43 // pred_check_branch
        %249 = sbr.rel (%p247) target = $region48
      $region47: #{qaeasyconcept_forward.25} parent=43 // pred_region
        %p250 = scmp.lt.s32.totalorder %s16, 1
        %s251 = scalar_select %p250, %s16, 1
        %s252 = smul.addr %s251, 8
        %s253 = scalar_lea.vmem %s4, %s252
      $region48: #{qaeasyconcept_forward.25} parent=43 // pred_fallthru
        _
    $region44: #{qaeasyconcept_forward.25} parent=5 // pred_fallthru
      _
  $region6: #{qaeasyconcept_forward.25} parent=0 // loop_footer
    %s14 = sadd.s32 1, %s10
  $region7: #{qaeasyconcept_forward.25} parent=0 // loop_footer_branch
    %9 = sbr.rel target = $region3
  $region8: #{qaeasyconcept_forward.25} parent=0 // loop_exit
    _

// kernel: qaeasyconcept_forward.27
$region0: #{qaeasyconcept_forward.27}
  #allocation0 [shape = 'u32[]', space=smem, size = 0x4, offset = 0x4, fixed_abs, tag = 'smem constant byte address 0x4 - core index']
  #allocation1 [shape = 'u32[144,128]{1,0:T(1,128)}', space=vmem, size = 0x12000, scoped, tag = 'internal scratch']
  %s0 = inlined_call_operand.vmem [shape: f32[2,8,32], index: 0, kind: input, shape index: {}]
  %s1 = inlined_call_operand.vmem [shape: f32[2,1,8], index: 1, kind: input, shape index: {}]
  %s2 = inlined_call_operand.vmem [shape: bf16[32,96], index: 2, kind: input, shape index: {}]
  %s3 = inlined_call_operand.vmem [shape: f32[1,96], index: 3, kind: input, shape index: {}]
  %s4 = inlined_call_operand.vmem [shape: bf16[32,32], index: 4, kind: input, shape index: {}]
  %s5 = inlined_call_operand.vmem [shape: f32[1,32], index: 5, kind: input, shape index: {}]
  %s6 = inlined_call_operand.vmem [shape: f32[2,8,32], index: 6, kind: output, shape index: {}]
  %s7 = sld [smem:[#allocation0]]
  $region57: #{qaeasyconcept_forward.27} parent=0
    _
  %s9 = ssub.s32 1, %s7
  %s10 = scalar_select 0, %s9, %s7
  loop: start=0, step=1, limit=4
  $region2: #{qaeasyconcept_forward.27} parent=0 // loop_pre_header
    _
  $region3: #{qaeasyconcept_forward.27} parent=0 // loop_header
    %s12 = sphi 0, %s16
    %p13 = scmp.ge.s32.totalorder %s12, 4
    %s22 = sphi 0, %s24
    %s25 = sphi 0, %s22
    %s26 = sphi 0, %s25
    %s42 = sphi 0, %s26
    %s48 = sphi 0, %s50
    %s51 = sphi 0, %s48
    %s52 = sphi 0, %s51
    %s68 = sphi 0, %s52
    %s72 = sphi 0, %s72
    %s74 = sphi 0, %s72
    %s75 = sphi 0, %s74
    %s89 = sphi 0, %s75
    %s93 = sphi 0, %s93
    %s95 = sphi 0, %s93
    %s96 = sphi 0, %s95
    %s110 = sphi 0, %s96
    %s114 = sphi 0, %s114
    %s116 = sphi 0, %s114
    %s117 = sphi 0, %s116
    %s131 = sphi 0, %s117
    %s135 = sphi 0, %s135
    %s137 = sphi 0, %s135
    %s138 = sphi 0, %s137
    %s152 = sphi 0, %s138
    %s158 = sphi 0, %s160
    %s161 = sphi 0, %s158
    %s162 = sphi 0, %s161
    %s178 = sphi 0, %s162
  $region4: #{qaeasyconcept_forward.27} parent=0 // loop_header_branch
    %15 = sbr.rel (%p13) target = $region8
  $region5: #{qaeasyconcept_forward.27} parent=0 // loop_body
    %s17 = ssub.s32 %s12, 1
    %s18 = ssub.s32 %s12, 2
    %s19 = sadd.s32 %s12, 1
    %s20 = ssub.s32 %s12, %s19
    %p21 = scmp.eq.s32.totalorder %s20, 0
    %s23 = sadd.s32 %s22, 1
    %s24 = scalar_select %p21, %s22, %s23
    %p27 = pneg %p21
    %p28 = scmp.eq.s32.totalorder %s12, 1
    %p29 = por %p27, %p28
    %p30 = scmp.ne.s32.totalorder %s22, %s25
    %p31 = scmp.eq.s32.totalorder %s12, 0
    %p32 = por %p30, %p31
    %p33 = scmp.ne.s32.totalorder %s22, %s25
    %p34 = scmp.eq.s32.totalorder %s17, 1
    %p35 = por %p33, %p34
    %p36 = scmp.ne.s32.totalorder %s25, %s26
    %p37 = scmp.eq.s32.totalorder %s17, 0
    %p38 = por %p36, %p37
    %p39 = scmp.ne.s32.totalorder %s25, %s26
    %p40 = scmp.eq.s32.totalorder %s18, 1
    %p41 = por %p39, %p40
    %p43 = scmp.ne.s32.totalorder %s26, %s42
    %p44 = scmp.eq.s32.totalorder %s18, 0
    %p45 = por %p43, %p44
    %s46 = ssub.s32 %s12, %s19
    %p47 = scmp.eq.s32.totalorder %s46, 0
    %s49 = sadd.s32 %s48, 1
    %s50 = scalar_select %p47, %s48, %s49
    %p53 = pneg %p47
    %p54 = scmp.eq.s32.totalorder %s12, 1
    %p55 = por %p53, %p54
    %p56 = scmp.ne.s32.totalorder %s48, %s51
    %p57 = scmp.eq.s32.totalorder %s12, 0
    %p58 = por %p56, %p57
    %p59 = scmp.ne.s32.totalorder %s48, %s51
    %p60 = scmp.eq.s32.totalorder %s17, 1
    %p61 = por %p59, %p60
    %p62 = scmp.ne.s32.totalorder %s51, %s52
    %p63 = scmp.eq.s32.totalorder %s17, 0
    %p64 = por %p62, %p63
    %p65 = scmp.ne.s32.totalorder %s51, %s52
    %p66 = scmp.eq.s32.totalorder %s18, 1
    %p67 = por %p65, %p66
    %p69 = scmp.ne.s32.totalorder %s52, %s68
    %p70 = scmp.eq.s32.totalorder %s18, 0
    %p71 = por %p69, %p70
    %s73 = sadd.s32 %s72, 1
    %p76 = scmp.eq.s32.totalorder %s12, 1
    %p77 = scmp.ne.s32.totalorder %s72, %s74
    %p78 = scmp.eq.s32.totalorder %s12, 0
    %p79 = por %p77, %p78
    %p80 = scmp.ne.s32.totalorder %s72, %s74
    %p81 = scmp.eq.s32.totalorder %s17, 1
    %p82 = por %p80, %p81
    %p83 = scmp.ne.s32.totalorder %s74, %s75
    %p84 = scmp.eq.s32.totalorder %s17, 0
    %p85 = por %p83, %p84
    %p86 = scmp.ne.s32.totalorder %s74, %s75
    %p87 = scmp.eq.s32.totalorder %s18, 1
    %p88 = por %p86, %p87
    %p90 = scmp.ne.s32.totalorder %s75, %s89
    %p91 = scmp.eq.s32.totalorder %s18, 0
    %p92 = por %p90, %p91
    %s94 = sadd.s32 %s93, 1
    %p97 = scmp.eq.s32.totalorder %s12, 1
    %p98 = scmp.ne.s32.totalorder %s93, %s95
    %p99 = scmp.eq.s32.totalorder %s12, 0
    %p100 = por %p98, %p99
    %p101 = scmp.ne.s32.totalorder %s93, %s95
    %p102 = scmp.eq.s32.totalorder %s17, 1
    %p103 = por %p101, %p102
    %p104 = scmp.ne.s32.totalorder %s95, %s96
    %p105 = scmp.eq.s32.totalorder %s17, 0
    %p106 = por %p104, %p105
    %p107 = scmp.ne.s32.totalorder %s95, %s96
    %p108 = scmp.eq.s32.totalorder %s18, 1
    %p109 = por %p107, %p108
    %p111 = scmp.ne.s32.totalorder %s96, %s110
    %p112 = scmp.eq.s32.totalorder %s18, 0
    %p113 = por %p111, %p112
    %s115 = sadd.s32 %s114, 1
    %p118 = scmp.eq.s32.totalorder %s12, 1
    %p119 = scmp.ne.s32.totalorder %s114, %s116
    %p120 = scmp.eq.s32.totalorder %s12, 0
    %p121 = por %p119, %p120
    %p122 = scmp.ne.s32.totalorder %s114, %s116
    %p123 = scmp.eq.s32.totalorder %s17, 1
    %p124 = por %p122, %p123
    %p125 = scmp.ne.s32.totalorder %s116, %s117
    %p126 = scmp.eq.s32.totalorder %s17, 0
    %p127 = por %p125, %p126
    %p128 = scmp.ne.s32.totalorder %s116, %s117
    %p129 = scmp.eq.s32.totalorder %s18, 1
    %p130 = por %p128, %p129
    %p132 = scmp.ne.s32.totalorder %s117, %s131
    %p133 = scmp.eq.s32.totalorder %s18, 0
    %p134 = por %p132, %p133
    %s136 = sadd.s32 %s135, 1
    %p139 = scmp.eq.s32.totalorder %s12, 1
    %p140 = scmp.ne.s32.totalorder %s135, %s137
    %p141 = scmp.eq.s32.totalorder %s12, 0
    %p142 = por %p140, %p141
    %p143 = scmp.ne.s32.totalorder %s135, %s137
    %p144 = scmp.eq.s32.totalorder %s17, 1
    %p145 = por %p143, %p144
    %p146 = scmp.ne.s32.totalorder %s137, %s138
    %p147 = scmp.eq.s32.totalorder %s17, 0
    %p148 = por %p146, %p147
    %p149 = scmp.ne.s32.totalorder %s137, %s138
    %p150 = scmp.eq.s32.totalorder %s18, 1
    %p151 = por %p149, %p150
    %p153 = scmp.ne.s32.totalorder %s138, %s152
    %p154 = scmp.eq.s32.totalorder %s18, 0
    %p155 = por %p153, %p154
    %s156 = ssub.s32 %s12, %s19
    %p157 = scmp.eq.s32.totalorder %s156, 0
    %s159 = sadd.s32 %s158, 1
    %s160 = scalar_select %p157, %s158, %s159
    %p163 = pneg %p157
    %p164 = scmp.eq.s32.totalorder %s12, 1
    %p165 = por %p163, %p164
    %p166 = scmp.ne.s32.totalorder %s158, %s161
    %p167 = scmp.eq.s32.totalorder %s12, 0
    %p168 = por %p166, %p167
    %p169 = scmp.ne.s32.totalorder %s158, %s161
    %p170 = scmp.eq.s32.totalorder %s17, 1
    %p171 = por %p169, %p170
    %p172 = scmp.ne.s32.totalorder %s161, %s162
    %p173 = scmp.eq.s32.totalorder %s17, 0
    %p174 = por %p172, %p173
    %p175 = scmp.ne.s32.totalorder %s161, %s162
    %p176 = scmp.eq.s32.totalorder %s18, 1
    %p177 = por %p175, %p176
    %p179 = scmp.ne.s32.totalorder %s162, %s178
    %p180 = scmp.eq.s32.totalorder %s18, 0
    %p181 = por %p179, %p180
    %p182 = scmp.le.s32.totalorder 1, %s12
    %p183 = scmp.lt.s32.totalorder %s12, 3
    %p184 = pnand %p182, %p183
    %p185 = pneg %p184
    // Predicated region
    $region9: #{qaeasyconcept_forward.27} parent=5 // pred_check
      _
    $region10: #{qaeasyconcept_forward.27} parent=5 // pred_check_branch
      %187 = sbr.rel (%p184) target = $region12
    $region11: #{qaeasyconcept_forward.27} parent=5 // pred_region
      %s188 = ssub.s32 %s12, 1
      // Predicated region
      $region13: #{qaeasyconcept_forward.27} parent=11 // pred_check
        %p189 = pneg %p85
      $region14: #{qaeasyconcept_forward.27} parent=11 // pred_check_branch
        %191 = sbr.rel (%p189) target = $region16
      $region15: #{qaeasyconcept_forward.27} parent=11 // pred_region
        _
      $region16: #{qaeasyconcept_forward.27} parent=11 // pred_fallthru
        _
      // Predicated region
      $region17: #{qaeasyconcept_forward.27} parent=11 // pred_check
        %p192 = pneg %p106
      $region18: #{qaeasyconcept_forward.27} parent=11 // pred_check_branch
        %194 = sbr.rel (%p192) target = $region20
      $region19: #{qaeasyconcept_forward.27} parent=11 // pred_region
        _
      $region20: #{qaeasyconcept_forward.27} parent=11 // pred_fallthru
        _
      // Predicated region
      $region21: #{qaeasyconcept_forward.27} parent=11 // pred_check
        %p195 = pneg %p127
      $region22: #{qaeasyconcept_forward.27} parent=11 // pred_check_branch
        %197 = sbr.rel (%p195) target = $region24
      $region23: #{qaeasyconcept_forward.27} parent=11 // pred_region
        _
      $region24: #{qaeasyconcept_forward.27} parent=11 // pred_fallthru
        _
      // Predicated region
      $region25: #{qaeasyconcept_forward.27} parent=11 // pred_check
        %p198 = pneg %p148
      $region26: #{qaeasyconcept_forward.27} parent=11 // pred_check_branch
        %200 = sbr.rel (%p198) target = $region28
      $region27: #{qaeasyconcept_forward.27} parent=11 // pred_region
        _
      $region28: #{qaeasyconcept_forward.27} parent=11 // pred_fallthru
        _
    $region12: #{qaeasyconcept_forward.27} parent=5 // pred_fallthru
      _
    %p201 = scmp.lt.s32.totalorder %s12, 2
    // Predicated region
    $region29: #{qaeasyconcept_forward.27} parent=5 // pred_check
      %p202 = pneg %p201
    $region30: #{qaeasyconcept_forward.27} parent=5 // pred_check_branch
      %204 = sbr.rel (%p202) target = $region32
    $region31: #{qaeasyconcept_forward.27} parent=5 // pred_region
      // Predicated region
      $region33: #{qaeasyconcept_forward.27} parent=31 // pred_check
        %p205 = pneg %p32
      $region34: #{qaeasyconcept_forward.27} parent=31 // pred_check_branch
        %207 = sbr.rel (%p205) target = $region36
      $region35: #{qaeasyconcept_forward.27} parent=31 // pred_region
        %p208 = scmp.lt.s32.totalorder %s12, 1
        %s209 = scalar_select %p208, %s12, 1
        %s210 = smul.addr %s209, 8
        %s211 = scalar_lea.vmem %s0, %s210
      $region36: #{qaeasyconcept_forward.27} parent=31 // pred_fallthru
        _
      // Predicated region
      $region37: #{qaeasyconcept_forward.27} parent=31 // pred_check
        %p212 = pneg %p58
      $region38: #{qaeasyconcept_forward.27} parent=31 // pred_check_branch
        %214 = sbr.rel (%p212) target = $region40
      $region39: #{qaeasyconcept_forward.27} parent=31 // pred_region
        %p215 = scmp.lt.s32.totalorder %s12, 1
        %s216 = scalar_select %p215, %s12, 1
        %s217 = scalar_lea.vmem %s1, %s216
      $region40: #{qaeasyconcept_forward.27} parent=31 // pred_fallthru
        _
    $region32: #{qaeasyconcept_forward.27} parent=5 // pred_fallthru
      _
    %p218 = scmp.le.s32.totalorder 1, %s12
    %p219 = scmp.lt.s32.totalorder %s12, 3
    %p220 = pnand %p218, %p219
    %p221 = pneg %p220
    // Predicated region
    $region41: #{qaeasyconcept_forward.27} parent=5 // pred_check
      _
    $region42: #{qaeasyconcept_forward.27} parent=5 // pred_check_branch
      %223 = sbr.rel (%p220) target = $region44
    $region43: #{qaeasyconcept_forward.27} parent=5 // pred_region
      %s224 = ssub.s32 %s12, 1
      %p225 = scmp.lt.s32.totalorder %s17, 1
      %s226 = scalar_select %p225, %s17, 1
      %s227 = smul.addr %s226, 8
      %s228 = scalar_lea.vmem %s0, %s227
      %p229 = pneg %p38
      %p230 = pneg %p35
      %p231 = scmp.lt.s32.totalorder %s17, 1
      %s232 = scalar_select %p231, %s17, 1
      %s233 = scalar_lea.vmem %s1, %s232
      %p234 = pneg %p64
      %p235 = pneg %p61
      %p236 = pneg %p85
      %p237 = pneg %p82
      %p238 = pneg %p106
      %p239 = pneg %p103
      %p240 = pneg %p127
      %p241 = pneg %p124
      %p242 = pneg %p148
      %p243 = pneg %p145
      %p244 = pneg %p174
      %p245 = pneg %p171
      %p246 = scmp.lt.s32.totalorder %s17, 1
      %s247 = scalar_select %p246, %s17, 1
      %s248 = smul.addr %s247, 8
      %s249 = scalar_lea.vmem %s6, %s248
      %p250 = scmp.lt.s32.totalorder %s17, 1
      %s251 = scalar_select %p250, %s17, 1
      %s252 = smul.addr %s251, 8
      %s253 = scalar_lea.vmem %s0, %s252
      %p254 = scmp.lt.s32.totalorder %s17, 1
      %s255 = scalar_select %p254, %s17, 1
      %s256 = scalar_lea.vmem %s1, %s255
      %p257 = scmp.lt.s32.totalorder %s17, 1
      %s258 = scalar_select %p257, %s17, 1
      %s259 = smul.addr %s258, 8
      %s260 = scalar_lea.vmem %s6, %s259
      %v262 = vld [vmem:[%s253] sm:$0xff]
      %v263 = vld [vmem:[%s256] sm:$0x1]
      %vm264 = vcmp.eq.f32.partialorder %v263, 0.0
      %v265 = vsel %vm264, -1e+09, 0.0
      %v266 = vpack.c.bf16 %v262, %v262
      %v267 = vld [vmem:[%s2] sm:$0xf]
      %v268 = vld [vmem:[%s2 + $0x4] sm:$0xf]
      %v269 = vld [vmem:[%s2 + $0x8] sm:$0xf]
      %v270 = vld [vmem:[%s2 + $0xc] sm:$0xf]
      %v271 = vld [vmem:[%s3] sm:$0x1]
      %v273 = vlaneseq
      %v274 = vshrl.u32 %v273, 7
      %v275 = vsub.s32 0, %v274
      %v276 = vrot.slane %v271, %v275
      %v282 = vunpack.c.l.b16 %v267
      %v283 = vunpack.c.l.b16 %v268
      %v284 = vunpack.c.l.b16 %v269
      %v285 = vunpack.c.l.b16 %v270
      %v286 = vpack.c.b16 %v283, %v282
      %v287 = vpack.c.b16 %v285, %v284
      %vm290 = vcmask 261120
      %v292 = vsel %vm290, %v266, 0
      %294 = vmatprep.subr.bf16.mxu0 0
      %295 = vmatpush1.bf16.msra.mxu0 %v286
      %296 = vmatprep.subr.bf16.mxu0 0
      %297 = vmatpush1.bf16.msra.mxu0 %v287
      %298 = vmatprep.subr.bf16.mxu0 0
      %299 = vmatpush1.bf16.msra.mxu0 0
      %300 = vmatprep.subr.bf16.mxu0 0
      %301 = vmatpush1.bf16.msra.mxu0 0
      %302 = vmatprep.subr.bf16.mxu0 0
      %303 = vmatpush1.bf16.msra.mxu0 0
      %304 = vmatprep.subr.bf16.mxu0 0
      %305 = vmatpush1.bf16.msra.mxu0 0
      %306 = vmatprep.subr.bf16.mxu0 0
      %307 = vmatpush1.bf16.msra.mxu0 0
      %308 = vmatprep.subr.bf16.mxu0 0
      %309 = vmatpush1.bf16.msra.mxu0 0
      %310 = vmatprep.subr.bf16.mxu0 0
      %311 = vmatpush1.bf16.msra.mxu0 0
      %312 = vmatprep.subr.bf16.mxu0 0
      %313 = vmatpush1.bf16.msra.mxu0 0
      %314 = vmatprep.subr.bf16.mxu0 0
      %315 = vmatpush1.bf16.msra.mxu0 0
      %316 = vmatprep.subr.bf16.mxu0 0
      %317 = vmatpush1.bf16.msra.mxu0 0
      %318 = vmatprep.subr.bf16.mxu0 0
      %319 = vmatpush1.bf16.msra.mxu0 0
      %320 = vmatprep.subr.bf16.mxu0 0
      %321 = vmatpush1.bf16.msra.mxu0 0
      %322 = vmatprep.subr.bf16.mxu0 0
      %323 = vmatpush1.bf16.msra.mxu0 0
      %324 = vmatprep.subr.bf16.mxu0 0
      %325 = vmatpush1.bf16.msra.mxu0 0
      %326 = vmatprep.mubr.bf16.mxu0 0
      %327 = vmatmul.mubr.bf16.gmra.mrb[0].mxu0 %v292
      %v328 = vpop.f32.mrb[0].mxu0
      %v329 = vadd.f32 %v276, %v328
      %v330 = vpop.f32.mrb[0].mxu0
      %v331 = vpop.f32.mrb[0].mxu0
      %v332 = vpop.f32.mrb[0].mxu0
      %333 = vdwg.mxu0
      %v334 = vld [vmem:[%s4] sm:$0xf]
      %v335 = vld [vmem:[%s4 + $0x4] sm:$0xf]
      %v336 = vld [vmem:[%s4 + $0x8] sm:$0xf]
      %v337 = vld [vmem:[%s4 + $0xc] sm:$0xf]
      %v338 = vmul.f32 %v329, 0.35355338
      %v339 = vpack.c.bf16 %v338, %v338
      %v340 = vpack.c.bf16 %v329, %v329
      %v342 = vlaneseq
      %v343 = vshrl.u32 %v342, 7
      %v344 = vsub.s32 0, %v343
      %v345 = vrot.slane %v265, %v344
      %348 = vrot.lane.b32.xlu0 %v340, 96
      %v349 = vpop.permute.xlu0 %348
      %vm350 = vcmask 64512
      %v352 = vsel %vm350, %v339, 0
      %v355 = vsel %vm350, %v349, 0
      %357 = vmatprep.subr.bf16.mxu0 0
      %358 = vmatpush1.bf16.xpose.msra.mxu0 %v355
      %359 = vmatprep.subr.bf16.mxu0 0
      %360 = vmatpush1.bf16.xpose.msra.mxu0 0
      %361 = vmatprep.subr.bf16.mxu0 0
      %362 = vmatpush1.bf16.xpose.msra.mxu0 0
      %363 = vmatprep.subr.bf16.mxu0 0
      %364 = vmatpush1.bf16.xpose.msra.mxu0 0
      %365 = vmatprep.subr.bf16.mxu0 0
      %366 = vmatpush1.bf16.xpose.msra.mxu0 0
      %367 = vmatprep.subr.bf16.mxu0 0
      %368 = vmatpush1.bf16.xpose.msra.mxu0 0
      %369 = vmatprep.subr.bf16.mxu0 0
      %370 = vmatpush1.bf16.xpose.msra.mxu0 0
      %371 = vmatprep.subr.bf16.mxu0 0
      %372 = vmatpush1.bf16.xpose.msra.mxu0 0
      %373 = vmatprep.subr.bf16.mxu0 0
      %374 = vmatpush1.bf16.xpose.msra.mxu0 0
      %375 = vmatprep.subr.bf16.mxu0 0
      %376 = vmatpush1.bf16.xpose.msra.mxu0 0
      %377 = vmatprep.subr.bf16.mxu0 0
      %378 = vmatpush1.bf16.xpose.msra.mxu0 0
      %379 = vmatprep.subr.bf16.mxu0 0
      %380 = vmatpush1.bf16.xpose.msra.mxu0 0
      %381 = vmatprep.subr.bf16.mxu0 0
      %382 = vmatpush1.bf16.xpose.msra.mxu0 0
      %383 = vmatprep.subr.bf16.mxu0 0
      %384 = vmatpush1.bf16.xpose.msra.mxu0 0
      %385 = vmatprep.subr.bf16.mxu0 0
      %386 = vmatpush1.bf16.xpose.msra.mxu0 0
      %387 = vmatprep.subr.bf16.mxu0 0
      %388 = vmatpush1.bf16.xpose.msra.mxu0 0
      %389 = vmatprep.mubr.bf16.mxu0 0
      %390 = vmatmul.mubr.bf16.gmra.mrb[0].mxu0 %v352
      %v391 = vpop.f32.mrb[0].mxu0
      %v392 = vadd.f32 %v345, %v391
      %v393 = vpop.f32.mrb[0].mxu0
      %v394 = vpop.f32.mrb[0].mxu0
      %v395 = vpop.f32.mrb[0].mxu0
      %396 = vdwg.mxu0
      %v397 = vsel %vm350, %v392, -inf
      %398 = vmax.xlane.f32.xlu0 %v397
      %v399 = vpop.xlane.xlu0 %398
      %v400 = vsub.f32 %v392, %v399
      %v401 = vmul.f32 %v400, 1.442695
      %v402 = vpow.pop %v401
      %v403 = vsel %vm350, %v402, 0.0
      %404 = vadd.xlane.f32.xlu0 %v403
      %v405 = vpop.xlane.xlu0 %404
      %v406 = vrcp.pop %v405
      %v407 = vmul.f32 %v402, %v406
      %v408 = vpack.c.bf16 %v407, %v407
      %409 = vrot.lane.b32.xlu0 %v340, 64
      %v410 = vpop.permute.xlu0 %409
      %v412 = vsel %vm350, %v408, 0
      %vm414 = vcmask 1043456
      %v416 = vsel %vm414, %v410, 0
      %418 = vmatprep.subr.bf16.mxu0 0
      %419 = vmatpush1.bf16.msra.mxu0 %v416
      %420 = vmatprep.subr.bf16.mxu0 0
      %421 = vmatpush1.bf16.msra.mxu0 0
      %422 = vmatprep.subr.bf16.mxu0 0
      %423 = vmatpush1.bf16.msra.mxu0 0
      %424 = vmatprep.subr.bf16.mxu0 0
      %425 = vmatpush1.bf16.msra.mxu0 0
      %426 = vmatprep.subr.bf16.mxu0 0
      %427 = vmatpush1.bf16.msra.mxu0 0
      %428 = vmatprep.subr.bf16.mxu0 0
      %429 = vmatpush1.bf16.msra.mxu0 0
      %430 = vmatprep.subr.bf16.mxu0 0
      %431 = vmatpush1.bf16.msra.mxu0 0
      %432 = vmatprep.subr.bf16.mxu0 0
      %433 = vmatpush1.bf16.msra.mxu0 0
      %434 = vmatprep.subr.bf16.mxu0 0
      %435 = vmatpush1.bf16.msra.mxu0 0
      %436 = vmatprep.subr.bf16.mxu0 0
      %437 = vmatpush1.bf16.msra.mxu0 0
      %438 = vmatprep.subr.bf16.mxu0 0
      %439 = vmatpush1.bf16.msra.mxu0 0
      %440 = vmatprep.subr.bf16.mxu0 0
      %441 = vmatpush1.bf16.msra.mxu0 0
      %442 = vmatprep.subr.bf16.mxu0 0
      %443 = vmatpush1.bf16.msra.mxu0 0
      %444 = vmatprep.subr.bf16.mxu0 0
      %445 = vmatpush1.bf16.msra.mxu0 0
      %446 = vmatprep.subr.bf16.mxu0 0
      %447 = vmatpush1.bf16.msra.mxu0 0
      %448 = vmatprep.subr.bf16.mxu0 0
      %449 = vmatpush1.bf16.msra.mxu0 0
      %450 = vmatprep.mubr.bf16.mxu0 0
      %451 = vmatmul.mubr.bf16.gmra.mrb[0].mxu0 %v412
      %v452 = vpop.f32.mrb[0].mxu0
      %v453 = vadd.f32 0.0, %v452
      %v454 = vpop.f32.mrb[0].mxu0
      %v455 = vpop.f32.mrb[0].mxu0
      %v456 = vpop.f32.mrb[0].mxu0
      %457 = vdwg.mxu0
      %v458 = vpack.c.bf16 %v453, %v453
      %460 = vrot.lane.b32.xlu0 %v339, 120
      %v461 = vpop.permute.xlu0 %460
      %462 = vrot.lane.b32.xlu0 %v340, 88
      %v463 = vpop.permute.xlu0 %462
      %v465 = vsel %vm350, %v461, 0
      %v468 = vsel %vm350, %v463, 0
      %470 = vmatprep.subr.bf16.mxu0 0
      %471 = vmatpush1.bf16.xpose.msra.mxu0 %v468
      %472 = vmatprep.subr.bf16.mxu0 0
      %473 = vmatpush1.bf16.xpose.msra.mxu0 0
      %474 = vmatprep.subr.bf16.mxu0 0
      %475 = vmatpush1.bf16.xpose.msra.mxu0 0
      %476 = vmatprep.subr.bf16.mxu0 0
      %477 = vmatpush1.bf16.xpose.msra.mxu0 0
      %478 = vmatprep.subr.bf16.mxu0 0
      %479 = vmatpush1.bf16.xpose.msra.mxu0 0
      %480 = vmatprep.subr.bf16.mxu0 0
      %481 = vmatpush1.bf16.xpose.msra.mxu0 0
      %482 = vmatprep.subr.bf16.mxu0 0
      %483 = vmatpush1.bf16.xpose.msra.mxu0 0
      %484 = vmatprep.subr.bf16.mxu0 0
      %485 = vmatpush1.bf16.xpose.msra.mxu0 0
      %486 = vmatprep.subr.bf16.mxu0 0
      %487 = vmatpush1.bf16.xpose.msra.mxu0 0
      %488 = vmatprep.subr.bf16.mxu0 0
      %489 = vmatpush1.bf16.xpose.msra.mxu0 0
      %490 = vmatprep.subr.bf16.mxu0 0
      %491 = vmatpush1.bf16.xpose.msra.mxu0 0
      %492 = vmatprep.subr.bf16.mxu0 0
      %493 = vmatpush1.bf16.xpose.msra.mxu0 0
      %494 = vmatprep.subr.bf16.mxu0 0
      %495 = vmatpush1.bf16.xpose.msra.mxu0 0
      %496 = vmatprep.subr.bf16.mxu0 0
      %497 = vmatpush1.bf16.xpose.msra.mxu0 0
      %498 = vmatprep.subr.bf16.mxu0 0
      %499 = vmatpush1.bf16.xpose.msra.mxu0 0
      %500 = vmatprep.subr.bf16.mxu0 0
      %501 = vmatpush1.bf16.xpose.msra.mxu0 0
      %502 = vmatprep.mubr.bf16.mxu0 0
      %503 = vmatmul.mubr.bf16.gmra.mrb[0].mxu0 %v465
      %v504 = vpop.f32.mrb[0].mxu0
      %v505 = vadd.f32 %v345, %v504
      %v506 = vpop.f32.mrb[0].mxu0
      %v507 = vpop.f32.mrb[0].mxu0
      %v508 = vpop.f32.mrb[0].mxu0
      %509 = vdwg.mxu0
      %v510 = vsel %vm350, %v505, -inf
      %511 = vmax.xlane.f32.xlu0 %v510
      %v512 = vpop.xlane.xlu0 %511
      %v513 = vsub.f32 %v505, %v512
      %v514 = vmul.f32 %v513, 1.442695
      %v515 = vpow.pop %v514
      %v516 = vsel %vm350, %v515, 0.0
      %517 = vadd.xlane.f32.xlu0 %v516
      %v518 = vpop.xlane.xlu0 %517
      %v519 = vrcp.pop %v518
      %v520 = vmul.f32 %v515, %v519
      %v521 = vpack.c.bf16 %v520, %v520
      %522 = vrot.lane.b32.xlu0 %v340, 56
      %v523 = vpop.permute.xlu0 %522
      %v525 = vsel %vm350, %v521, 0
      %v528 = vsel %vm414, %v523, 0
      %530 = vmatprep.subr.bf16.mxu0 0
      %531 = vmatpush1.bf16.msra.mxu0 %v528
      %532 = vmatprep.subr.bf16.mxu0 0
      %533 = vmatpush1.bf16.msra.mxu0 0
      %534 = vmatprep.subr.bf16.mxu0 0
      %535 = vmatpush1.bf16.msra.mxu0 0
      %536 = vmatprep.subr.bf16.mxu0 0
      %537 = vmatpush1.bf16.msra.mxu0 0
      %538 = vmatprep.subr.bf16.mxu0 0
      %539 = vmatpush1.bf16.msra.mxu0 0
      %540 = vmatprep.subr.bf16.mxu0 0
      %541 = vmatpush1.bf16.msra.mxu0 0
      %542 = vmatprep.subr.bf16.mxu0 0
      %543 = vmatpush1.bf16.msra.mxu0 0
      %544 = vmatprep.subr.bf16.mxu0 0
      %545 = vmatpush1.bf16.msra.mxu0 0
      %546 = vmatprep.subr.bf16.mxu0 0
      %547 = vmatpush1.bf16.msra.mxu0 0
      %548 = vmatprep.subr.bf16.mxu0 0
      %549 = vmatpush1.bf16.msra.mxu0 0
      %550 = vmatprep.subr.bf16.mxu0 0
      %551 = vmatpush1.bf16.msra.mxu0 0
      %552 = vmatprep.subr.bf16.mxu0 0
      %553 = vmatpush1.bf16.msra.mxu0 0
      %554 = vmatprep.subr.bf16.mxu0 0
      %555 = vmatpush1.bf16.msra.mxu0 0
      %556 = vmatprep.subr.bf16.mxu0 0
      %557 = vmatpush1.bf16.msra.mxu0 0
      %558 = vmatprep.subr.bf16.mxu0 0
      %559 = vmatpush1.bf16.msra.mxu0 0
      %560 = vmatprep.subr.bf16.mxu0 0
      %561 = vmatpush1.bf16.msra.mxu0 0
      %562 = vmatprep.mubr.bf16.mxu0 0
      %563 = vmatmul.mubr.bf16.gmra.mrb[0].mxu0 %v525
      %v564 = vpop.f32.mrb[0].mxu0
      %v565 = vadd.f32 0.0, %v564
      %v566 = vpop.f32.mrb[0].mxu0
      %v567 = vpop.f32.mrb[0].mxu0
      %v568 = vpop.f32.mrb[0].mxu0
      %569 = vdwg.mxu0
      %v570 = vpack.c.bf16 %v565, %v565
      %v572 = vsel %vm350, %v570, 0
      %v575 = vsel %vm414, %v335, 0
      %577 = vmatprep.subr.bf16.mxu0 0
      %578 = vmatpush1.bf16.msra.mxu0 %v575
      %579 = vmatprep.subr.bf16.mxu0 0
      %580 = vmatpush1.bf16.msra.mxu0 0
      %581 = vmatprep.subr.bf16.mxu0 0
      %582 = vmatpush1.bf16.msra.mxu0 0
      %583 = vmatprep.subr.bf16.mxu0 0
      %584 = vmatpush1.bf16.msra.mxu0 0
      %585 = vmatprep.subr.bf16.mxu0 0
      %586 = vmatpush1.bf16.msra.mxu0 0
      %587 = vmatprep.subr.bf16.mxu0 0
      %588 = vmatpush1.bf16.msra.mxu0 0
      %589 = vmatprep.subr.bf16.mxu0 0
      %590 = vmatpush1.bf16.msra.mxu0 0
      %591 = vmatprep.subr.bf16.mxu0 0
      %592 = vmatpush1.bf16.msra.mxu0 0
      %593 = vmatprep.subr.bf16.mxu0 0
      %594 = vmatpush1.bf16.msra.mxu0 0
      %595 = vmatprep.subr.bf16.mxu0 0
      %596 = vmatpush1.bf16.msra.mxu0 0
      %597 = vmatprep.subr.bf16.mxu0 0
      %598 = vmatpush1.bf16.msra.mxu0 0
      %599 = vmatprep.subr.bf16.mxu0 0
      %600 = vmatpush1.bf16.msra.mxu0 0
      %601 = vmatprep.subr.bf16.mxu0 0
      %602 = vmatpush1.bf16.msra.mxu0 0
      %603 = vmatprep.subr.bf16.mxu0 0
      %604 = vmatpush1.bf16.msra.mxu0 0
      %605 = vmatprep.subr.bf16.mxu0 0
      %606 = vmatpush1.bf16.msra.mxu0 0
      %607 = vmatprep.subr.bf16.mxu0 0
      %608 = vmatpush1.bf16.msra.mxu0 0
      %609 = vmatprep.mubr.bf16.mxu0 0
      %610 = vmatmul.mubr.bf16.gmra.mrb[0].mxu0 %v572
      %v611 = vpop.f32.mrb[0].mxu0
      %v612 = vadd.f32 0.0, %v611
      %v613 = vpop.f32.mrb[0].mxu0
      %v614 = vpop.f32.mrb[0].mxu0
      %v615 = vpop.f32.mrb[0].mxu0
      %616 = vdwg.mxu0
      %v618 = vsel %vm350, %v458, 0
      %v621 = vsel %vm414, %v334, 0
      %623 = vmatprep.subr.bf16.mxu0 0
      %624 = vmatpush1.bf16.msra.mxu0 %v621
      %625 = vmatprep.subr.bf16.mxu0 0
      %626 = vmatpush1.bf16.msra.mxu0 0
      %627 = vmatprep.subr.bf16.mxu0 0
      %628 = vmatpush1.bf16.msra.mxu0 0
      %629 = vmatprep.subr.bf16.mxu0 0
      %630 = vmatpush1.bf16.msra.mxu0 0
      %631 = vmatprep.subr.bf16.mxu0 0
      %632 = vmatpush1.bf16.msra.mxu0 0
      %633 = vmatprep.subr.bf16.mxu0 0
      %634 = vmatpush1.bf16.msra.mxu0 0
      %635 = vmatprep.subr.bf16.mxu0 0
      %636 = vmatpush1.bf16.msra.mxu0 0
      %637 = vmatprep.subr.bf16.mxu0 0
      %638 = vmatpush1.bf16.msra.mxu0 0
      %639 = vmatprep.subr.bf16.mxu0 0
      %640 = vmatpush1.bf16.msra.mxu0 0
      %641 = vmatprep.subr.bf16.mxu0 0
      %642 = vmatpush1.bf16.msra.mxu0 0
      %643 = vmatprep.subr.bf16.mxu0 0
      %644 = vmatpush1.bf16.msra.mxu0 0
      %645 = vmatprep.subr.bf16.mxu0 0
      %646 = vmatpush1.bf16.msra.mxu0 0
      %647 = vmatprep.subr.bf16.mxu0 0
      %648 = vmatpush1.bf16.msra.mxu0 0
      %649 = vmatprep.subr.bf16.mxu0 0
      %650 = vmatpush1.bf16.msra.mxu0 0
      %651 = vmatprep.subr.bf16.mxu0 0
      %652 = vmatpush1.bf16.msra.mxu0 0
      %653 = vmatprep.subr.bf16.mxu0 0
      %654 = vmatpush1.bf16.msra.mxu0 0
      %655 = vmatprep.mubr.bf16.mxu0 0
      %656 = vmatmul.mubr.bf16.gmra.mrb[0].mxu0 %v618
      %v657 = vpop.f32.mrb[0].mxu0
      %v658 = vadd.f32 %v612, %v657
      %v659 = vpop.f32.mrb[0].mxu0
      %v660 = vpop.f32.mrb[0].mxu0
      %v661 = vpop.f32.mrb[0].mxu0
      %662 = vdwg.mxu0
      %663 = vrot.lane.b32.xlu0 %v339, 112
      %v664 = vpop.permute.xlu0 %663
      %665 = vrot.lane.b32.xlu0 %v340, 80
      %v666 = vpop.permute.xlu0 %665
      %v668 = vsel %vm350, %v664, 0
      %v671 = vsel %vm350, %v666, 0
      %673 = vmatprep.subr.bf16.mxu0 0
      %674 = vmatpush1.bf16.xpose.msra.mxu0 %v671
      %675 = vmatprep.subr.bf16.mxu0 0
      %676 = vmatpush1.bf16.xpose.msra.mxu0 0
      %677 = vmatprep.subr.bf16.mxu0 0
      %678 = vmatpush1.bf16.xpose.msra.mxu0 0
      %679 = vmatprep.subr.bf16.mxu0 0
      %680 = vmatpush1.bf16.xpose.msra.mxu0 0
      %681 = vmatprep.subr.bf16.mxu0 0
      %682 = vmatpush1.bf16.xpose.msra.mxu0 0
      %683 = vmatprep.subr.bf16.mxu0 0
      %684 = vmatpush1.bf16.xpose.msra.mxu0 0
      %685 = vmatprep.subr.bf16.mxu0 0
      %686 = vmatpush1.bf16.xpose.msra.mxu0 0
      %687 = vmatprep.subr.bf16.mxu0 0
      %688 = vmatpush1.bf16.xpose.msra.mxu0 0
      %689 = vmatprep.subr.bf16.mxu0 0
      %690 = vmatpush1.bf16.xpose.msra.mxu0 0
      %691 = vmatprep.subr.bf16.mxu0 0
      %692 = vmatpush1.bf16.xpose.msra.mxu0 0
      %693 = vmatprep.subr.bf16.mxu0 0
      %694 = vmatpush1.bf16.xpose.msra.mxu0 0
      %695 = vmatprep.subr.bf16.mxu0 0
      %696 = vmatpush1.bf16.xpose.msra.mxu0 0
      %697 = vmatprep.subr.bf16.mxu0 0
      %698 = vmatpush1.bf16.xpose.msra.mxu0 0
      %699 = vmatprep.subr.bf16.mxu0 0
      %700 = vmatpush1.bf16.xpose.msra.mxu0 0
      %701 = vmatprep.subr.bf16.mxu0 0
      %702 = vmatpush1.bf16.xpose.msra.mxu0 0
      %703 = vmatprep.subr.bf16.mxu0 0
      %704 = vmatpush1.bf16.xpose.msra.mxu0 0
      %705 = vmatprep.mubr.bf16.mxu0 0
      %706 = vmatmul.mubr.bf16.gmra.mrb[0].mxu0 %v668
      %v707 = vpop.f32.mrb[0].mxu0
      %v708 = vadd.f32 %v345, %v707
      %v709 = vpop.f32.mrb[0].mxu0
      %v710 = vpop.f32.mrb[0].mxu0
      %v711 = vpop.f32.mrb[0].mxu0
      %712 = vdwg.mxu0
      %v713 = vsel %vm350, %v708, -inf
      %714 = vmax.xlane.f32.xlu0 %v713
      %v715 = vpop.xlane.xlu0 %714
      %v716 = vsub.f32 %v708, %v715
      %v717 = vmul.f32 %v716, 1.442695
      %v718 = vpow.pop %v717
      %v719 = vsel %vm350, %v718, 0.0
      %720 = vadd.xlane.f32.xlu0 %v719
      %v721 = vpop.xlane.xlu0 %720
      %v722 = vrcp.pop %v721
      %v723 = vmul.f32 %v718, %v722
      %v724 = vpack.c.bf16 %v723, %v723
      %725 = vrot.lane.b32.xlu0 %v340, 48
      %v726 = vpop.permute.xlu0 %725
      %v728 = vsel %vm350, %v724, 0
      %v731 = vsel %vm414, %v726, 0
      %733 = vmatprep.subr.bf16.mxu0 0
      %734 = vmatpush1.bf16.msra.mxu0 %v731
      %735 = vmatprep.subr.bf16.mxu0 0
      %736 = vmatpush1.bf16.msra.mxu0 0
      %737 = vmatprep.subr.bf16.mxu0 0
      %738 = vmatpush1.bf16.msra.mxu0 0
      %739 = vmatprep.subr.bf16.mxu0 0
      %740 = vmatpush1.bf16.msra.mxu0 0
      %741 = vmatprep.subr.bf16.mxu0 0
      %742 = vmatpush1.bf16.msra.mxu0 0
      %743 = vmatprep.subr.bf16.mxu0 0
      %744 = vmatpush1.bf16.msra.mxu0 0
      %745 = vmatprep.subr.bf16.mxu0 0
      %746 = vmatpush1.bf16.msra.mxu0 0
      %747 = vmatprep.subr.bf16.mxu0 0
      %748 = vmatpush1.bf16.msra.mxu0 0
      %749 = vmatprep.subr.bf16.mxu0 0
      %750 = vmatpush1.bf16.msra.mxu0 0
      %751 = vmatprep.subr.bf16.mxu0 0
      %752 = vmatpush1.bf16.msra.mxu0 0
      %753 = vmatprep.subr.bf16.mxu0 0
      %754 = vmatpush1.bf16.msra.mxu0 0
      %755 = vmatprep.subr.bf16.mxu0 0
      %756 = vmatpush1.bf16.msra.mxu0 0
      %757 = vmatprep.subr.bf16.mxu0 0
      %758 = vmatpush1.bf16.msra.mxu0 0
      %759 = vmatprep.subr.bf16.mxu0 0
      %760 = vmatpush1.bf16.msra.mxu0 0
      %761 = vmatprep.subr.bf16.mxu0 0
      %762 = vmatpush1.bf16.msra.mxu0 0
      %763 = vmatprep.subr.bf16.mxu0 0
      %764 = vmatpush1.bf16.msra.mxu0 0
      %765 = vmatprep.mubr.bf16.mxu0 0
      %766 = vmatmul.mubr.bf16.gmra.mrb[0].mxu0 %v728
      %v767 = vpop.f32.mrb[0].mxu0
      %v768 = vadd.f32 0.0, %v767
      %v769 = vpop.f32.mrb[0].mxu0
      %v770 = vpop.f32.mrb[0].mxu0
      %v771 = vpop.f32.mrb[0].mxu0
      %772 = vdwg.mxu0
      %v773 = vpack.c.bf16 %v768, %v768
      %v775 = vsel %vm350, %v773, 0
      %v778 = vsel %vm414, %v336, 0
      %780 = vmatprep.subr.bf16.mxu0 0
      %781 = vmatpush1.bf16.msra.mxu0 %v778
      %782 = vmatprep.subr.bf16.mxu0 0
      %783 = vmatpush1.bf16.msra.mxu0 0
      %784 = vmatprep.subr.bf16.mxu0 0
      %785 = vmatpush1.bf16.msra.mxu0 0
      %786 = vmatprep.subr.bf16.mxu0 0
      %787 = vmatpush1.bf16.msra.mxu0 0
      %788 = vmatprep.subr.bf16.mxu0 0
      %789 = vmatpush1.bf16.msra.mxu0 0
      %790 = vmatprep.subr.bf16.mxu0 0
      %791 = vmatpush1.bf16.msra.mxu0 0
      %792 = vmatprep.subr.bf16.mxu0 0
      %793 = vmatpush1.bf16.msra.mxu0 0
      %794 = vmatprep.subr.bf16.mxu0 0
      %795 = vmatpush1.bf16.msra.mxu0 0
      %796 = vmatprep.subr.bf16.mxu0 0
      %797 = vmatpush1.bf16.msra.mxu0 0
      %798 = vmatprep.subr.bf16.mxu0 0
      %799 = vmatpush1.bf16.msra.mxu0 0
      %800 = vmatprep.subr.bf16.mxu0 0
      %801 = vmatpush1.bf16.msra.mxu0 0
      %802 = vmatprep.subr.bf16.mxu0 0
      %803 = vmatpush1.bf16.msra.mxu0 0
      %804 = vmatprep.subr.bf16.mxu0 0
      %805 = vmatpush1.bf16.msra.mxu0 0
      %806 = vmatprep.subr.bf16.mxu0 0
      %807 = vmatpush1.bf16.msra.mxu0 0
      %808 = vmatprep.subr.bf16.mxu0 0
      %809 = vmatpush1.bf16.msra.mxu0 0
      %810 = vmatprep.subr.bf16.mxu0 0
      %811 = vmatpush1.bf16.msra.mxu0 0
      %812 = vmatprep.mubr.bf16.mxu0 0
      %813 = vmatmul.mubr.bf16.gmra.mrb[0].mxu0 %v775
      %v814 = vpop.f32.mrb[0].mxu0
      %v815 = vadd.f32 0.0, %v814
      %v816 = vpop.f32.mrb[0].mxu0
      %v817 = vpop.f32.mrb[0].mxu0
      %v818 = vpop.f32.mrb[0].mxu0
      %819 = vdwg.mxu0
      %v820 = vadd.f32 %v658, %v815
      %821 = vrot.lane.b32.xlu0 %v339, 104
      %v822 = vpop.permute.xlu0 %821
      %823 = vrot.lane.b32.xlu0 %v340, 72
      %v824 = vpop.permute.xlu0 %823
      %v826 = vsel %vm350, %v822, 0
      %v829 = vsel %vm350, %v824, 0
      %831 = vmatprep.subr.bf16.mxu0 0
      %832 = vmatpush1.bf16.xpose.msra.mxu0 %v829
      %833 = vmatprep.subr.bf16.mxu0 0
      %834 = vmatpush1.bf16.xpose.msra.mxu0 0
      %835 = vmatprep.subr.bf16.mxu0 0
      %836 = vmatpush1.bf16.xpose.msra.mxu0 0
      %837 = vmatprep.subr.bf16.mxu0 0
      %838 = vmatpush1.bf16.xpose.msra.mxu0 0
      %839 = vmatprep.subr.bf16.mxu0 0
      %840 = vmatpush1.bf16.xpose.msra.mxu0 0
      %841 = vmatprep.subr.bf16.mxu0 0
      %842 = vmatpush1.bf16.xpose.msra.mxu0 0
      %843 = vmatprep.subr.bf16.mxu0 0
      %844 = vmatpush1.bf16.xpose.msra.mxu0 0
      %845 = vmatprep.subr.bf16.mxu0 0
      %846 = vmatpush1.bf16.xpose.msra.mxu0 0
      %847 = vmatprep.subr.bf16.mxu0 0
      %848 = vmatpush1.bf16.xpose.msra.mxu0 0
      %849 = vmatprep.subr.bf16.mxu0 0
      %850 = vmatpush1.bf16.xpose.msra.mxu0 0
      %851 = vmatprep.subr.bf16.mxu0 0
      %852 = vmatpush1.bf16.xpose.msra.mxu0 0
      %853 = vmatprep.subr.bf16.mxu0 0
      %854 = vmatpush1.bf16.xpose.msra.mxu0 0
      %855 = vmatprep.subr.bf16.mxu0 0
      %856 = vmatpush1.bf16.xpose.msra.mxu0 0
      %857 = vmatprep.subr.bf16.mxu0 0
      %858 = vmatpush1.bf16.xpose.msra.mxu0 0
      %859 = vmatprep.subr.bf16.mxu0 0
      %860 = vmatpush1.bf16.xpose.msra.mxu0 0
      %861 = vmatprep.subr.bf16.mxu0 0
      %862 = vmatpush1.bf16.xpose.msra.mxu0 0
      %863 = vmatprep.mubr.bf16.mxu0 0
      %864 = vmatmul.mubr.bf16.gmra.mrb[0].mxu0 %v826
      %v865 = vpop.f32.mrb[0].mxu0
      %v866 = vadd.f32 %v345, %v865
      %v867 = vpop.f32.mrb[0].mxu0
      %v868 = vpop.f32.mrb[0].mxu0
      %v869 = vpop.f32.mrb[0].mxu0
      %870 = vdwg.mxu0
      %v871 = vsel %vm350, %v866, -inf
      %872 = vmax.xlane.f32.xlu0 %v871
      %v873 = vpop.xlane.xlu0 %872
      %v874 = vsub.f32 %v866, %v873
      %v875 = vmul.f32 %v874, 1.442695
      %v876 = vpow.pop %v875
      %v877 = vsel %vm350, %v876, 0.0
      %878 = vadd.xlane.f32.xlu0 %v877
      %v879 = vpop.xlane.xlu0 %878
      %v880 = vrcp.pop %v879
      %v881 = vmul.f32 %v876, %v880
      %v882 = vpack.c.bf16 %v881, %v881
      %883 = vrot.lane.b32.xlu0 %v340, 40
      %v884 = vpop.permute.xlu0 %883
      %v886 = vsel %vm350, %v882, 0
      %v889 = vsel %vm414, %v884, 0
      %891 = vmatprep.subr.bf16.mxu0 0
      %892 = vmatpush1.bf16.msra.mxu0 %v889
      %893 = vmatprep.subr.bf16.mxu0 0
      %894 = vmatpush1.bf16.msra.mxu0 0
      %895 = vmatprep.subr.bf16.mxu0 0
      %896 = vmatpush1.bf16.msra.mxu0 0
      %897 = vmatprep.subr.bf16.mxu0 0
      %898 = vmatpush1.bf16.msra.mxu0 0
      %899 = vmatprep.subr.bf16.mxu0 0
      %900 = vmatpush1.bf16.msra.mxu0 0
      %901 = vmatprep.subr.bf16.mxu0 0
      %902 = vmatpush1.bf16.msra.mxu0 0
      %903 = vmatprep.subr.bf16.mxu0 0
      %904 = vmatpush1.bf16.msra.mxu0 0
      %905 = vmatprep.subr.bf16.mxu0 0
      %906 = vmatpush1.bf16.msra.mxu0 0
      %907 = vmatprep.subr.bf16.mxu0 0
      %908 = vmatpush1.bf16.msra.mxu0 0
      %909 = vmatprep.subr.bf16.mxu0 0
      %910 = vmatpush1.bf16.msra.mxu0 0
      %911 = vmatprep.subr.bf16.mxu0 0
      %912 = vmatpush1.bf16.msra.mxu0 0
      %913 = vmatprep.subr.bf16.mxu0 0
      %914 = vmatpush1.bf16.msra.mxu0 0
      %915 = vmatprep.subr.bf16.mxu0 0
      %916 = vmatpush1.bf16.msra.mxu0 0
      %917 = vmatprep.subr.bf16.mxu0 0
      %918 = vmatpush1.bf16.msra.mxu0 0
      %919 = vmatprep.subr.bf16.mxu0 0
      %920 = vmatpush1.bf16.msra.mxu0 0
      %921 = vmatprep.subr.bf16.mxu0 0
      %922 = vmatpush1.bf16.msra.mxu0 0
      %923 = vmatprep.mubr.bf16.mxu0 0
      %924 = vmatmul.mubr.bf16.gmra.mrb[0].mxu0 %v886
      %v925 = vpop.f32.mrb[0].mxu0
      %v926 = vadd.f32 0.0, %v925
      %v927 = vpop.f32.mrb[0].mxu0
      %v928 = vpop.f32.mrb[0].mxu0
      %v929 = vpop.f32.mrb[0].mxu0
      %930 = vdwg.mxu0
      %v931 = vpack.c.bf16 %v926, %v926
      %v933 = vsel %vm350, %v931, 0
      %v936 = vsel %vm414, %v337, 0
      %938 = vmatprep.subr.bf16.mxu0 0
      %939 = vmatpush1.bf16.msra.mxu0 %v936
      %940 = vmatprep.subr.bf16.mxu0 0
      %941 = vmatpush1.bf16.msra.mxu0 0
      %942 = vmatprep.subr.bf16.mxu0 0
      %943 = vmatpush1.bf16.msra.mxu0 0
      %944 = vmatprep.subr.bf16.mxu0 0
      %945 = vmatpush1.bf16.msra.mxu0 0
      %946 = vmatprep.subr.bf16.mxu0 0
      %947 = vmatpush1.bf16.msra.mxu0 0
      %948 = vmatprep.subr.bf16.mxu0 0
      %949 = vmatpush1.bf16.msra.mxu0 0
      %950 = vmatprep.subr.bf16.mxu0 0
      %951 = vmatpush1.bf16.msra.mxu0 0
      %952 = vmatprep.subr.bf16.mxu0 0
      %953 = vmatpush1.bf16.msra.mxu0 0
      %954 = vmatprep.subr.bf16.mxu0 0
      %955 = vmatpush1.bf16.msra.mxu0 0
      %956 = vmatprep.subr.bf16.mxu0 0
      %957 = vmatpush1.bf16.msra.mxu0 0
      %958 = vmatprep.subr.bf16.mxu0 0
      %959 = vmatpush1.bf16.msra.mxu0 0
      %960 = vmatprep.subr.bf16.mxu0 0
      %961 = vmatpush1.bf16.msra.mxu0 0
      %962 = vmatprep.subr.bf16.mxu0 0
      %963 = vmatpush1.bf16.msra.mxu0 0
      %964 = vmatprep.subr.bf16.mxu0 0
      %965 = vmatpush1.bf16.msra.mxu0 0
      %966 = vmatprep.subr.bf16.mxu0 0
      %967 = vmatpush1.bf16.msra.mxu0 0
      %968 = vmatprep.subr.bf16.mxu0 0
      %969 = vmatpush1.bf16.msra.mxu0 0
      %970 = vmatprep.mubr.bf16.mxu0 0
      %971 = vmatmul.mubr.bf16.gmra.mrb[0].mxu0 %v933
      %v972 = vpop.f32.mrb[0].mxu0
      %v973 = vadd.f32 0.0, %v972
      %v974 = vpop.f32.mrb[0].mxu0
      %v975 = vpop.f32.mrb[0].mxu0
      %v976 = vpop.f32.mrb[0].mxu0
      %977 = vdwg.mxu0
      %v978 = vadd.f32 %v820, %v973
      %v979 = vadd.f32 %v262, %v978
      %v980 = vld [vmem:[%s5] sm:$0x1]
      %v982 = vlaneseq
      %v983 = vshrl.u32 %v982, 7
      %v984 = vsub.s32 0, %v983
      %v985 = vrot.slane %v980, %v984
      %v987 = vadd.f32 %v979, %v985
      %988 = vst.msk [vmem:[%s260] sm:$0xff] %vm290, %v987
      %p989 = scmp.lt.s32.totalorder %s17, 1
      %s990 = scalar_select %p989, %s17, 1
      %s991 = smul.addr %s990, 8
      %s992 = scalar_lea.vmem %s6, %s991
      // Predicated region
      $region45: #{qaeasyconcept_forward.27} parent=43 // pred_check
        %p993 = pneg %p171
      $region46: #{qaeasyconcept_forward.27} parent=43 // pred_check_branch
        %995 = sbr.rel (%p993) target = $region48
      $region47: #{qaeasyconcept_forward.27} parent=43 // pred_region
        _
      $region48: #{qaeasyconcept_forward.27} parent=43 // pred_fallthru
        _
    $region44: #{qaeasyconcept_forward.27} parent=5 // pred_fallthru
      _
    %p996 = scmp.le.s32.totalorder 2, %s12
    // Predicated region
    $region49: #{qaeasyconcept_forward.27} parent=5 // pred_check
      %p997 = pneg %p996
    $region50: #{qaeasyconcept_forward.27} parent=5 // pred_check_branch
      %999 = sbr.rel (%p997) target = $region52
    $region51: #{qaeasyconcept_forward.27} parent=5 // pred_region
      %s1000 = ssub.s32 %s12, 2
      // Predicated region
      $region53: #{qaeasyconcept_forward.27} parent=51 // pred_check
        %p1001 = pneg %p177
      $region54: #{qaeasyconcept_forward.27} parent=51 // pred_check_branch
        %1003 = sbr.rel (%p1001) target = $region56
      $region55: #{qaeasyconcept_forward.27} parent=51 // pred_region
        %p1004 = scmp.lt.s32.totalorder %s18, 1
        %s1005 = scalar_select %p1004, %s18, 1
        %s1006 = smul.addr %s1005, 8
        %s1007 = scalar_lea.vmem %s6, %s1006
      $region56: #{qaeasyconcept_forward.27} parent=51 // pred_fallthru
        _
    $region52: #{qaeasyconcept_forward.27} parent=5 // pred_fallthru
      _
  $region6: #{qaeasyconcept_forward.27} parent=0 // loop_footer
    %s16 = sadd.s32 1, %s12
  $region7: #{qaeasyconcept_forward.27} parent=0 // loop_footer_branch
    %11 = sbr.rel target = $region3
  $region8: #{qaeasyconcept_forward.27} parent=0 // loop_exit
    _

// kernel: qaeasyconcept_forward.38
$region0: #{qaeasyconcept_forward.38}
  #allocation0 [shape = 'u32[]', space=smem, size = 0x4, offset = 0x4, fixed_abs, tag = 'smem constant byte address 0x4 - core index']
  #allocation1 [shape = 'u32[144,128]{1,0:T(1,128)}', space=vmem, size = 0x12000, scoped, tag = 'internal scratch']
  %s0 = inlined_call_operand.vmem [shape: f32[16,32], index: 0, kind: input, shape index: {}]
  %s1 = inlined_call_operand.vmem [shape: f32[16,32], index: 1, kind: input, shape index: {}]
  %s2 = inlined_call_operand.vmem [shape: bf16[128,32], index: 2, kind: input, shape index: {}]
  %s3 = inlined_call_operand.vmem [shape: f32[16,32], index: 3, kind: output, shape index: {}]
  %s4 = sld [smem:[#allocation0]]
  $region45: #{qaeasyconcept_forward.38} parent=0
    _
  %s6 = ssub.s32 1, %s4
  %s7 = scalar_select 0, %s6, %s4
  loop: start=0, step=1, limit=4
  $region2: #{qaeasyconcept_forward.38} parent=0 // loop_pre_header
    _
  $region3: #{qaeasyconcept_forward.38} parent=0 // loop_header
    %s9 = sphi 0, %s13
    %p10 = scmp.ge.s32.totalorder %s9, 4
    %s19 = sphi 0, %s21
    %s22 = sphi 0, %s19
    %s23 = sphi 0, %s22
    %s39 = sphi 0, %s23
    %s45 = sphi 0, %s47
    %s48 = sphi 0, %s45
    %s49 = sphi 0, %s48
    %s65 = sphi 0, %s49
    %s69 = sphi 0, %s69
    %s71 = sphi 0, %s69
    %s72 = sphi 0, %s71
    %s86 = sphi 0, %s72
    %s92 = sphi 0, %s94
    %s95 = sphi 0, %s92
    %s96 = sphi 0, %s95
    %s112 = sphi 0, %s96
  $region4: #{qaeasyconcept_forward.38} parent=0 // loop_header_branch
    %12 = sbr.rel (%p10) target = $region8
  $region5: #{qaeasyconcept_forward.38} parent=0 // loop_body
    %s14 = ssub.s32 %s9, 1
    %s15 = ssub.s32 %s9, 2
    %s16 = sadd.s32 %s9, 1
    %s17 = ssub.s32 %s9, %s16
    %p18 = scmp.eq.s32.totalorder %s17, 0
    %s20 = sadd.s32 %s19, 1
    %s21 = scalar_select %p18, %s19, %s20
    %p24 = pneg %p18
    %p25 = scmp.eq.s32.totalorder %s9, 1
    %p26 = por %p24, %p25
    %p27 = scmp.ne.s32.totalorder %s19, %s22
    %p28 = scmp.eq.s32.totalorder %s9, 0
    %p29 = por %p27, %p28
    %p30 = scmp.ne.s32.totalorder %s19, %s22
    %p31 = scmp.eq.s32.totalorder %s14, 1
    %p32 = por %p30, %p31
    %p33 = scmp.ne.s32.totalorder %s22, %s23
    %p34 = scmp.eq.s32.totalorder %s14, 0
    %p35 = por %p33, %p34
    %p36 = scmp.ne.s32.totalorder %s22, %s23
    %p37 = scmp.eq.s32.totalorder %s15, 1
    %p38 = por %p36, %p37
    %p40 = scmp.ne.s32.totalorder %s23, %s39
    %p41 = scmp.eq.s32.totalorder %s15, 0
    %p42 = por %p40, %p41
    %s43 = ssub.s32 %s9, %s16
    %p44 = scmp.eq.s32.totalorder %s43, 0
    %s46 = sadd.s32 %s45, 1
    %s47 = scalar_select %p44, %s45, %s46
    %p50 = pneg %p44
    %p51 = scmp.eq.s32.totalorder %s9, 1
    %p52 = por %p50, %p51
    %p53 = scmp.ne.s32.totalorder %s45, %s48
    %p54 = scmp.eq.s32.totalorder %s9, 0
    %p55 = por %p53, %p54
    %p56 = scmp.ne.s32.totalorder %s45, %s48
    %p57 = scmp.eq.s32.totalorder %s14, 1
    %p58 = por %p56, %p57
    %p59 = scmp.ne.s32.totalorder %s48, %s49
    %p60 = scmp.eq.s32.totalorder %s14, 0
    %p61 = por %p59, %p60
    %p62 = scmp.ne.s32.totalorder %s48, %s49
    %p63 = scmp.eq.s32.totalorder %s15, 1
    %p64 = por %p62, %p63
    %p66 = scmp.ne.s32.totalorder %s49, %s65
    %p67 = scmp.eq.s32.totalorder %s15, 0
    %p68 = por %p66, %p67
    %s70 = sadd.s32 %s69, 1
    %p73 = scmp.eq.s32.totalorder %s9, 1
    %p74 = scmp.ne.s32.totalorder %s69, %s71
    %p75 = scmp.eq.s32.totalorder %s9, 0
    %p76 = por %p74, %p75
    %p77 = scmp.ne.s32.totalorder %s69, %s71
    %p78 = scmp.eq.s32.totalorder %s14, 1
    %p79 = por %p77, %p78
    %p80 = scmp.ne.s32.totalorder %s71, %s72
    %p81 = scmp.eq.s32.totalorder %s14, 0
    %p82 = por %p80, %p81
    %p83 = scmp.ne.s32.totalorder %s71, %s72
    %p84 = scmp.eq.s32.totalorder %s15, 1
    %p85 = por %p83, %p84
    %p87 = scmp.ne.s32.totalorder %s72, %s86
    %p88 = scmp.eq.s32.totalorder %s15, 0
    %p89 = por %p87, %p88
    %s90 = ssub.s32 %s9, %s16
    %p91 = scmp.eq.s32.totalorder %s90, 0
    %s93 = sadd.s32 %s92, 1
    %s94 = scalar_select %p91, %s92, %s93
    %p97 = pneg %p91
    %p98 = scmp.eq.s32.totalorder %s9, 1
    %p99 = por %p97, %p98
    %p100 = scmp.ne.s32.totalorder %s92, %s95
    %p101 = scmp.eq.s32.totalorder %s9, 0
    %p102 = por %p100, %p101
    %p103 = scmp.ne.s32.totalorder %s92, %s95
    %p104 = scmp.eq.s32.totalorder %s14, 1
    %p105 = por %p103, %p104
    %p106 = scmp.ne.s32.totalorder %s95, %s96
    %p107 = scmp.eq.s32.totalorder %s14, 0
    %p108 = por %p106, %p107
    %p109 = scmp.ne.s32.totalorder %s95, %s96
    %p110 = scmp.eq.s32.totalorder %s15, 1
    %p111 = por %p109, %p110
    %p113 = scmp.ne.s32.totalorder %s96, %s112
    %p114 = scmp.eq.s32.totalorder %s15, 0
    %p115 = por %p113, %p114
    %p116 = scmp.le.s32.totalorder 1, %s9
    %p117 = scmp.lt.s32.totalorder %s9, 3
    %p118 = pnand %p116, %p117
    %p119 = pneg %p118
    // Predicated region
    $region9: #{qaeasyconcept_forward.38} parent=5 // pred_check
      _
    $region10: #{qaeasyconcept_forward.38} parent=5 // pred_check_branch
      %121 = sbr.rel (%p118) target = $region12
    $region11: #{qaeasyconcept_forward.38} parent=5 // pred_region
      %s122 = ssub.s32 %s9, 1
      // Predicated region
      $region13: #{qaeasyconcept_forward.38} parent=11 // pred_check
        %p123 = pneg %p82
      $region14: #{qaeasyconcept_forward.38} parent=11 // pred_check_branch
        %125 = sbr.rel (%p123) target = $region16
      $region15: #{qaeasyconcept_forward.38} parent=11 // pred_region
        _
      $region16: #{qaeasyconcept_forward.38} parent=11 // pred_fallthru
        _
    $region12: #{qaeasyconcept_forward.38} parent=5 // pred_fallthru
      _
    %p126 = scmp.lt.s32.totalorder %s9, 2
    // Predicated region
    $region17: #{qaeasyconcept_forward.38} parent=5 // pred_check
      %p127 = pneg %p126
    $region18: #{qaeasyconcept_forward.38} parent=5 // pred_check_branch
      %129 = sbr.rel (%p127) target = $region20
    $region19: #{qaeasyconcept_forward.38} parent=5 // pred_region
      // Predicated region
      $region21: #{qaeasyconcept_forward.38} parent=19 // pred_check
        %p130 = pneg %p29
      $region22: #{qaeasyconcept_forward.38} parent=19 // pred_check_branch
        %132 = sbr.rel (%p130) target = $region24
      $region23: #{qaeasyconcept_forward.38} parent=19 // pred_region
        %p133 = scmp.lt.s32.totalorder %s9, 1
        %s134 = scalar_select %p133, %s9, 1
        %s135 = smul.addr %s134, 8
        %s136 = scalar_lea.vmem %s0, %s135
      $region24: #{qaeasyconcept_forward.38} parent=19 // pred_fallthru
        _
      // Predicated region
      $region25: #{qaeasyconcept_forward.38} parent=19 // pred_check
        %p137 = pneg %p55
      $region26: #{qaeasyconcept_forward.38} parent=19 // pred_check_branch
        %139 = sbr.rel (%p137) target = $region28
      $region27: #{qaeasyconcept_forward.38} parent=19 // pred_region
        %p140 = scmp.lt.s32.totalorder %s9, 1
        %s141 = scalar_select %p140, %s9, 1
        %s142 = smul.addr %s141, 8
        %s143 = scalar_lea.vmem %s1, %s142
      $region28: #{qaeasyconcept_forward.38} parent=19 // pred_fallthru
        _
    $region20: #{qaeasyconcept_forward.38} parent=5 // pred_fallthru
      _
    %p144 = scmp.le.s32.totalorder 1, %s9
    %p145 = scmp.lt.s32.totalorder %s9, 3
    %p146 = pnand %p144, %p145
    %p147 = pneg %p146
    // Predicated region
    $region29: #{qaeasyconcept_forward.38} parent=5 // pred_check
      _
    $region30: #{qaeasyconcept_forward.38} parent=5 // pred_check_branch
      %149 = sbr.rel (%p146) target = $region32
    $region31: #{qaeasyconcept_forward.38} parent=5 // pred_region
      %s150 = ssub.s32 %s9, 1
      %p151 = scmp.lt.s32.totalorder %s14, 1
      %s152 = scalar_select %p151, %s14, 1
      %s153 = smul.addr %s152, 8
      %s154 = scalar_lea.vmem %s0, %s153
      %p155 = pneg %p35
      %p156 = pneg %p32
      %p157 = scmp.lt.s32.totalorder %s14, 1
      %s158 = scalar_select %p157, %s14, 1
      %s159 = smul.addr %s158, 8
      %s160 = scalar_lea.vmem %s1, %s159
      %p161 = pneg %p61
      %p162 = pneg %p58
      %p163 = pneg %p82
      %p164 = pneg %p79
      %p165 = pneg %p108
      %p166 = pneg %p105
      %p167 = scmp.lt.s32.totalorder %s14, 1
      %s168 = scalar_select %p167, %s14, 1
      %s169 = smul.addr %s168, 8
      %s170 = scalar_lea.vmem %s3, %s169
      %p171 = scmp.lt.s32.totalorder %s14, 1
      %s172 = scalar_select %p171, %s14, 1
      %s173 = smul.addr %s172, 8
      %s174 = scalar_lea.vmem %s0, %s173
      %p175 = scmp.lt.s32.totalorder %s14, 1
      %s176 = scalar_select %p175, %s14, 1
      %s177 = smul.addr %s176, 8
      %s178 = scalar_lea.vmem %s1, %s177
      %p179 = scmp.lt.s32.totalorder %s14, 1
      %s180 = scalar_select %p179, %s14, 1
      %s181 = smul.addr %s180, 8
      %s182 = scalar_lea.vmem %s3, %s181
      %v184 = vld [vmem:[%s174] sm:$0xff]
      %v185 = vld [vmem:[%s178] sm:$0xff]
      %v186 = vld [vmem:[%s2] sm:$0xf]
      %v187 = vld [vmem:[%s2 + $0x4] sm:$0xf]
      %v188 = vld [vmem:[%s2 + $0x8] sm:$0xf]
      %v189 = vld [vmem:[%s2 + $0xc] sm:$0xf]
      %v190 = vld [vmem:[%s2 + $0x10] sm:$0xf]
      %v191 = vld [vmem:[%s2 + $0x14] sm:$0xf]
      %v192 = vld [vmem:[%s2 + $0x18] sm:$0xf]
      %v193 = vld [vmem:[%s2 + $0x1c] sm:$0xf]
      %v194 = vld [vmem:[%s2 + $0x20] sm:$0xf]
      %v195 = vld [vmem:[%s2 + $0x24] sm:$0xf]
      %v196 = vld [vmem:[%s2 + $0x28] sm:$0xf]
      %v197 = vld [vmem:[%s2 + $0x2c] sm:$0xf]
      %v198 = vld [vmem:[%s2 + $0x30] sm:$0xf]
      %v199 = vld [vmem:[%s2 + $0x34] sm:$0xf]
      %v200 = vld [vmem:[%s2 + $0x38] sm:$0xf]
      %v201 = vld [vmem:[%s2 + $0x3c] sm:$0xf]
      %v202 = vpack.c.bf16 %v184, %v184
      %v203 = vpack.c.bf16 %v185, %v185
      %v208 = vunpack.c.l.b16 %v190
      %v209 = vunpack.c.l.b16 %v191
      %v210 = vunpack.c.l.b16 %v192
      %v211 = vunpack.c.l.b16 %v193
      %v212 = vpack.c.b16 %v209, %v208
      %v213 = vpack.c.b16 %v211, %v210
      %vm216 = vcmask 261120
      %v218 = vsel %vm216, %v203, 0
      %220 = vmatprep.subr.bf16.mxu0 0
      %221 = vmatpush1.bf16.msra.mxu0 %v212
      %222 = vmatprep.subr.bf16.mxu0 0
      %223 = vmatpush1.bf16.msra.mxu0 %v213
      %224 = vmatprep.subr.bf16.mxu0 0
      %225 = vmatpush1.bf16.msra.mxu0 0
      %226 = vmatprep.subr.bf16.mxu0 0
      %227 = vmatpush1.bf16.msra.mxu0 0
      %228 = vmatprep.subr.bf16.mxu0 0
      %229 = vmatpush1.bf16.msra.mxu0 0
      %230 = vmatprep.subr.bf16.mxu0 0
      %231 = vmatpush1.bf16.msra.mxu0 0
      %232 = vmatprep.subr.bf16.mxu0 0
      %233 = vmatpush1.bf16.msra.mxu0 0
      %234 = vmatprep.subr.bf16.mxu0 0
      %235 = vmatpush1.bf16.msra.mxu0 0
      %236 = vmatprep.subr.bf16.mxu0 0
      %237 = vmatpush1.bf16.msra.mxu0 0
      %238 = vmatprep.subr.bf16.mxu0 0
      %239 = vmatpush1.bf16.msra.mxu0 0
      %240 = vmatprep.subr.bf16.mxu0 0
      %241 = vmatpush1.bf16.msra.mxu0 0
      %242 = vmatprep.subr.bf16.mxu0 0
      %243 = vmatpush1.bf16.msra.mxu0 0
      %244 = vmatprep.subr.bf16.mxu0 0
      %245 = vmatpush1.bf16.msra.mxu0 0
      %246 = vmatprep.subr.bf16.mxu0 0
      %247 = vmatpush1.bf16.msra.mxu0 0
      %248 = vmatprep.subr.bf16.mxu0 0
      %249 = vmatpush1.bf16.msra.mxu0 0
      %250 = vmatprep.subr.bf16.mxu0 0
      %251 = vmatpush1.bf16.msra.mxu0 0
      %252 = vmatprep.mubr.bf16.mxu0 0
      %253 = vmatmul.mubr.bf16.gmra.mrb[0].mxu0 %v218
      %v254 = vpop.f32.mrb[0].mxu0
      %v255 = vadd.f32 0.0, %v254
      %v256 = vpop.f32.mrb[0].mxu0
      %v257 = vpop.f32.mrb[0].mxu0
      %v258 = vpop.f32.mrb[0].mxu0
      %259 = vdwg.mxu0
      %v264 = vunpack.c.l.b16 %v186
      %v265 = vunpack.c.l.b16 %v187
      %v266 = vunpack.c.l.b16 %v188
      %v267 = vunpack.c.l.b16 %v189
      %v268 = vpack.c.b16 %v265, %v264
      %v269 = vpack.c.b16 %v267, %v266
      %v273 = vsel %vm216, %v202, 0
      %275 = vmatprep.subr.bf16.mxu0 0
      %276 = vmatpush1.bf16.msra.mxu0 %v268
      %277 = vmatprep.subr.bf16.mxu0 0
      %278 = vmatpush1.bf16.msra.mxu0 %v269
      %279 = vmatprep.subr.bf16.mxu0 0
      %280 = vmatpush1.bf16.msra.mxu0 0
      %281 = vmatprep.subr.bf16.mxu0 0
      %282 = vmatpush1.bf16.msra.mxu0 0
      %283 = vmatprep.subr.bf16.mxu0 0
      %284 = vmatpush1.bf16.msra.mxu0 0
      %285 = vmatprep.subr.bf16.mxu0 0
      %286 = vmatpush1.bf16.msra.mxu0 0
      %287 = vmatprep.subr.bf16.mxu0 0
      %288 = vmatpush1.bf16.msra.mxu0 0
      %289 = vmatprep.subr.bf16.mxu0 0
      %290 = vmatpush1.bf16.msra.mxu0 0
      %291 = vmatprep.subr.bf16.mxu0 0
      %292 = vmatpush1.bf16.msra.mxu0 0
      %293 = vmatprep.subr.bf16.mxu0 0
      %294 = vmatpush1.bf16.msra.mxu0 0
      %295 = vmatprep.subr.bf16.mxu0 0
      %296 = vmatpush1.bf16.msra.mxu0 0
      %297 = vmatprep.subr.bf16.mxu0 0
      %298 = vmatpush1.bf16.msra.mxu0 0
      %299 = vmatprep.subr.bf16.mxu0 0
      %300 = vmatpush1.bf16.msra.mxu0 0
      %301 = vmatprep.subr.bf16.mxu0 0
      %302 = vmatpush1.bf16.msra.mxu0 0
      %303 = vmatprep.subr.bf16.mxu0 0
      %304 = vmatpush1.bf16.msra.mxu0 0
      %305 = vmatprep.subr.bf16.mxu0 0
      %306 = vmatpush1.bf16.msra.mxu0 0
      %307 = vmatprep.mubr.bf16.mxu0 0
      %308 = vmatmul.mubr.bf16.gmra.mrb[0].mxu0 %v273
      %v309 = vpop.f32.mrb[0].mxu0
      %v310 = vadd.f32 %v255, %v309
      %v311 = vpop.f32.mrb[0].mxu0
      %v312 = vpop.f32.mrb[0].mxu0
      %v313 = vpop.f32.mrb[0].mxu0
      %314 = vdwg.mxu0
      %v315 = vsub.f32 %v184, %v185
      %v316 = vpack.c.bf16 %v315, %v315
      %v321 = vunpack.c.l.b16 %v194
      %v322 = vunpack.c.l.b16 %v195
      %v323 = vunpack.c.l.b16 %v196
      %v324 = vunpack.c.l.b16 %v197
      %v325 = vpack.c.b16 %v322, %v321
      %v326 = vpack.c.b16 %v324, %v323
      %v330 = vsel %vm216, %v316, 0
      %332 = vmatprep.subr.bf16.mxu0 0
      %333 = vmatpush1.bf16.msra.mxu0 %v325
      %334 = vmatprep.subr.bf16.mxu0 0
      %335 = vmatpush1.bf16.msra.mxu0 %v326
      %336 = vmatprep.subr.bf16.mxu0 0
      %337 = vmatpush1.bf16.msra.mxu0 0
      %338 = vmatprep.subr.bf16.mxu0 0
      %339 = vmatpush1.bf16.msra.mxu0 0
      %340 = vmatprep.subr.bf16.mxu0 0
      %341 = vmatpush1.bf16.msra.mxu0 0
      %342 = vmatprep.subr.bf16.mxu0 0
      %343 = vmatpush1.bf16.msra.mxu0 0
      %344 = vmatprep.subr.bf16.mxu0 0
      %345 = vmatpush1.bf16.msra.mxu0 0
      %346 = vmatprep.subr.bf16.mxu0 0
      %347 = vmatpush1.bf16.msra.mxu0 0
      %348 = vmatprep.subr.bf16.mxu0 0
      %349 = vmatpush1.bf16.msra.mxu0 0
      %350 = vmatprep.subr.bf16.mxu0 0
      %351 = vmatpush1.bf16.msra.mxu0 0
      %352 = vmatprep.subr.bf16.mxu0 0
      %353 = vmatpush1.bf16.msra.mxu0 0
      %354 = vmatprep.subr.bf16.mxu0 0
      %355 = vmatpush1.bf16.msra.mxu0 0
      %356 = vmatprep.subr.bf16.mxu0 0
      %357 = vmatpush1.bf16.msra.mxu0 0
      %358 = vmatprep.subr.bf16.mxu0 0
      %359 = vmatpush1.bf16.msra.mxu0 0
      %360 = vmatprep.subr.bf16.mxu0 0
      %361 = vmatpush1.bf16.msra.mxu0 0
      %362 = vmatprep.subr.bf16.mxu0 0
      %363 = vmatpush1.bf16.msra.mxu0 0
      %364 = vmatprep.mubr.bf16.mxu0 0
      %365 = vmatmul.mubr.bf16.gmra.mrb[0].mxu0 %v330
      %v366 = vpop.f32.mrb[0].mxu0
      %v367 = vadd.f32 0.0, %v366
      %v368 = vpop.f32.mrb[0].mxu0
      %v369 = vpop.f32.mrb[0].mxu0
      %v370 = vpop.f32.mrb[0].mxu0
      %371 = vdwg.mxu0
      %v372 = vadd.f32 %v310, %v367
      %v373 = vmul.f32 %v184, %v185
      %v374 = vpack.c.bf16 %v373, %v373
      %v379 = vunpack.c.l.b16 %v198
      %v380 = vunpack.c.l.b16 %v199
      %v381 = vunpack.c.l.b16 %v200
      %v382 = vunpack.c.l.b16 %v201
      %v383 = vpack.c.b16 %v380, %v379
      %v384 = vpack.c.b16 %v382, %v381
      %v388 = vsel %vm216, %v374, 0
      %390 = vmatprep.subr.bf16.mxu0 0
      %391 = vmatpush1.bf16.msra.mxu0 %v383
      %392 = vmatprep.subr.bf16.mxu0 0
      %393 = vmatpush1.bf16.msra.mxu0 %v384
      %394 = vmatprep.subr.bf16.mxu0 0
      %395 = vmatpush1.bf16.msra.mxu0 0
      %396 = vmatprep.subr.bf16.mxu0 0
      %397 = vmatpush1.bf16.msra.mxu0 0
      %398 = vmatprep.subr.bf16.mxu0 0
      %399 = vmatpush1.bf16.msra.mxu0 0
      %400 = vmatprep.subr.bf16.mxu0 0
      %401 = vmatpush1.bf16.msra.mxu0 0
      %402 = vmatprep.subr.bf16.mxu0 0
      %403 = vmatpush1.bf16.msra.mxu0 0
      %404 = vmatprep.subr.bf16.mxu0 0
      %405 = vmatpush1.bf16.msra.mxu0 0
      %406 = vmatprep.subr.bf16.mxu0 0
      %407 = vmatpush1.bf16.msra.mxu0 0
      %408 = vmatprep.subr.bf16.mxu0 0
      %409 = vmatpush1.bf16.msra.mxu0 0
      %410 = vmatprep.subr.bf16.mxu0 0
      %411 = vmatpush1.bf16.msra.mxu0 0
      %412 = vmatprep.subr.bf16.mxu0 0
      %413 = vmatpush1.bf16.msra.mxu0 0
      %414 = vmatprep.subr.bf16.mxu0 0
      %415 = vmatpush1.bf16.msra.mxu0 0
      %416 = vmatprep.subr.bf16.mxu0 0
      %417 = vmatpush1.bf16.msra.mxu0 0
      %418 = vmatprep.subr.bf16.mxu0 0
      %419 = vmatpush1.bf16.msra.mxu0 0
      %420 = vmatprep.subr.bf16.mxu0 0
      %421 = vmatpush1.bf16.msra.mxu0 0
      %422 = vmatprep.mubr.bf16.mxu0 0
      %423 = vmatmul.mubr.bf16.gmra.mrb[0].mxu0 %v388
      %v424 = vpop.f32.mrb[0].mxu0
      %v425 = vadd.f32 0.0, %v424
      %v426 = vpop.f32.mrb[0].mxu0
      %v427 = vpop.f32.mrb[0].mxu0
      %v428 = vpop.f32.mrb[0].mxu0
      %429 = vdwg.mxu0
      %v430 = vadd.f32 %v372, %v425
      %431 = vst.msk [vmem:[%s182] sm:$0xff] %vm216, %v430
      %p432 = scmp.lt.s32.totalorder %s14, 1
      %s433 = scalar_select %p432, %s14, 1
      %s434 = smul.addr %s433, 8
      %s435 = scalar_lea.vmem %s3, %s434
      // Predicated region
      $region33: #{qaeasyconcept_forward.38} parent=31 // pred_check
        %p436 = pneg %p105
      $region34: #{qaeasyconcept_forward.38} parent=31 // pred_check_branch
        %438 = sbr.rel (%p436) target = $region36
      $region35: #{qaeasyconcept_forward.38} parent=31 // pred_region
        _
      $region36: #{qaeasyconcept_forward.38} parent=31 // pred_fallthru
        _
    $region32: #{qaeasyconcept_forward.38} parent=5 // pred_fallthru
      _
    %p439 = scmp.le.s32.totalorder 2, %s9
    // Predicated region
    $region37: #{qaeasyconcept_forward.38} parent=5 // pred_check
      %p440 = pneg %p439
    $region38: #{qaeasyconcept_forward.38} parent=5 // pred_check_branch
      %442 = sbr.rel (%p440) target = $region40
    $region39: #{qaeasyconcept_forward.38} parent=5 // pred_region
      %s443 = ssub.s32 %s9, 2
      // Predicated region
      $region41: #{qaeasyconcept_forward.38} parent=39 // pred_check
        %p444 = pneg %p111
      $region42: #{qaeasyconcept_forward.38} parent=39 // pred_check_branch
        %446 = sbr.rel (%p444) target = $region44
      $region43: #{qaeasyconcept_forward.38} parent=39 // pred_region
        %p447 = scmp.lt.s32.totalorder %s15, 1
        %s448 = scalar_select %p447, %s15, 1
        %s449 = smul.addr %s448, 8
        %s450 = scalar_lea.vmem %s3, %s449
      $region44: #{qaeasyconcept_forward.38} parent=39 // pred_fallthru
        _
    $region40: #{qaeasyconcept_forward.38} parent=5 // pred_fallthru
      _
  $region6: #{qaeasyconcept_forward.38} parent=0 // loop_footer
    %s13 = sadd.s32 1, %s9
  $region7: #{qaeasyconcept_forward.38} parent=0 // loop_footer_branch
    %8 = sbr.rel target = $region3
  $region8: #{qaeasyconcept_forward.38} parent=0 // loop_exit
    _

// kernel: qaeasyconcept_forward.36
$region0: #{qaeasyconcept_forward.36}
  #allocation0 [shape = 'u32[]', space=smem, size = 0x4, offset = 0x4, fixed_abs, tag = 'smem constant byte address 0x4 - core index']
  #allocation1 [shape = 'u32[144,128]{1,0:T(1,128)}', space=vmem, size = 0x12000, scoped, tag = 'internal scratch']
  %s0 = inlined_call_operand.vmem [shape: f32[2,8,32], index: 0, kind: input, shape index: {}]
  %s1 = inlined_call_operand.vmem [shape: f32[2,8,32], index: 1, kind: input, shape index: {}, may-alias: {1,2}]
  %s2 = inlined_call_operand.vmem [shape: f32[2,8,32], index: 2, kind: input, shape index: {}, may-alias: {1,2}]
  %s3 = inlined_call_operand.vmem [shape: f32[2,8,5,8], index: 3, kind: input, shape index: {}]
  %s4 = inlined_call_operand.vmem [shape: f32[2,1,8], index: 4, kind: input, shape index: {}]
  %s5 = inlined_call_operand.vmem [shape: bf16[32,32], index: 5, kind: input, shape index: {}]
  %s6 = inlined_call_operand.vmem [shape: f32[1,32], index: 6, kind: input, shape index: {}]
  %s7 = inlined_call_operand.vmem [shape: bf16[32,32], index: 7, kind: input, shape index: {}]
  %s8 = inlined_call_operand.vmem [shape: f32[1,32], index: 8, kind: input, shape index: {}]
  %s9 = inlined_call_operand.vmem [shape: bf16[5,32], index: 9, kind: input, shape index: {}]
  %s10 = inlined_call_operand.vmem [shape: f32[2,8,32], index: 10, kind: output, shape index: {}]
  %s11 = sld [smem:[#allocation0]]
  $region73: #{qaeasyconcept_forward.36} parent=0
    _
  %s13 = ssub.s32 1, %s11
  %s14 = scalar_select 0, %s13, %s11
  loop: start=0, step=1, limit=4
  $region2: #{qaeasyconcept_forward.36} parent=0 // loop_pre_header
    _
  $region3: #{qaeasyconcept_forward.36} parent=0 // loop_header
    %s16 = sphi 0, %s20
    %p17 = scmp.ge.s32.totalorder %s16, 4
    %s26 = sphi 0, %s28
    %s29 = sphi 0, %s26
    %s30 = sphi 0, %s29
    %s46 = sphi 0, %s30
    %s52 = sphi 0, %s54
    %s55 = sphi 0, %s52
    %s56 = sphi 0, %s55
    %s72 = sphi 0, %s56
    %s78 = sphi 0, %s80
    %s81 = sphi 0, %s78
    %s82 = sphi 0, %s81
    %s98 = sphi 0, %s82
    %s104 = sphi 0, %s106
    %s107 = sphi 0, %s104
    %s108 = sphi 0, %s107
    %s124 = sphi 0, %s108
    %s130 = sphi 0, %s132
    %s133 = sphi 0, %s130
    %s134 = sphi 0, %s133
    %s150 = sphi 0, %s134
    %s154 = sphi 0, %s154
    %s156 = sphi 0, %s154
    %s157 = sphi 0, %s156
    %s171 = sphi 0, %s157
    %s175 = sphi 0, %s175
    %s177 = sphi 0, %s175
    %s178 = sphi 0, %s177
    %s192 = sphi 0, %s178
    %s196 = sphi 0, %s196
    %s198 = sphi 0, %s196
    %s199 = sphi 0, %s198
    %s213 = sphi 0, %s199
    %s217 = sphi 0, %s217
    %s219 = sphi 0, %s217
    %s220 = sphi 0, %s219
    %s234 = sphi 0, %s220
    %s238 = sphi 0, %s238
    %s240 = sphi 0, %s238
    %s241 = sphi 0, %s240
    %s255 = sphi 0, %s241
    %s261 = sphi 0, %s263
    %s264 = sphi 0, %s261
    %s265 = sphi 0, %s264
    %s281 = sphi 0, %s265
  $region4: #{qaeasyconcept_forward.36} parent=0 // loop_header_branch
    %19 = sbr.rel (%p17) target = $region8
  $region5: #{qaeasyconcept_forward.36} parent=0 // loop_body
    %s21 = ssub.s32 %s16, 1
    %s22 = ssub.s32 %s16, 2
    %s23 = sadd.s32 %s16, 1
    %s24 = ssub.s32 %s16, %s23
    %p25 = scmp.eq.s32.totalorder %s24, 0
    %s27 = sadd.s32 %s26, 1
    %s28 = scalar_select %p25, %s26, %s27
    %p31 = pneg %p25
    %p32 = scmp.eq.s32.totalorder %s16, 1
    %p33 = por %p31, %p32
    %p34 = scmp.ne.s32.totalorder %s26, %s29
    %p35 = scmp.eq.s32.totalorder %s16, 0
    %p36 = por %p34, %p35
    %p37 = scmp.ne.s32.totalorder %s26, %s29
    %p38 = scmp.eq.s32.totalorder %s21, 1
    %p39 = por %p37, %p38
    %p40 = scmp.ne.s32.totalorder %s29, %s30
    %p41 = scmp.eq.s32.totalorder %s21, 0
    %p42 = por %p40, %p41
    %p43 = scmp.ne.s32.totalorder %s29, %s30
    %p44 = scmp.eq.s32.totalorder %s22, 1
    %p45 = por %p43, %p44
    %p47 = scmp.ne.s32.totalorder %s30, %s46
    %p48 = scmp.eq.s32.totalorder %s22, 0
    %p49 = por %p47, %p48
    %s50 = ssub.s32 %s16, %s23
    %p51 = scmp.eq.s32.totalorder %s50, 0
    %s53 = sadd.s32 %s52, 1
    %s54 = scalar_select %p51, %s52, %s53
    %p57 = pneg %p51
    %p58 = scmp.eq.s32.totalorder %s16, 1
    %p59 = por %p57, %p58
    %p60 = scmp.ne.s32.totalorder %s52, %s55
    %p61 = scmp.eq.s32.totalorder %s16, 0
    %p62 = por %p60, %p61
    %p63 = scmp.ne.s32.totalorder %s52, %s55
    %p64 = scmp.eq.s32.totalorder %s21, 1
    %p65 = por %p63, %p64
    %p66 = scmp.ne.s32.totalorder %s55, %s56
    %p67 = scmp.eq.s32.totalorder %s21, 0
    %p68 = por %p66, %p67
    %p69 = scmp.ne.s32.totalorder %s55, %s56
    %p70 = scmp.eq.s32.totalorder %s22, 1
    %p71 = por %p69, %p70
    %p73 = scmp.ne.s32.totalorder %s56, %s72
    %p74 = scmp.eq.s32.totalorder %s22, 0
    %p75 = por %p73, %p74
    %s76 = ssub.s32 %s16, %s23
    %p77 = scmp.eq.s32.totalorder %s76, 0
    %s79 = sadd.s32 %s78, 1
    %s80 = scalar_select %p77, %s78, %s79
    %p83 = pneg %p77
    %p84 = scmp.eq.s32.totalorder %s16, 1
    %p85 = por %p83, %p84
    %p86 = scmp.ne.s32.totalorder %s78, %s81
    %p87 = scmp.eq.s32.totalorder %s16, 0
    %p88 = por %p86, %p87
    %p89 = scmp.ne.s32.totalorder %s78, %s81
    %p90 = scmp.eq.s32.totalorder %s21, 1
    %p91 = por %p89, %p90
    %p92 = scmp.ne.s32.totalorder %s81, %s82
    %p93 = scmp.eq.s32.totalorder %s21, 0
    %p94 = por %p92, %p93
    %p95 = scmp.ne.s32.totalorder %s81, %s82
    %p96 = scmp.eq.s32.totalorder %s22, 1
    %p97 = por %p95, %p96
    %p99 = scmp.ne.s32.totalorder %s82, %s98
    %p100 = scmp.eq.s32.totalorder %s22, 0
    %p101 = por %p99, %p100
    %s102 = ssub.s32 %s16, %s23
    %p103 = scmp.eq.s32.totalorder %s102, 0
    %s105 = sadd.s32 %s104, 1
    %s106 = scalar_select %p103, %s104, %s105
    %p109 = pneg %p103
    %p110 = scmp.eq.s32.totalorder %s16, 1
    %p111 = por %p109, %p110
    %p112 = scmp.ne.s32.totalorder %s104, %s107
    %p113 = scmp.eq.s32.totalorder %s16, 0
    %p114 = por %p112, %p113
    %p115 = scmp.ne.s32.totalorder %s104, %s107
    %p116 = scmp.eq.s32.totalorder %s21, 1
    %p117 = por %p115, %p116
    %p118 = scmp.ne.s32.totalorder %s107, %s108
    %p119 = scmp.eq.s32.totalorder %s21, 0
    %p120 = por %p118, %p119
    %p121 = scmp.ne.s32.totalorder %s107, %s108
    %p122 = scmp.eq.s32.totalorder %s22, 1
    %p123 = por %p121, %p122
    %p125 = scmp.ne.s32.totalorder %s108, %s124
    %p126 = scmp.eq.s32.totalorder %s22, 0
    %p127 = por %p125, %p126
    %s128 = ssub.s32 %s16, %s23
    %p129 = scmp.eq.s32.totalorder %s128, 0
    %s131 = sadd.s32 %s130, 1
    %s132 = scalar_select %p129, %s130, %s131
    %p135 = pneg %p129
    %p136 = scmp.eq.s32.totalorder %s16, 1
    %p137 = por %p135, %p136
    %p138 = scmp.ne.s32.totalorder %s130, %s133
    %p139 = scmp.eq.s32.totalorder %s16, 0
    %p140 = por %p138, %p139
    %p141 = scmp.ne.s32.totalorder %s130, %s133
    %p142 = scmp.eq.s32.totalorder %s21, 1
    %p143 = por %p141, %p142
    %p144 = scmp.ne.s32.totalorder %s133, %s134
    %p145 = scmp.eq.s32.totalorder %s21, 0
    %p146 = por %p144, %p145
    %p147 = scmp.ne.s32.totalorder %s133, %s134
    %p148 = scmp.eq.s32.totalorder %s22, 1
    %p149 = por %p147, %p148
    %p151 = scmp.ne.s32.totalorder %s134, %s150
    %p152 = scmp.eq.s32.totalorder %s22, 0
    %p153 = por %p151, %p152
    %s155 = sadd.s32 %s154, 1
    %p158 = scmp.eq.s32.totalorder %s16, 1
    %p159 = scmp.ne.s32.totalorder %s154, %s156
    %p160 = scmp.eq.s32.totalorder %s16, 0
    %p161 = por %p159, %p160
    %p162 = scmp.ne.s32.totalorder %s154, %s156
    %p163 = scmp.eq.s32.totalorder %s21, 1
    %p164 = por %p162, %p163
    %p165 = scmp.ne.s32.totalorder %s156, %s157
    %p166 = scmp.eq.s32.totalorder %s21, 0
    %p167 = por %p165, %p166
    %p168 = scmp.ne.s32.totalorder %s156, %s157
    %p169 = scmp.eq.s32.totalorder %s22, 1
    %p170 = por %p168, %p169
    %p172 = scmp.ne.s32.totalorder %s157, %s171
    %p173 = scmp.eq.s32.totalorder %s22, 0
    %p174 = por %p172, %p173
    %s176 = sadd.s32 %s175, 1
    %p179 = scmp.eq.s32.totalorder %s16, 1
    %p180 = scmp.ne.s32.totalorder %s175, %s177
    %p181 = scmp.eq.s32.totalorder %s16, 0
    %p182 = por %p180, %p181
    %p183 = scmp.ne.s32.totalorder %s175, %s177
    %p184 = scmp.eq.s32.totalorder %s21, 1
    %p185 = por %p183, %p184
    %p186 = scmp.ne.s32.totalorder %s177, %s178
    %p187 = scmp.eq.s32.totalorder %s21, 0
    %p188 = por %p186, %p187
    %p189 = scmp.ne.s32.totalorder %s177, %s178
    %p190 = scmp.eq.s32.totalorder %s22, 1
    %p191 = por %p189, %p190
    %p193 = scmp.ne.s32.totalorder %s178, %s192
    %p194 = scmp.eq.s32.totalorder %s22, 0
    %p195 = por %p193, %p194
    %s197 = sadd.s32 %s196, 1
    %p200 = scmp.eq.s32.totalorder %s16, 1
    %p201 = scmp.ne.s32.totalorder %s196, %s198
    %p202 = scmp.eq.s32.totalorder %s16, 0
    %p203 = por %p201, %p202
    %p204 = scmp.ne.s32.totalorder %s196, %s198
    %p205 = scmp.eq.s32.totalorder %s21, 1
    %p206 = por %p204, %p205
    %p207 = scmp.ne.s32.totalorder %s198, %s199
    %p208 = scmp.eq.s32.totalorder %s21, 0
    %p209 = por %p207, %p208
    %p210 = scmp.ne.s32.totalorder %s198, %s199
    %p211 = scmp.eq.s32.totalorder %s22, 1
    %p212 = por %p210, %p211
    %p214 = scmp.ne.s32.totalorder %s199, %s213
    %p215 = scmp.eq.s32.totalorder %s22, 0
    %p216 = por %p214, %p215
    %s218 = sadd.s32 %s217, 1
    %p221 = scmp.eq.s32.totalorder %s16, 1
    %p222 = scmp.ne.s32.totalorder %s217, %s219
    %p223 = scmp.eq.s32.totalorder %s16, 0
    %p224 = por %p222, %p223
    %p225 = scmp.ne.s32.totalorder %s217, %s219
    %p226 = scmp.eq.s32.totalorder %s21, 1
    %p227 = por %p225, %p226
    %p228 = scmp.ne.s32.totalorder %s219, %s220
    %p229 = scmp.eq.s32.totalorder %s21, 0
    %p230 = por %p228, %p229
    %p231 = scmp.ne.s32.totalorder %s219, %s220
    %p232 = scmp.eq.s32.totalorder %s22, 1
    %p233 = por %p231, %p232
    %p235 = scmp.ne.s32.totalorder %s220, %s234
    %p236 = scmp.eq.s32.totalorder %s22, 0
    %p237 = por %p235, %p236
    %s239 = sadd.s32 %s238, 1
    %p242 = scmp.eq.s32.totalorder %s16, 1
    %p243 = scmp.ne.s32.totalorder %s238, %s240
    %p244 = scmp.eq.s32.totalorder %s16, 0
    %p245 = por %p243, %p244
    %p246 = scmp.ne.s32.totalorder %s238, %s240
    %p247 = scmp.eq.s32.totalorder %s21, 1
    %p248 = por %p246, %p247
    %p249 = scmp.ne.s32.totalorder %s240, %s241
    %p250 = scmp.eq.s32.totalorder %s21, 0
    %p251 = por %p249, %p250
    %p252 = scmp.ne.s32.totalorder %s240, %s241
    %p253 = scmp.eq.s32.totalorder %s22, 1
    %p254 = por %p252, %p253
    %p256 = scmp.ne.s32.totalorder %s241, %s255
    %p257 = scmp.eq.s32.totalorder %s22, 0
    %p258 = por %p256, %p257
    %s259 = ssub.s32 %s16, %s23
    %p260 = scmp.eq.s32.totalorder %s259, 0
    %s262 = sadd.s32 %s261, 1
    %s263 = scalar_select %p260, %s261, %s262
    %p266 = pneg %p260
    %p267 = scmp.eq.s32.totalorder %s16, 1
    %p268 = por %p266, %p267
    %p269 = scmp.ne.s32.totalorder %s261, %s264
    %p270 = scmp.eq.s32.totalorder %s16, 0
    %p271 = por %p269, %p270
    %p272 = scmp.ne.s32.totalorder %s261, %s264
    %p273 = scmp.eq.s32.totalorder %s21, 1
    %p274 = por %p272, %p273
    %p275 = scmp.ne.s32.totalorder %s264, %s265
    %p276 = scmp.eq.s32.totalorder %s21, 0
    %p277 = por %p275, %p276
    %p278 = scmp.ne.s32.totalorder %s264, %s265
    %p279 = scmp.eq.s32.totalorder %s22, 1
    %p280 = por %p278, %p279
    %p282 = scmp.ne.s32.totalorder %s265, %s281
    %p283 = scmp.eq.s32.totalorder %s22, 0
    %p284 = por %p282, %p283
    %p285 = scmp.le.s32.totalorder 1, %s16
    %p286 = scmp.lt.s32.totalorder %s16, 3
    %p287 = pnand %p285, %p286
    %p288 = pneg %p287
    // Predicated region
    $region9: #{qaeasyconcept_forward.36} parent=5 // pred_check
      _
    $region10: #{qaeasyconcept_forward.36} parent=5 // pred_check_branch
      %290 = sbr.rel (%p287) target = $region12
    $region11: #{qaeasyconcept_forward.36} parent=5 // pred_region
      %s291 = ssub.s32 %s16, 1
      // Predicated region
      $region13: #{qaeasyconcept_forward.36} parent=11 // pred_check
        %p292 = pneg %p167
      $region14: #{qaeasyconcept_forward.36} parent=11 // pred_check_branch
        %294 = sbr.rel (%p292) target = $region16
      $region15: #{qaeasyconcept_forward.36} parent=11 // pred_region
        _
      $region16: #{qaeasyconcept_forward.36} parent=11 // pred_fallthru
        _
      // Predicated region
      $region17: #{qaeasyconcept_forward.36} parent=11 // pred_check
        %p295 = pneg %p188
      $region18: #{qaeasyconcept_forward.36} parent=11 // pred_check_branch
        %297 = sbr.rel (%p295) target = $region20
      $region19: #{qaeasyconcept_forward.36} parent=11 // pred_region
        _
      $region20: #{qaeasyconcept_forward.36} parent=11 // pred_fallthru
        _
      // Predicated region
      $region21: #{qaeasyconcept_forward.36} parent=11 // pred_check
        %p298 = pneg %p209
      $region22: #{qaeasyconcept_forward.36} parent=11 // pred_check_branch
        %300 = sbr.rel (%p298) target = $region24
      $region23: #{qaeasyconcept_forward.36} parent=11 // pred_region
        _
      $region24: #{qaeasyconcept_forward.36} parent=11 // pred_fallthru
        _
      // Predicated region
      $region25: #{qaeasyconcept_forward.36} parent=11 // pred_check
        %p301 = pneg %p230
      $region26: #{qaeasyconcept_forward.36} parent=11 // pred_check_branch
        %303 = sbr.rel (%p301) target = $region28
      $region27: #{qaeasyconcept_forward.36} parent=11 // pred_region
        _
      $region28: #{qaeasyconcept_forward.36} parent=11 // pred_fallthru
        _
      // Predicated region
      $region29: #{qaeasyconcept_forward.36} parent=11 // pred_check
        %p304 = pneg %p251
      $region30: #{qaeasyconcept_forward.36} parent=11 // pred_check_branch
        %306 = sbr.rel (%p304) target = $region32
      $region31: #{qaeasyconcept_forward.36} parent=11 // pred_region
        _
      $region32: #{qaeasyconcept_forward.36} parent=11 // pred_fallthru
        _
    $region12: #{qaeasyconcept_forward.36} parent=5 // pred_fallthru
      _
    %p307 = scmp.lt.s32.totalorder %s16, 2
    // Predicated region
    $region33: #{qaeasyconcept_forward.36} parent=5 // pred_check
      %p308 = pneg %p307
    $region34: #{qaeasyconcept_forward.36} parent=5 // pred_check_branch
      %310 = sbr.rel (%p308) target = $region36
    $region35: #{qaeasyconcept_forward.36} parent=5 // pred_region
      // Predicated region
      $region37: #{qaeasyconcept_forward.36} parent=35 // pred_check
        %p311 = pneg %p36
      $region38: #{qaeasyconcept_forward.36} parent=35 // pred_check_branch
        %313 = sbr.rel (%p311) target = $region40
      $region39: #{qaeasyconcept_forward.36} parent=35 // pred_region
        %p314 = scmp.lt.s32.totalorder %s16, 1
        %s315 = scalar_select %p314, %s16, 1
        %s316 = smul.addr %s315, 8
        %s317 = scalar_lea.vmem %s0, %s316
      $region40: #{qaeasyconcept_forward.36} parent=35 // pred_fallthru
        _
      // Predicated region
      $region41: #{qaeasyconcept_forward.36} parent=35 // pred_check
        %p318 = pneg %p62
      $region42: #{qaeasyconcept_forward.36} parent=35 // pred_check_branch
        %320 = sbr.rel (%p318) target = $region44
      $region43: #{qaeasyconcept_forward.36} parent=35 // pred_region
        %p321 = scmp.lt.s32.totalorder %s16, 1
        %s322 = scalar_select %p321, %s16, 1
        %s323 = smul.addr %s322, 8
        %s324 = scalar_lea.vmem %s1, %s323
      $region44: #{qaeasyconcept_forward.36} parent=35 // pred_fallthru
        _
      // Predicated region
      $region45: #{qaeasyconcept_forward.36} parent=35 // pred_check
        %p325 = pneg %p88
      $region46: #{qaeasyconcept_forward.36} parent=35 // pred_check_branch
        %327 = sbr.rel (%p325) target = $region48
      $region47: #{qaeasyconcept_forward.36} parent=35 // pred_region
        %p328 = scmp.lt.s32.totalorder %s16, 1
        %s329 = scalar_select %p328, %s16, 1
        %s330 = smul.addr %s329, 8
        %s331 = scalar_lea.vmem %s2, %s330
      $region48: #{qaeasyconcept_forward.36} parent=35 // pred_fallthru
        _
      // Predicated region
      $region49: #{qaeasyconcept_forward.36} parent=35 // pred_check
        %p332 = pneg %p114
      $region50: #{qaeasyconcept_forward.36} parent=35 // pred_check_branch
        %334 = sbr.rel (%p332) target = $region52
      $region51: #{qaeasyconcept_forward.36} parent=35 // pred_region
        %p335 = scmp.lt.s32.totalorder %s16, 1
        %s336 = scalar_select %p335, %s16, 1
        %s337 = smul.addr %s336, 8
        %s338 = smul.addr %s337, 8
        %s339 = scalar_lea.vmem %s3, %s338
      $region52: #{qaeasyconcept_forward.36} parent=35 // pred_fallthru
        _
      // Predicated region
      $region53: #{qaeasyconcept_forward.36} parent=35 // pred_check
        %p340 = pneg %p140
      $region54: #{qaeasyconcept_forward.36} parent=35 // pred_check_branch
        %342 = sbr.rel (%p340) target = $region56
      $region55: #{qaeasyconcept_forward.36} parent=35 // pred_region
        %p343 = scmp.lt.s32.totalorder %s16, 1
        %s344 = scalar_select %p343, %s16, 1
        %s345 = scalar_lea.vmem %s4, %s344
      $region56: #{qaeasyconcept_forward.36} parent=35 // pred_fallthru
        _
    $region36: #{qaeasyconcept_forward.36} parent=5 // pred_fallthru
      _
    %p346 = scmp.le.s32.totalorder 1, %s16
    %p347 = scmp.lt.s32.totalorder %s16, 3
    %p348 = pnand %p346, %p347
    %p349 = pneg %p348
    // Predicated region
    $region57: #{qaeasyconcept_forward.36} parent=5 // pred_check
      _
    $region58: #{qaeasyconcept_forward.36} parent=5 // pred_check_branch
      %351 = sbr.rel (%p348) target = $region60
    $region59: #{qaeasyconcept_forward.36} parent=5 // pred_region
      %s352 = ssub.s32 %s16, 1
      %p353 = scmp.lt.s32.totalorder %s21, 1
      %s354 = scalar_select %p353, %s21, 1
      %s355 = smul.addr %s354, 8
      %s356 = scalar_lea.vmem %s0, %s355
      %p357 = pneg %p42
      %p358 = pneg %p39
      %p359 = scmp.lt.s32.totalorder %s21, 1
      %s360 = scalar_select %p359, %s21, 1
      %s361 = smul.addr %s360, 8
      %s362 = scalar_lea.vmem %s1, %s361
      %p363 = pneg %p68
      %p364 = pneg %p65
      %p365 = scmp.lt.s32.totalorder %s21, 1
      %s366 = scalar_select %p365, %s21, 1
      %s367 = smul.addr %s366, 8
      %s368 = scalar_lea.vmem %s2, %s367
      %p369 = pneg %p94
      %p370 = pneg %p91
      %p371 = scmp.lt.s32.totalorder %s21, 1
      %s372 = scalar_select %p371, %s21, 1
      %s373 = smul.addr %s372, 8
      %s374 = smul.addr %s373, 8
      %s375 = scalar_lea.vmem %s3, %s374
      %p376 = pneg %p120
      %p377 = pneg %p117
      %p378 = scmp.lt.s32.totalorder %s21, 1
      %s379 = scalar_select %p378, %s21, 1
      %s380 = scalar_lea.vmem %s4, %s379
      %p381 = pneg %p146
      %p382 = pneg %p143
      %p383 = pneg %p167
      %p384 = pneg %p164
      %p385 = pneg %p188
      %p386 = pneg %p185
      %p387 = pneg %p209
      %p388 = pneg %p206
      %p389 = pneg %p230
      %p390 = pneg %p227
      %p391 = pneg %p251
      %p392 = pneg %p248
      %p393 = pneg %p277
      %p394 = pneg %p274
      %p395 = scmp.lt.s32.totalorder %s21, 1
      %s396 = scalar_select %p395, %s21, 1
      %s397 = smul.addr %s396, 8
      %s398 = scalar_lea.vmem %s10, %s397
      %p399 = scmp.lt.s32.totalorder %s21, 1
      %s400 = scalar_select %p399, %s21, 1
      %s401 = smul.addr %s400, 8
      %s402 = scalar_lea.vmem %s0, %s401
      %p403 = scmp.lt.s32.totalorder %s21, 1
      %s404 = scalar_select %p403, %s21, 1
      %s405 = smul.addr %s404, 8
      %s406 = scalar_lea.vmem %s1, %s405
      %p407 = scmp.lt.s32.totalorder %s21, 1
      %s408 = scalar_select %p407, %s21, 1
      %s409 = smul.addr %s408, 8
      %s410 = scalar_lea.vmem %s2, %s409
      %p411 = scmp.lt.s32.totalorder %s21, 1
      %s412 = scalar_select %p411, %s21, 1
      %s413 = smul.addr %s412, 8
      %s414 = smul.addr %s413, 8
      %s415 = scalar_lea.vmem %s3, %s414
      %p416 = scmp.lt.s32.totalorder %s21, 1
      %s417 = scalar_select %p416, %s21, 1
      %s418 = scalar_lea.vmem %s4, %s417
      %p419 = scmp.lt.s32.totalorder %s21, 1
      %s420 = scalar_select %p419, %s21, 1
      %s421 = smul.addr %s420, 8
      %s422 = scalar_lea.vmem %s10, %s421
      %v424 = vld [vmem:[%s402] sm:$0xff]
      %v425 = vpack.c.bf16 %v424, %v424
      %v426 = vld [vmem:[%s5] sm:$0xf]
      %v427 = vld [vmem:[%s5 + $0x4] sm:$0xf]
      %v428 = vld [vmem:[%s5 + $0x8] sm:$0xf]
      %v429 = vld [vmem:[%s5 + $0xc] sm:$0xf]
      %v430 = vld [vmem:[%s6] sm:$0x1]
      %v432 = vlaneseq
      %v433 = vshrl.u32 %v432, 7
      %v434 = vsub.s32 0, %v433
      %v435 = vrot.slane %v430, %v434
      %v441 = vunpack.c.l.b16 %v426
      %v442 = vunpack.c.l.b16 %v427
      %v443 = vunpack.c.l.b16 %v428
      %v444 = vunpack.c.l.b16 %v429
      %v445 = vpack.c.b16 %v442, %v441
      %v446 = vpack.c.b16 %v444, %v443
      %vm449 = vcmask 261120
      %v451 = vsel %vm449, %v425, 0
      %453 = vmatprep.subr.bf16.mxu0 0
      %454 = vmatpush1.bf16.msra.mxu0 %v445
      %455 = vmatprep.subr.bf16.mxu0 0
      %456 = vmatpush1.bf16.msra.mxu0 %v446
      %457 = vmatprep.subr.bf16.mxu0 0
      %458 = vmatpush1.bf16.msra.mxu0 0
      %459 = vmatprep.subr.bf16.mxu0 0
      %460 = vmatpush1.bf16.msra.mxu0 0
      %461 = vmatprep.subr.bf16.mxu0 0
      %462 = vmatpush1.bf16.msra.mxu0 0
      %463 = vmatprep.subr.bf16.mxu0 0
      %464 = vmatpush1.bf16.msra.mxu0 0
      %465 = vmatprep.subr.bf16.mxu0 0
      %466 = vmatpush1.bf16.msra.mxu0 0
      %467 = vmatprep.subr.bf16.mxu0 0
      %468 = vmatpush1.bf16.msra.mxu0 0
      %469 = vmatprep.subr.bf16.mxu0 0
      %470 = vmatpush1.bf16.msra.mxu0 0
      %471 = vmatprep.subr.bf16.mxu0 0
      %472 = vmatpush1.bf16.msra.mxu0 0
      %473 = vmatprep.subr.bf16.mxu0 0
      %474 = vmatpush1.bf16.msra.mxu0 0
      %475 = vmatprep.subr.bf16.mxu0 0
      %476 = vmatpush1.bf16.msra.mxu0 0
      %477 = vmatprep.subr.bf16.mxu0 0
      %478 = vmatpush1.bf16.msra.mxu0 0
      %479 = vmatprep.subr.bf16.mxu0 0
      %480 = vmatpush1.bf16.msra.mxu0 0
      %481 = vmatprep.subr.bf16.mxu0 0
      %482 = vmatpush1.bf16.msra.mxu0 0
      %483 = vmatprep.subr.bf16.mxu0 0
      %484 = vmatpush1.bf16.msra.mxu0 0
      %485 = vmatprep.mubr.bf16.mxu0 0
      %486 = vmatmul.mubr.bf16.gmra.mrb[0].mxu0 %v451
      %v487 = vpop.f32.mrb[0].mxu0
      %v488 = vadd.f32 %v435, %v487
      %v489 = vpop.f32.mrb[0].mxu0
      %v490 = vpop.f32.mrb[0].mxu0
      %v491 = vpop.f32.mrb[0].mxu0
      %492 = vdwg.mxu0
      %v493 = vld [vmem:[%s406] sm:$0xff]
      %v494 = vpack.c.bf16 %v493, %v493
      %v495 = vld [vmem:[%s7] sm:$0xf]
      %v496 = vld [vmem:[%s7 + $0x4] sm:$0xf]
      %v497 = vld [vmem:[%s7 + $0x8] sm:$0xf]
      %v498 = vld [vmem:[%s7 + $0xc] sm:$0xf]
      %v499 = vld [vmem:[%s8] sm:$0x1]
      %v501 = vlaneseq
      %v502 = vshrl.u32 %v501, 7
      %v503 = vsub.s32 0, %v502
      %v504 = vrot.slane %v499, %v503
      %v510 = vunpack.c.l.b16 %v495
      %v511 = vunpack.c.l.b16 %v496
      %v512 = vunpack.c.l.b16 %v497
      %v513 = vunpack.c.l.b16 %v498
      %v514 = vpack.c.b16 %v511, %v510
      %v515 = vpack.c.b16 %v513, %v512
      %v519 = vsel %vm449, %v494, 0
      %521 = vmatprep.subr.bf16.mxu0 0
      %522 = vmatpush1.bf16.msra.mxu0 %v514
      %523 = vmatprep.subr.bf16.mxu0 0
      %524 = vmatpush1.bf16.msra.mxu0 %v515
      %525 = vmatprep.subr.bf16.mxu0 0
      %526 = vmatpush1.bf16.msra.mxu0 0
      %527 = vmatprep.subr.bf16.mxu0 0
      %528 = vmatpush1.bf16.msra.mxu0 0
      %529 = vmatprep.subr.bf16.mxu0 0
      %530 = vmatpush1.bf16.msra.mxu0 0
      %531 = vmatprep.subr.bf16.mxu0 0
      %532 = vmatpush1.bf16.msra.mxu0 0
      %533 = vmatprep.subr.bf16.mxu0 0
      %534 = vmatpush1.bf16.msra.mxu0 0
      %535 = vmatprep.subr.bf16.mxu0 0
      %536 = vmatpush1.bf16.msra.mxu0 0
      %537 = vmatprep.subr.bf16.mxu0 0
      %538 = vmatpush1.bf16.msra.mxu0 0
      %539 = vmatprep.subr.bf16.mxu0 0
      %540 = vmatpush1.bf16.msra.mxu0 0
      %541 = vmatprep.subr.bf16.mxu0 0
      %542 = vmatpush1.bf16.msra.mxu0 0
      %543 = vmatprep.subr.bf16.mxu0 0
      %544 = vmatpush1.bf16.msra.mxu0 0
      %545 = vmatprep.subr.bf16.mxu0 0
      %546 = vmatpush1.bf16.msra.mxu0 0
      %547 = vmatprep.subr.bf16.mxu0 0
      %548 = vmatpush1.bf16.msra.mxu0 0
      %549 = vmatprep.subr.bf16.mxu0 0
      %550 = vmatpush1.bf16.msra.mxu0 0
      %551 = vmatprep.subr.bf16.mxu0 0
      %552 = vmatpush1.bf16.msra.mxu0 0
      %553 = vmatprep.mubr.bf16.mxu0 0
      %554 = vmatmul.mubr.bf16.gmra.mrb[0].mxu0 %v519
      %v555 = vpop.f32.mrb[0].mxu0
      %v556 = vadd.f32 %v504, %v555
      %v557 = vpop.f32.mrb[0].mxu0
      %v558 = vpop.f32.mrb[0].mxu0
      %v559 = vpop.f32.mrb[0].mxu0
      %560 = vdwg.mxu0
      %v561 = vld [vmem:[%s418] sm:$0x1]
      %vm562 = vcmp.eq.f32.partialorder %v561, 0.0
      %v563 = vsel %vm562, -1e+09, 0.0
      %v564 = vmul.f32 %v488, 0.17677669
      %v565 = vpack.c.bf16 %v564, %v564
      %v566 = vpack.c.bf16 %v556, %v556
      %v568 = vlaneseq
      %v569 = vshrl.u32 %v568, 7
      %v570 = vsub.s32 0, %v569
      %v571 = vrot.slane %v563, %v570
      %v574 = vsel %vm449, %v565, 0
      %v577 = vsel %vm449, %v566, 0
      %579 = vmatprep.subr.bf16.mxu0 0
      %580 = vmatpush1.bf16.xpose.msra.mxu0 %v577
      %581 = vmatprep.subr.bf16.mxu0 0
      %582 = vmatpush1.bf16.xpose.msra.mxu0 0
      %583 = vmatprep.subr.bf16.mxu0 0
      %584 = vmatpush1.bf16.xpose.msra.mxu0 0
      %585 = vmatprep.subr.bf16.mxu0 0
      %586 = vmatpush1.bf16.xpose.msra.mxu0 0
      %587 = vmatprep.subr.bf16.mxu0 0
      %588 = vmatpush1.bf16.xpose.msra.mxu0 0
      %589 = vmatprep.subr.bf16.mxu0 0
      %590 = vmatpush1.bf16.xpose.msra.mxu0 0
      %591 = vmatprep.subr.bf16.mxu0 0
      %592 = vmatpush1.bf16.xpose.msra.mxu0 0
      %593 = vmatprep.subr.bf16.mxu0 0
      %594 = vmatpush1.bf16.xpose.msra.mxu0 0
      %595 = vmatprep.subr.bf16.mxu0 0
      %596 = vmatpush1.bf16.xpose.msra.mxu0 0
      %597 = vmatprep.subr.bf16.mxu0 0
      %598 = vmatpush1.bf16.xpose.msra.mxu0 0
      %599 = vmatprep.subr.bf16.mxu0 0
      %600 = vmatpush1.bf16.xpose.msra.mxu0 0
      %601 = vmatprep.subr.bf16.mxu0 0
      %602 = vmatpush1.bf16.xpose.msra.mxu0 0
      %603 = vmatprep.subr.bf16.mxu0 0
      %604 = vmatpush1.bf16.xpose.msra.mxu0 0
      %605 = vmatprep.subr.bf16.mxu0 0
      %606 = vmatpush1.bf16.xpose.msra.mxu0 0
      %607 = vmatprep.subr.bf16.mxu0 0
      %608 = vmatpush1.bf16.xpose.msra.mxu0 0
      %609 = vmatprep.subr.bf16.mxu0 0
      %610 = vmatpush1.bf16.xpose.msra.mxu0 0
      %611 = vmatprep.mubr.bf16.mxu0 0
      %612 = vmatmul.mubr.bf16.gmra.mrb[0].mxu0 %v574
      %v613 = vpop.f32.mrb[0].mxu0
      %v614 = vadd.f32 %v571, %v613
      %v615 = vpop.f32.mrb[0].mxu0
      %v616 = vpop.f32.mrb[0].mxu0
      %v617 = vpop.f32.mrb[0].mxu0
      %618 = vdwg.mxu0
      %vm619 = vcmask 64512
      %v620 = vsel %vm619, %v614, -inf
      %621 = vmax.xlane.f32.xlu0 %v620
      %v622 = vpop.xlane.xlu0 %621
      %v623 = vsub.f32 %v614, %v622
      %v624 = vmul.f32 %v623, 1.442695
      %v625 = vpow.pop %v624
      %v626 = vsel %vm619, %v625, 0.0
      %627 = vadd.xlane.f32.xlu0 %v626
      %v628 = vpop.xlane.xlu0 %627
      %v629 = vrcp.pop %v628
      %v630 = vmul.f32 %v625, %v629
      %v631 = vpack.c.bf16 %v630, %v630
      %v632 = vld [vmem:[%s410] sm:$0xff]
      %v633 = vpack.c.bf16 %v632, %v632
      %v635 = vcombine.high %v630, %v630
      %v637 = vunpack.c.l.s4 1966171168
      %v638 = vunpack.c.0.s8 %v637
      %v639 = vlaneseq
      %v640 = vshrl.u32 %v639, 7
      %v641 = vsub.s32 %v638, %v640
      %v642 = vrot.slane %v630, %v641
      %v644 = vunpack.c.l.s4 1966171168
      %v645 = vunpack.c.0.s8 %v644
      %v646 = vlaneseq
      %v647 = vshrl.u32 %v646, 7
      %v648 = vsub.s32 %v645, %v647
      %v649 = vrot.slane %v635, %v648
      %v650 = vcombine.high %v642, %v642
      %v651 = vcombine.high %v649, %v649
      %v653 = vunpack.c.l.s4 1966171168
      %v654 = vunpack.c.0.s8 %v653
      %v655 = vlaneseq
      %v656 = vshrl.u32 %v655, 7
      %v657 = vsub.s32 %v654, %v656
      %v658 = vrot.slane %v642, %v657
      %v660 = vunpack.c.l.s4 1966171168
      %v661 = vunpack.c.0.s8 %v660
      %v662 = vlaneseq
      %v663 = vshrl.u32 %v662, 7
      %v664 = vsub.s32 %v661, %v663
      %v665 = vrot.slane %v649, %v664
      %v667 = vunpack.c.l.s4 1966171168
      %v668 = vunpack.c.0.s8 %v667
      %v669 = vlaneseq
      %v670 = vshrl.u32 %v669, 7
      %v671 = vsub.s32 %v668, %v670
      %v672 = vrot.slane %v650, %v671
      %v674 = vunpack.c.l.s4 1966171168
      %v675 = vunpack.c.0.s8 %v674
      %v676 = vlaneseq
      %v677 = vshrl.u32 %v676, 7
      %v678 = vsub.s32 %v675, %v677
      %v679 = vrot.slane %v651, %v678
      %v680 = vcombine.high %v658, %v658
      %v681 = vcombine.high %v665, %v665
      %v682 = vcombine.high %v672, %v672
      %v683 = vcombine.high %v679, %v679
      %v684 = vld [vmem:[%s415] sm:$0x1f]
      %v685 = vld [vmem:[%s415 + $0x8] sm:$0x1f]
      %v686 = vld [vmem:[%s415 + $0x10] sm:$0x1f]
      %v687 = vld [vmem:[%s415 + $0x18] sm:$0x1f]
      %v688 = vld [vmem:[%s415 + $0x20] sm:$0x1f]
      %v689 = vld [vmem:[%s415 + $0x28] sm:$0x1f]
      %v690 = vld [vmem:[%s415 + $0x30] sm:$0x1f]
      %v691 = vld [vmem:[%s415 + $0x38] sm:$0x1f]
      %v692 = vlaneseq
      %v693 = vshrl.u32 %v692, 7
      %v694 = vsub.s32 0, %v693
      %v695 = vrot.slane %v658, %v694
      %v696 = vlaneseq
      %v697 = vshrl.u32 %v696, 7
      %v698 = vsub.s32 0, %v697
      %v699 = vrot.slane %v672, %v698
      %v700 = vlaneseq
      %v701 = vshrl.u32 %v700, 7
      %v702 = vsub.s32 0, %v701
      %v703 = vrot.slane %v680, %v702
      %v704 = vlaneseq
      %v705 = vshrl.u32 %v704, 7
      %v706 = vsub.s32 0, %v705
      %v707 = vrot.slane %v682, %v706
      %v708 = vlaneseq
      %v709 = vshrl.u32 %v708, 7
      %v710 = vsub.s32 0, %v709
      %v711 = vrot.slane %v665, %v710
      %v712 = vlaneseq
      %v713 = vshrl.u32 %v712, 7
      %v714 = vsub.s32 0, %v713
      %v715 = vrot.slane %v679, %v714
      %v716 = vlaneseq
      %v717 = vshrl.u32 %v716, 7
      %v718 = vsub.s32 0, %v717
      %v719 = vrot.slane %v681, %v718
      %v720 = vlaneseq
      %v721 = vshrl.u32 %v720, 7
      %v722 = vsub.s32 0, %v721
      %v723 = vrot.slane %v683, %v722
      %v732 = vmul.f32 %v695, %v684
      %v733 = vmul.f32 %v699, %v685
      %v734 = vmul.f32 %v703, %v686
      %v735 = vmul.f32 %v707, %v687
      %v736 = vmul.f32 %v711, %v688
      %v737 = vmul.f32 %v715, %v689
      %v738 = vmul.f32 %v719, %v690
      %v739 = vmul.f32 %v723, %v691
      %vm740 = vcmask 61440
      %v741 = vsel %vm740, %v732, 0.0
      %742 = vadd.xlane.f32.xlu0 %v741
      %v743 = vpop.xlane.xlu0 %742
      %v744 = vsel %vm740, %v733, 0.0
      %745 = vadd.xlane.f32.xlu0 %v744
      %v746 = vpop.xlane.xlu0 %745
      %v747 = vsel %vm740, %v734, 0.0
      %748 = vadd.xlane.f32.xlu0 %v747
      %v749 = vpop.xlane.xlu0 %748
      %v750 = vsel %vm740, %v735, 0.0
      %751 = vadd.xlane.f32.xlu0 %v750
      %v752 = vpop.xlane.xlu0 %751
      %v753 = vsel %vm740, %v736, 0.0
      %754 = vadd.xlane.f32.xlu0 %v753
      %v755 = vpop.xlane.xlu0 %754
      %v756 = vsel %vm740, %v737, 0.0
      %757 = vadd.xlane.f32.xlu0 %v756
      %v758 = vpop.xlane.xlu0 %757
      %v759 = vsel %vm740, %v738, 0.0
      %760 = vadd.xlane.f32.xlu0 %v759
      %v761 = vpop.xlane.xlu0 %760
      %v762 = vsel %vm740, %v739, 0.0
      %763 = vadd.xlane.f32.xlu0 %v762
      %v764 = vpop.xlane.xlu0 %763
      %v765 = vpack.c.bf16 %v743, %v743
      %v766 = vpack.c.bf16 %v746, %v746
      %v767 = vpack.c.bf16 %v749, %v749
      %v768 = vpack.c.bf16 %v752, %v752
      %v769 = vpack.c.bf16 %v755, %v755
      %v770 = vpack.c.bf16 %v758, %v758
      %v771 = vpack.c.bf16 %v761, %v761
      %v772 = vpack.c.bf16 %v764, %v764
      %v773 = vld [vmem:[%s9] sm:$0x7]
      %v782 = vunpack.c.l.b16 %v765
      %v783 = vunpack.c.l.b16 %v766
      %v784 = vunpack.c.l.b16 %v767
      %v785 = vunpack.c.l.b16 %v768
      %v786 = vunpack.c.l.b16 %v769
      %v787 = vunpack.c.l.b16 %v770
      %v788 = vunpack.c.l.b16 %v771
      %v789 = vunpack.c.l.b16 %v772
      %v790 = vlaneseq
      %v791 = vand.u32 %v790, 127
      %v792 = vlaneseq
      %v793 = vshrl.u32 %v792, 7
      %v794 = vsub.s32 %v791, %v793
      %v795 = vrot.slane %v782, %v794
      %v796 = vlaneseq
      %v797 = vshrl.u32 %v796, 7
      %v798 = vsub.s32 %v791, %v797
      %v799 = vrot.slane %v783, %v798
      %v800 = vlaneseq
      %v801 = vshrl.u32 %v800, 7
      %v802 = vsub.s32 %v791, %v801
      %v803 = vrot.slane %v784, %v802
      %v804 = vlaneseq
      %v805 = vshrl.u32 %v804, 7
      %v806 = vsub.s32 %v791, %v805
      %v807 = vrot.slane %v785, %v806
      %v808 = vlaneseq
      %v809 = vshrl.u32 %v808, 7
      %v810 = vsub.s32 %v791, %v809
      %v811 = vrot.slane %v786, %v810
      %v812 = vlaneseq
      %v813 = vshrl.u32 %v812, 7
      %v814 = vsub.s32 %v791, %v813
      %v815 = vrot.slane %v787, %v814
      %v816 = vlaneseq
      %v817 = vshrl.u32 %v816, 7
      %v818 = vsub.s32 %v791, %v817
      %v819 = vrot.slane %v788, %v818
      %v820 = vlaneseq
      %v821 = vshrl.u32 %v820, 7
      %v822 = vsub.s32 %v791, %v821
      %v823 = vrot.slane %v789, %v822
      %vm824 = vcmask 1041409
      %v825 = vsel %vm824, %v799, %v795
      %vm826 = vcmask 1042434
      %v827 = vsel %vm826, %v803, %v825
      %vm828 = vcmask 1043459
      %v829 = vsel %vm828, %v807, %v827
      %vm830 = vcmask 1044484
      %v831 = vsel %vm830, %v811, %v829
      %vm832 = vcmask 1045509
      %v833 = vsel %vm832, %v815, %v831
      %vm834 = vcmask 1046534
      %v835 = vsel %vm834, %v819, %v833
      %vm836 = vcmask 1047559
      %v837 = vsel %vm836, %v823, %v835
      %v838 = vpack.c.b16 %v837, %v837
      %vm839 = vcmask 39936
      %v841 = vsel %vm839, %v838, 0
      %vm843 = vcmask 1041408
      %vm844 = vcmask 1042432
      %v845 = vsel %vm843, 4294967295, 65535
      %v846 = vsel %vm844, %v845, 0
      %v848 = vand.u32 %v773, %v846
      %850 = vmatprep.subr.bf16.mxu0 0
      %851 = vmatpush1.bf16.msra.mxu0 %v848
      %852 = vmatprep.subr.bf16.mxu0 0
      %853 = vmatpush1.bf16.msra.mxu0 0
      %854 = vmatprep.subr.bf16.mxu0 0
      %855 = vmatpush1.bf16.msra.mxu0 0
      %856 = vmatprep.subr.bf16.mxu0 0
      %857 = vmatpush1.bf16.msra.mxu0 0
      %858 = vmatprep.subr.bf16.mxu0 0
      %859 = vmatpush1.bf16.msra.mxu0 0
      %860 = vmatprep.subr.bf16.mxu0 0
      %861 = vmatpush1.bf16.msra.mxu0 0
      %862 = vmatprep.subr.bf16.mxu0 0
      %863 = vmatpush1.bf16.msra.mxu0 0
      %864 = vmatprep.subr.bf16.mxu0 0
      %865 = vmatpush1.bf16.msra.mxu0 0
      %866 = vmatprep.subr.bf16.mxu0 0
      %867 = vmatpush1.bf16.msra.mxu0 0
      %868 = vmatprep.subr.bf16.mxu0 0
      %869 = vmatpush1.bf16.msra.mxu0 0
      %870 = vmatprep.subr.bf16.mxu0 0
      %871 = vmatpush1.bf16.msra.mxu0 0
      %872 = vmatprep.subr.bf16.mxu0 0
      %873 = vmatpush1.bf16.msra.mxu0 0
      %874 = vmatprep.subr.bf16.mxu0 0
      %875 = vmatpush1.bf16.msra.mxu0 0
      %876 = vmatprep.subr.bf16.mxu0 0
      %877 = vmatpush1.bf16.msra.mxu0 0
      %878 = vmatprep.subr.bf16.mxu0 0
      %879 = vmatpush1.bf16.msra.mxu0 0
      %880 = vmatprep.subr.bf16.mxu0 0
      %881 = vmatpush1.bf16.msra.mxu0 0
      %882 = vmatprep.mubr.bf16.mxu0 0
      %883 = vmatmul.mubr.bf16.gmra.mrb[0].mxu0 %v841
      %v884 = vpop.f32.mrb[0].mxu0
      %v885 = vadd.f32 0.0, %v884
      %v886 = vpop.f32.mrb[0].mxu0
      %v887 = vpop.f32.mrb[0].mxu0
      %v888 = vpop.f32.mrb[0].mxu0
      %889 = vdwg.mxu0
      %v891 = vsel %vm619, %v631, 0
      %vm893 = vcmask 1043456
      %v895 = vsel %vm893, %v633, 0
      %897 = vmatprep.subr.bf16.mxu0 0
      %898 = vmatpush1.bf16.msra.mxu0 %v895
      %899 = vmatprep.subr.bf16.mxu0 0
      %900 = vmatpush1.bf16.msra.mxu0 0
      %901 = vmatprep.subr.bf16.mxu0 0
      %902 = vmatpush1.bf16.msra.mxu0 0
      %903 = vmatprep.subr.bf16.mxu0 0
      %904 = vmatpush1.bf16.msra.mxu0 0
      %905 = vmatprep.subr.bf16.mxu0 0
      %906 = vmatpush1.bf16.msra.mxu0 0
      %907 = vmatprep.subr.bf16.mxu0 0
      %908 = vmatpush1.bf16.msra.mxu0 0
      %909 = vmatprep.subr.bf16.mxu0 0
      %910 = vmatpush1.bf16.msra.mxu0 0
      %911 = vmatprep.subr.bf16.mxu0 0
      %912 = vmatpush1.bf16.msra.mxu0 0
      %913 = vmatprep.subr.bf16.mxu0 0
      %914 = vmatpush1.bf16.msra.mxu0 0
      %915 = vmatprep.subr.bf16.mxu0 0
      %916 = vmatpush1.bf16.msra.mxu0 0
      %917 = vmatprep.subr.bf16.mxu0 0
      %918 = vmatpush1.bf16.msra.mxu0 0
      %919 = vmatprep.subr.bf16.mxu0 0
      %920 = vmatpush1.bf16.msra.mxu0 0
      %921 = vmatprep.subr.bf16.mxu0 0
      %922 = vmatpush1.bf16.msra.mxu0 0
      %923 = vmatprep.subr.bf16.mxu0 0
      %924 = vmatpush1.bf16.msra.mxu0 0
      %925 = vmatprep.subr.bf16.mxu0 0
      %926 = vmatpush1.bf16.msra.mxu0 0
      %927 = vmatprep.subr.bf16.mxu0 0
      %928 = vmatpush1.bf16.msra.mxu0 0
      %929 = vmatprep.mubr.bf16.mxu0 0
      %930 = vmatmul.mubr.bf16.gmra.mrb[0].mxu0 %v891
      %v931 = vpop.f32.mrb[0].mxu0
      %v932 = vadd.f32 %v885, %v931
      %v933 = vpop.f32.mrb[0].mxu0
      %v934 = vpop.f32.mrb[0].mxu0
      %v935 = vpop.f32.mrb[0].mxu0
      %936 = vdwg.mxu0
      %937 = vst.msk [vmem:[%s422] sm:$0xff] %vm449, %v932
      %p938 = scmp.lt.s32.totalorder %s21, 1
      %s939 = scalar_select %p938, %s21, 1
      %s940 = smul.addr %s939, 8
      %s941 = scalar_lea.vmem %s10, %s940
      // Predicated region
      $region61: #{qaeasyconcept_forward.36} parent=59 // pred_check
        %p942 = pneg %p274
      $region62: #{qaeasyconcept_forward.36} parent=59 // pred_check_branch
        %944 = sbr.rel (%p942) target = $region64
      $region63: #{qaeasyconcept_forward.36} parent=59 // pred_region
        _
      $region64: #{qaeasyconcept_forward.36} parent=59 // pred_fallthru
        _
    $region60: #{qaeasyconcept_forward.36} parent=5 // pred_fallthru
      _
    %p945 = scmp.le.s32.totalorder 2, %s16
    // Predicated region
    $region65: #{qaeasyconcept_forward.36} parent=5 // pred_check
      %p946 = pneg %p945
    $region66: #{qaeasyconcept_forward.36} parent=5 // pred_check_branch
      %948 = sbr.rel (%p946) target = $region68
    $region67: #{qaeasyconcept_forward.36} parent=5 // pred_region
      %s949 = ssub.s32 %s16, 2
      // Predicated region
      $region69: #{qaeasyconcept_forward.36} parent=67 // pred_check
        %p950 = pneg %p280
      $region70: #{qaeasyconcept_forward.36} parent=67 // pred_check_branch
        %952 = sbr.rel (%p950) target = $region72
      $region71: #{qaeasyconcept_forward.36} parent=67 // pred_region
        %p953 = scmp.lt.s32.totalorder %s22, 1
        %s954 = scalar_select %p953, %s22, 1
        %s955 = smul.addr %s954, 8
        %s956 = scalar_lea.vmem %s10, %s955
      $region72: #{qaeasyconcept_forward.36} parent=67 // pred_fallthru
        _
    $region68: #{qaeasyconcept_forward.36} parent=5 // pred_fallthru
      _
  $region6: #{qaeasyconcept_forward.36} parent=0 // loop_footer
    %s20 = sadd.s32 1, %s16
  $region7: #{qaeasyconcept_forward.36} parent=0 // loop_footer_branch
    %15 = sbr.rel target = $region3
  $region8: #{qaeasyconcept_forward.36} parent=0 // loop_exit
    _

// kernel: qaeasyconcept_forward.48
$region0: #{qaeasyconcept_forward.48}
  #allocation0 [shape = 'u32[]', space=smem, size = 0x4, offset = 0x4, fixed_abs, tag = 'smem constant byte address 0x4 - core index']
  #allocation1 [shape = 'u32[144,128]{1,0:T(1,128)}', space=vmem, size = 0x12000, scoped, tag = 'internal scratch']
  #allocation2 [shape = 'f32[1,1]{1,0:T(1,128)S(1)}', space=vmem, size = 0x200, scoped, tag = 'scoped memory for qaeasyconcept_forward.48']
  %s0 = inlined_call_operand.vmem [shape: f32[2,8,32], index: 0, kind: input, shape index: {}]
  %s1 = inlined_call_operand.vmem [shape: f32[2,1,8], index: 1, kind: input, shape index: {}]
  %s2 = inlined_call_operand.vmem [shape: bf16[32,32], index: 2, kind: input, shape index: {}]
  %s3 = inlined_call_operand.vmem [shape: f32[1,32], index: 3, kind: input, shape index: {}]
  %s4 = inlined_call_operand.vmem [shape: f32[1,32], index: 4, kind: input, shape index: {}]
  %s5 = inlined_call_operand.<no memory space> [shape: f32[1,1], index: 5, kind: input, shape index: {}]
  %s6 = inlined_call_operand.vmem [shape: f32[2,1,32], index: 6, kind: output, shape index: {0}]
  %s7 = inlined_call_operand.vmem [shape: f32[2,1,32], index: 7, kind: output, shape index: {1}]
  %8 = xla_tuple %s6, %s7
  %s9 = sld [smem:[#allocation0]]
  $region65: #{qaeasyconcept_forward.48} parent=0
    _
  %s11 = ssub.s32 1, %s9
  %s12 = scalar_select 0, %s11, %s9
  %v13 = vstv %s5
  %14 = vst [vmem:[#allocation2] sm:$0x1] %v13
  loop: start=0, step=1, limit=4
  $region2: #{qaeasyconcept_forward.48} parent=0 // loop_pre_header
    _
  $region3: #{qaeasyconcept_forward.48} parent=0 // loop_header
    %s16 = sphi 0, %s20
    %p17 = scmp.ge.s32.totalorder %s16, 4
    %s26 = sphi 0, %s28
    %s29 = sphi 0, %s26
    %s30 = sphi 0, %s29
    %s46 = sphi 0, %s30
    %s52 = sphi 0, %s54
    %s55 = sphi 0, %s52
    %s56 = sphi 0, %s55
    %s72 = sphi 0, %s56
    %s76 = sphi 0, %s76
    %s78 = sphi 0, %s76
    %s79 = sphi 0, %s78
    %s93 = sphi 0, %s79
    %s97 = sphi 0, %s97
    %s99 = sphi 0, %s97
    %s100 = sphi 0, %s99
    %s114 = sphi 0, %s100
    %s118 = sphi 0, %s118
    %s120 = sphi 0, %s118
    %s121 = sphi 0, %s120
    %s135 = sphi 0, %s121
    %s139 = sphi 0, %s139
    %s141 = sphi 0, %s139
    %s142 = sphi 0, %s141
    %s156 = sphi 0, %s142
    %s162 = sphi 0, %s164
    %s165 = sphi 0, %s162
    %s166 = sphi 0, %s165
    %s182 = sphi 0, %s166
    %s188 = sphi 0, %s190
    %s191 = sphi 0, %s188
    %s192 = sphi 0, %s191
    %s208 = sphi 0, %s192
  $region4: #{qaeasyconcept_forward.48} parent=0 // loop_header_branch
    %19 = sbr.rel (%p17) target = $region8
  $region5: #{qaeasyconcept_forward.48} parent=0 // loop_body
    %s21 = ssub.s32 %s16, 1
    %s22 = ssub.s32 %s16, 2
    %s23 = sadd.s32 %s16, 1
    %s24 = ssub.s32 %s16, %s23
    %p25 = scmp.eq.s32.totalorder %s24, 0
    %s27 = sadd.s32 %s26, 1
    %s28 = scalar_select %p25, %s26, %s27
    %p31 = pneg %p25
    %p32 = scmp.eq.s32.totalorder %s16, 1
    %p33 = por %p31, %p32
    %p34 = scmp.ne.s32.totalorder %s26, %s29
    %p35 = scmp.eq.s32.totalorder %s16, 0
    %p36 = por %p34, %p35
    %p37 = scmp.ne.s32.totalorder %s26, %s29
    %p38 = scmp.eq.s32.totalorder %s21, 1
    %p39 = por %p37, %p38
    %p40 = scmp.ne.s32.totalorder %s29, %s30
    %p41 = scmp.eq.s32.totalorder %s21, 0
    %p42 = por %p40, %p41
    %p43 = scmp.ne.s32.totalorder %s29, %s30
    %p44 = scmp.eq.s32.totalorder %s22, 1
    %p45 = por %p43, %p44
    %p47 = scmp.ne.s32.totalorder %s30, %s46
    %p48 = scmp.eq.s32.totalorder %s22, 0
    %p49 = por %p47, %p48
    %s50 = ssub.s32 %s16, %s23
    %p51 = scmp.eq.s32.totalorder %s50, 0
    %s53 = sadd.s32 %s52, 1
    %s54 = scalar_select %p51, %s52, %s53
    %p57 = pneg %p51
    %p58 = scmp.eq.s32.totalorder %s16, 1
    %p59 = por %p57, %p58
    %p60 = scmp.ne.s32.totalorder %s52, %s55
    %p61 = scmp.eq.s32.totalorder %s16, 0
    %p62 = por %p60, %p61
    %p63 = scmp.ne.s32.totalorder %s52, %s55
    %p64 = scmp.eq.s32.totalorder %s21, 1
    %p65 = por %p63, %p64
    %p66 = scmp.ne.s32.totalorder %s55, %s56
    %p67 = scmp.eq.s32.totalorder %s21, 0
    %p68 = por %p66, %p67
    %p69 = scmp.ne.s32.totalorder %s55, %s56
    %p70 = scmp.eq.s32.totalorder %s22, 1
    %p71 = por %p69, %p70
    %p73 = scmp.ne.s32.totalorder %s56, %s72
    %p74 = scmp.eq.s32.totalorder %s22, 0
    %p75 = por %p73, %p74
    %s77 = sadd.s32 %s76, 1
    %p80 = scmp.eq.s32.totalorder %s16, 1
    %p81 = scmp.ne.s32.totalorder %s76, %s78
    %p82 = scmp.eq.s32.totalorder %s16, 0
    %p83 = por %p81, %p82
    %p84 = scmp.ne.s32.totalorder %s76, %s78
    %p85 = scmp.eq.s32.totalorder %s21, 1
    %p86 = por %p84, %p85
    %p87 = scmp.ne.s32.totalorder %s78, %s79
    %p88 = scmp.eq.s32.totalorder %s21, 0
    %p89 = por %p87, %p88
    %p90 = scmp.ne.s32.totalorder %s78, %s79
    %p91 = scmp.eq.s32.totalorder %s22, 1
    %p92 = por %p90, %p91
    %p94 = scmp.ne.s32.totalorder %s79, %s93
    %p95 = scmp.eq.s32.totalorder %s22, 0
    %p96 = por %p94, %p95
    %s98 = sadd.s32 %s97, 1
    %p101 = scmp.eq.s32.totalorder %s16, 1
    %p102 = scmp.ne.s32.totalorder %s97, %s99
    %p103 = scmp.eq.s32.totalorder %s16, 0
    %p104 = por %p102, %p103
    %p105 = scmp.ne.s32.totalorder %s97, %s99
    %p106 = scmp.eq.s32.totalorder %s21, 1
    %p107 = por %p105, %p106
    %p108 = scmp.ne.s32.totalorder %s99, %s100
    %p109 = scmp.eq.s32.totalorder %s21, 0
    %p110 = por %p108, %p109
    %p111 = scmp.ne.s32.totalorder %s99, %s100
    %p112 = scmp.eq.s32.totalorder %s22, 1
    %p113 = por %p111, %p112
    %p115 = scmp.ne.s32.totalorder %s100, %s114
    %p116 = scmp.eq.s32.totalorder %s22, 0
    %p117 = por %p115, %p116
    %s119 = sadd.s32 %s118, 1
    %p122 = scmp.eq.s32.totalorder %s16, 1
    %p123 = scmp.ne.s32.totalorder %s118, %s120
    %p124 = scmp.eq.s32.totalorder %s16, 0
    %p125 = por %p123, %p124
    %p126 = scmp.ne.s32.totalorder %s118, %s120
    %p127 = scmp.eq.s32.totalorder %s21, 1
    %p128 = por %p126, %p127
    %p129 = scmp.ne.s32.totalorder %s120, %s121
    %p130 = scmp.eq.s32.totalorder %s21, 0
    %p131 = por %p129, %p130
    %p132 = scmp.ne.s32.totalorder %s120, %s121
    %p133 = scmp.eq.s32.totalorder %s22, 1
    %p134 = por %p132, %p133
    %p136 = scmp.ne.s32.totalorder %s121, %s135
    %p137 = scmp.eq.s32.totalorder %s22, 0
    %p138 = por %p136, %p137
    %s140 = sadd.s32 %s139, 1
    %p143 = scmp.eq.s32.totalorder %s16, 1
    %p144 = scmp.ne.s32.totalorder %s139, %s141
    %p145 = scmp.eq.s32.totalorder %s16, 0
    %p146 = por %p144, %p145
    %p147 = scmp.ne.s32.totalorder %s139, %s141
    %p148 = scmp.eq.s32.totalorder %s21, 1
    %p149 = por %p147, %p148
    %p150 = scmp.ne.s32.totalorder %s141, %s142
    %p151 = scmp.eq.s32.totalorder %s21, 0
    %p152 = por %p150, %p151
    %p153 = scmp.ne.s32.totalorder %s141, %s142
    %p154 = scmp.eq.s32.totalorder %s22, 1
    %p155 = por %p153, %p154
    %p157 = scmp.ne.s32.totalorder %s142, %s156
    %p158 = scmp.eq.s32.totalorder %s22, 0
    %p159 = por %p157, %p158
    %s160 = ssub.s32 %s16, %s23
    %p161 = scmp.eq.s32.totalorder %s160, 0
    %s163 = sadd.s32 %s162, 1
    %s164 = scalar_select %p161, %s162, %s163
    %p167 = pneg %p161
    %p168 = scmp.eq.s32.totalorder %s16, 1
    %p169 = por %p167, %p168
    %p170 = scmp.ne.s32.totalorder %s162, %s165
    %p171 = scmp.eq.s32.totalorder %s16, 0
    %p172 = por %p170, %p171
    %p173 = scmp.ne.s32.totalorder %s162, %s165
    %p174 = scmp.eq.s32.totalorder %s21, 1
    %p175 = por %p173, %p174
    %p176 = scmp.ne.s32.totalorder %s165, %s166
    %p177 = scmp.eq.s32.totalorder %s21, 0
    %p178 = por %p176, %p177
    %p179 = scmp.ne.s32.totalorder %s165, %s166
    %p180 = scmp.eq.s32.totalorder %s22, 1
    %p181 = por %p179, %p180
    %p183 = scmp.ne.s32.totalorder %s166, %s182
    %p184 = scmp.eq.s32.totalorder %s22, 0
    %p185 = por %p183, %p184
    %s186 = ssub.s32 %s16, %s23
    %p187 = scmp.eq.s32.totalorder %s186, 0
    %s189 = sadd.s32 %s188, 1
    %s190 = scalar_select %p187, %s188, %s189
    %p193 = pneg %p187
    %p194 = scmp.eq.s32.totalorder %s16, 1
    %p195 = por %p193, %p194
    %p196 = scmp.ne.s32.totalorder %s188, %s191
    %p197 = scmp.eq.s32.totalorder %s16, 0
    %p198 = por %p196, %p197
    %p199 = scmp.ne.s32.totalorder %s188, %s191
    %p200 = scmp.eq.s32.totalorder %s21, 1
    %p201 = por %p199, %p200
    %p202 = scmp.ne.s32.totalorder %s191, %s192
    %p203 = scmp.eq.s32.totalorder %s21, 0
    %p204 = por %p202, %p203
    %p205 = scmp.ne.s32.totalorder %s191, %s192
    %p206 = scmp.eq.s32.totalorder %s22, 1
    %p207 = por %p205, %p206
    %p209 = scmp.ne.s32.totalorder %s192, %s208
    %p210 = scmp.eq.s32.totalorder %s22, 0
    %p211 = por %p209, %p210
    %p212 = scmp.le.s32.totalorder 1, %s16
    %p213 = scmp.lt.s32.totalorder %s16, 3
    %p214 = pnand %p212, %p213
    %p215 = pneg %p214
    // Predicated region
    $region9: #{qaeasyconcept_forward.48} parent=5 // pred_check
      _
    $region10: #{qaeasyconcept_forward.48} parent=5 // pred_check_branch
      %217 = sbr.rel (%p214) target = $region12
    $region11: #{qaeasyconcept_forward.48} parent=5 // pred_region
      %s218 = ssub.s32 %s16, 1
      // Predicated region
      $region13: #{qaeasyconcept_forward.48} parent=11 // pred_check
        %p219 = pneg %p89
      $region14: #{qaeasyconcept_forward.48} parent=11 // pred_check_branch
        %221 = sbr.rel (%p219) target = $region16
      $region15: #{qaeasyconcept_forward.48} parent=11 // pred_region
        _
      $region16: #{qaeasyconcept_forward.48} parent=11 // pred_fallthru
        _
      // Predicated region
      $region17: #{qaeasyconcept_forward.48} parent=11 // pred_check
        %p222 = pneg %p110
      $region18: #{qaeasyconcept_forward.48} parent=11 // pred_check_branch
        %224 = sbr.rel (%p222) target = $region20
      $region19: #{qaeasyconcept_forward.48} parent=11 // pred_region
        _
      $region20: #{qaeasyconcept_forward.48} parent=11 // pred_fallthru
        _
      // Predicated region
      $region21: #{qaeasyconcept_forward.48} parent=11 // pred_check
        %p225 = pneg %p131
      $region22: #{qaeasyconcept_forward.48} parent=11 // pred_check_branch
        %227 = sbr.rel (%p225) target = $region24
      $region23: #{qaeasyconcept_forward.48} parent=11 // pred_region
        _
      $region24: #{qaeasyconcept_forward.48} parent=11 // pred_fallthru
        _
      // Predicated region
      $region25: #{qaeasyconcept_forward.48} parent=11 // pred_check
        %p228 = pneg %p152
      $region26: #{qaeasyconcept_forward.48} parent=11 // pred_check_branch
        %230 = sbr.rel (%p228) target = $region28
      $region27: #{qaeasyconcept_forward.48} parent=11 // pred_region
        _
      $region28: #{qaeasyconcept_forward.48} parent=11 // pred_fallthru
        _
    $region12: #{qaeasyconcept_forward.48} parent=5 // pred_fallthru
      _
    %p231 = scmp.lt.s32.totalorder %s16, 2
    // Predicated region
    $region29: #{qaeasyconcept_forward.48} parent=5 // pred_check
      %p232 = pneg %p231
    $region30: #{qaeasyconcept_forward.48} parent=5 // pred_check_branch
      %234 = sbr.rel (%p232) target = $region32
    $region31: #{qaeasyconcept_forward.48} parent=5 // pred_region
      // Predicated region
      $region33: #{qaeasyconcept_forward.48} parent=31 // pred_check
        %p235 = pneg %p36
      $region34: #{qaeasyconcept_forward.48} parent=31 // pred_check_branch
        %237 = sbr.rel (%p235) target = $region36
      $region35: #{qaeasyconcept_forward.48} parent=31 // pred_region
        %p238 = scmp.lt.s32.totalorder %s16, 1
        %s239 = scalar_select %p238, %s16, 1
        %s240 = smul.addr %s239, 8
        %s241 = scalar_lea.vmem %s0, %s240
      $region36: #{qaeasyconcept_forward.48} parent=31 // pred_fallthru
        _
      // Predicated region
      $region37: #{qaeasyconcept_forward.48} parent=31 // pred_check
        %p242 = pneg %p62
      $region38: #{qaeasyconcept_forward.48} parent=31 // pred_check_branch
        %244 = sbr.rel (%p242) target = $region40
      $region39: #{qaeasyconcept_forward.48} parent=31 // pred_region
        %p245 = scmp.lt.s32.totalorder %s16, 1
        %s246 = scalar_select %p245, %s16, 1
        %s247 = scalar_lea.vmem %s1, %s246
      $region40: #{qaeasyconcept_forward.48} parent=31 // pred_fallthru
        _
    $region32: #{qaeasyconcept_forward.48} parent=5 // pred_fallthru
      _
    %p248 = scmp.le.s32.totalorder 1, %s16
    %p249 = scmp.lt.s32.totalorder %s16, 3
    %p250 = pnand %p248, %p249
    %p251 = pneg %p250
    // Predicated region
    $region41: #{qaeasyconcept_forward.48} parent=5 // pred_check
      _
    $region42: #{qaeasyconcept_forward.48} parent=5 // pred_check_branch
      %253 = sbr.rel (%p250) target = $region44
    $region43: #{qaeasyconcept_forward.48} parent=5 // pred_region
      %s254 = ssub.s32 %s16, 1
      %p255 = scmp.lt.s32.totalorder %s21, 1
      %s256 = scalar_select %p255, %s21, 1
      %s257 = smul.addr %s256, 8
      %s258 = scalar_lea.vmem %s0, %s257
      %p259 = pneg %p42
      %p260 = pneg %p39
      %p261 = scmp.lt.s32.totalorder %s21, 1
      %s262 = scalar_select %p261, %s21, 1
      %s263 = scalar_lea.vmem %s1, %s262
      %p264 = pneg %p68
      %p265 = pneg %p65
      %p266 = pneg %p89
      %p267 = pneg %p86
      %p268 = pneg %p110
      %p269 = pneg %p107
      %p270 = pneg %p131
      %p271 = pneg %p128
      %p272 = pneg %p152
      %p273 = pneg %p149
      %p274 = pneg %p178
      %p275 = pneg %p175
      %p276 = scmp.lt.s32.totalorder %s21, 1
      %s277 = scalar_select %p276, %s21, 1
      %s278 = scalar_lea.vmem %s6, %s277
      %p279 = pneg %p204
      %p280 = pneg %p201
      %p281 = scmp.lt.s32.totalorder %s21, 1
      %s282 = scalar_select %p281, %s21, 1
      %s283 = scalar_lea.vmem %s7, %s282
      %p284 = scmp.lt.s32.totalorder %s21, 1
      %s285 = scalar_select %p284, %s21, 1
      %s286 = smul.addr %s285, 8
      %s287 = scalar_lea.vmem %s0, %s286
      %p288 = scmp.lt.s32.totalorder %s21, 1
      %s289 = scalar_select %p288, %s21, 1
      %s290 = scalar_lea.vmem %s1, %s289
      %p291 = scmp.lt.s32.totalorder %s21, 1
      %s292 = scalar_select %p291, %s21, 1
      %s293 = scalar_lea.vmem %s6, %s292
      %p294 = scmp.lt.s32.totalorder %s21, 1
      %s295 = scalar_select %p294, %s21, 1
      %s296 = scalar_lea.vmem %s7, %s295
      %v298 = vld [vmem:[%s287] sm:$0xff]
      %v299 = vpack.c.bf16 %v298, %v298
      %v300 = vld [vmem:[%s2] sm:$0xf]
      %v301 = vld [vmem:[%s2 + $0x4] sm:$0xf]
      %v302 = vld [vmem:[%s2 + $0x8] sm:$0xf]
      %v303 = vld [vmem:[%s2 + $0xc] sm:$0xf]
      %v304 = vld [vmem:[%s3] sm:$0x1]
      %v306 = vlaneseq
      %v307 = vshrl.u32 %v306, 7
      %v308 = vsub.s32 0, %v307
      %v309 = vrot.slane %v304, %v308
      %v315 = vunpack.c.l.b16 %v300
      %v316 = vunpack.c.l.b16 %v301
      %v317 = vunpack.c.l.b16 %v302
      %v318 = vunpack.c.l.b16 %v303
      %v319 = vpack.c.b16 %v316, %v315
      %v320 = vpack.c.b16 %v318, %v317
      %vm323 = vcmask 261120
      %v325 = vsel %vm323, %v299, 0
      %327 = vmatprep.subr.bf16.mxu0 0
      %328 = vmatpush1.bf16.msra.mxu0 %v319
      %329 = vmatprep.subr.bf16.mxu0 0
      %330 = vmatpush1.bf16.msra.mxu0 %v320
      %331 = vmatprep.subr.bf16.mxu0 0
      %332 = vmatpush1.bf16.msra.mxu0 0
      %333 = vmatprep.subr.bf16.mxu0 0
      %334 = vmatpush1.bf16.msra.mxu0 0
      %335 = vmatprep.subr.bf16.mxu0 0
      %336 = vmatpush1.bf16.msra.mxu0 0
      %337 = vmatprep.subr.bf16.mxu0 0
      %338 = vmatpush1.bf16.msra.mxu0 0
      %339 = vmatprep.subr.bf16.mxu0 0
      %340 = vmatpush1.bf16.msra.mxu0 0
      %341 = vmatprep.subr.bf16.mxu0 0
      %342 = vmatpush1.bf16.msra.mxu0 0
      %343 = vmatprep.subr.bf16.mxu0 0
      %344 = vmatpush1.bf16.msra.mxu0 0
      %345 = vmatprep.subr.bf16.mxu0 0
      %346 = vmatpush1.bf16.msra.mxu0 0
      %347 = vmatprep.subr.bf16.mxu0 0
      %348 = vmatpush1.bf16.msra.mxu0 0
      %349 = vmatprep.subr.bf16.mxu0 0
      %350 = vmatpush1.bf16.msra.mxu0 0
      %351 = vmatprep.subr.bf16.mxu0 0
      %352 = vmatpush1.bf16.msra.mxu0 0
      %353 = vmatprep.subr.bf16.mxu0 0
      %354 = vmatpush1.bf16.msra.mxu0 0
      %355 = vmatprep.subr.bf16.mxu0 0
      %356 = vmatpush1.bf16.msra.mxu0 0
      %357 = vmatprep.subr.bf16.mxu0 0
      %358 = vmatpush1.bf16.msra.mxu0 0
      %359 = vmatprep.mubr.bf16.mxu0 0
      %360 = vmatmul.mubr.bf16.gmra.mrb[0].mxu0 %v325
      %v361 = vpop.f32.mrb[0].mxu0
      %v362 = vadd.f32 %v309, %v361
      %v363 = vpop.f32.mrb[0].mxu0
      %v364 = vpop.f32.mrb[0].mxu0
      %v365 = vpop.f32.mrb[0].mxu0
      %366 = vdwg.mxu0
      %v367 = vmul.f32 %v362, 0.5
      %v368 = vrcp.pop 1.4142135
      %v369 = vmul.f32 %v362, %v368
      %v370 = vand.u32 2147483647, %v369
      %v371 = vmul.f32 %v370, 0.3275911
      %v372 = vadd.f32 %v371, 1.0
      %v373 = vrcp.pop %v372
      %v374 = vmul.f32 1.0, %v373
      %v375 = vmul.f32 %v374, 1.0614054
      %v376 = vadd.f32 %v375, -1.4531521
      %v377 = vmul.f32 %v376, %v374
      %v378 = vadd.f32 %v377, 1.4214138
      %v379 = vmul.f32 %v378, %v374
      %v380 = vadd.f32 %v379, -0.28449672
      %v381 = vmul.f32 %v380, %v374
      %v382 = vadd.f32 %v381, 0.2548296
      %v383 = vmul.f32 %v382, %v374
      %v384 = vsub.f32 0.0, %v370
      %v385 = vmul.f32 %v384, %v370
      %v386 = vmul.f32 %v385, 1.442695
      %v387 = vpow.pop %v386
      %v388 = vmul.f32 %v383, %v387
      %v389 = vsub.f32 1.0, %v388
      %vm390 = vcmp.lt.f32.partialorder %v369, 0.0
      %v391 = vsub.f32 0.0, %v389
      %v392 = vsel %vm390, %v391, %v389
      %v393 = vadd.f32 %v392, 1.0
      %v394 = vmul.f32 %v367, %v393
      %v395 = vld [vmem:[%s4] sm:$0x1]
      %v397 = vlaneseq
      %v398 = vshrl.u32 %v397, 7
      %v399 = vsub.s32 0, %v398
      %v400 = vrot.slane %v395, %v399
      %v402 = vmul.f32 %v394, %v400
      %v403 = vsel %vm323, %v402, 0.0
      %404 = vadd.xlane.f32.xlu0 %v403
      %v405 = vpop.xlane.xlu0 %404
      %v406 = vld [vmem:[#allocation2] sm:$0x1]
      %408 = vset.pattern.permute.xlu0 0
      %409 = vperm.xlu0 %408, %v406
      %v410 = vpop.permute.xlu0 %409
      %v412 = vlaneseq
      %v413 = vshrl.u32 %v412, 7
      %v414 = vsub.s32 0, %v413
      %v415 = vrot.slane %v410, %v414
      %v416 = vadd.f32 %v405, %v415
      %v417 = vld [vmem:[%s290] sm:$0x1]
      %vm418 = vcmp.eq.f32.partialorder %v417, 0.0
      %v420 = vlaneseq
      %v421 = vshrl.u32 %v420, 7
      %v422 = vsub.s32 0, %v421
      %v423 = vrot.slane %v416, %v422
      %v424 = vlaneseq
      %v425 = vshrl.u32 %v424, 7
      %v426 = vsub.s32 1, %v425
      %v427 = vrot.slane %v416, %v426
      %v428 = vlaneseq
      %v429 = vshrl.u32 %v428, 7
      %v430 = vsub.s32 2, %v429
      %v431 = vrot.slane %v416, %v430
      %v432 = vlaneseq
      %v433 = vshrl.u32 %v432, 7
      %v434 = vsub.s32 3, %v433
      %v435 = vrot.slane %v416, %v434
      %v436 = vlaneseq
      %v437 = vshrl.u32 %v436, 7
      %v438 = vsub.s32 4, %v437
      %v439 = vrot.slane %v416, %v438
      %v440 = vlaneseq
      %v441 = vshrl.u32 %v440, 7
      %v442 = vsub.s32 5, %v441
      %v443 = vrot.slane %v416, %v442
      %v444 = vlaneseq
      %v445 = vshrl.u32 %v444, 7
      %v446 = vsub.s32 6, %v445
      %v447 = vrot.slane %v416, %v446
      %v448 = vlaneseq
      %v449 = vshrl.u32 %v448, 7
      %v450 = vsub.s32 7, %v449
      %v451 = vrot.slane %v416, %v450
      %v452 = vcombine.low %v423, %v427
      %v453 = vcombine.low %v431, %v435
      %v454 = vcombine.low %v439, %v443
      %v455 = vcombine.low %v447, %v451
      %v457 = vunpack.c.l.s4 1966171168
      %v458 = vunpack.c.0.s8 %v457
      %v459 = vlaneseq
      %v460 = vshrl.u32 %v459, 7
      %v461 = vsub.s32 %v458, %v460
      %v462 = vrot.slane %v452, %v461
      %v464 = vunpack.c.l.s4 1966171168
      %v465 = vunpack.c.0.s8 %v464
      %v466 = vlaneseq
      %v467 = vshrl.u32 %v466, 7
      %v468 = vsub.s32 %v465, %v467
      %v469 = vrot.slane %v453, %v468
      %v471 = vunpack.c.l.s4 1966171168
      %v472 = vunpack.c.0.s8 %v471
      %v473 = vlaneseq
      %v474 = vshrl.u32 %v473, 7
      %v475 = vsub.s32 %v472, %v474
      %v476 = vrot.slane %v454, %v475
      %v478 = vunpack.c.l.s4 1966171168
      %v479 = vunpack.c.0.s8 %v478
      %v480 = vlaneseq
      %v481 = vshrl.u32 %v480, 7
      %v482 = vsub.s32 %v479, %v481
      %v483 = vrot.slane %v455, %v482
      %v484 = vcombine.low %v462, %v469
      %v485 = vcombine.low %v476, %v483
      %v487 = vunpack.c.l.s4 1966171168
      %v488 = vunpack.c.0.s8 %v487
      %v489 = vlaneseq
      %v490 = vshrl.u32 %v489, 7
      %v491 = vsub.s32 %v488, %v490
      %v492 = vrot.slane %v484, %v491
      %v494 = vunpack.c.l.s4 1966171168
      %v495 = vunpack.c.0.s8 %v494
      %v496 = vlaneseq
      %v497 = vshrl.u32 %v496, 7
      %v498 = vsub.s32 %v495, %v497
      %v499 = vrot.slane %v485, %v498
      %v500 = vcombine.low %v492, %v499
      %501 = vset.pattern.permute.xlu0 0
      %502 = vperm.xlu0 %501, %v500
      %v503 = vpop.permute.xlu0 %502
      %v504 = vlaneseq
      %v505 = vand.u32 %v504, 127
      %v506 = vlaneseq
      %v507 = vshrl.u32 %v506, 7
      %v508 = vsub.s32 %v505, %v507
      %v509 = vrot.slane %v503, %v508
      %v511 = vunpack.c.l.s4 1966171168
      %v512 = vunpack.c.0.s8 %v511
      %v513 = vlaneseq
      %v514 = vshrl.u32 %v513, 7
      %v515 = vsub.s32 %v512, %v514
      %v516 = vrot.slane %v509, %v515
      %v518 = vunpack.c.l.s4 1966171168
      %v519 = vunpack.c.0.s8 %v518
      %v520 = vlaneseq
      %v521 = vshrl.u32 %v520, 7
      %v522 = vsub.s32 %v519, %v521
      %v523 = vrot.slane %v516, %v522
      %v525 = vsel %vm418, -1e+09, %v523
      %vm526 = vcmask 57344
      %v527 = vsel %vm526, %v525, -inf
      %528 = vmax.xlane.f32.xlu0 %v527
      %v529 = vpop.xlane.xlu0 %528
      %v530 = vsub.f32 %v525, %v529
      %v531 = vmul.f32 %v530, 1.442695
      %v532 = vpow.pop %v531
      %v533 = vsel %vm526, %v532, 0.0
      %534 = vadd.xlane.f32.xlu0 %v533
      %v535 = vpop.xlane.xlu0 %534
      %v536 = vrcp.pop %v535
      %v537 = vmul.f32 %v532, %v536
      %vm538 = vcmask 64512
      %v540 = vsel %vm538, %v537, 0
      %542 = vmatprep.subr.mxu0 0.0
      %543 = vmatpush1.msra.mxu0 %v298
      %544 = vmatprep.subr.mxu0 0.0
      %545 = vmatpush1.msra.mxu0 0.0
      %546 = vmatprep.subr.mxu0 0.0
      %547 = vmatpush1.msra.mxu0 0.0
      %548 = vmatprep.subr.mxu0 0.0
      %549 = vmatpush1.msra.mxu0 0.0
      %550 = vmatprep.subr.mxu0 0.0
      %551 = vmatpush1.msra.mxu0 0.0
      %552 = vmatprep.subr.mxu0 0.0
      %553 = vmatpush1.msra.mxu0 0.0
      %554 = vmatprep.subr.mxu0 0.0
      %555 = vmatpush1.msra.mxu0 0.0
      %556 = vmatprep.subr.mxu0 0.0
      %557 = vmatpush1.msra.mxu0 0.0
      %558 = vmatprep.subr.mxu0 0.0
      %559 = vmatpush1.msra.mxu0 0.0
      %560 = vmatprep.subr.mxu0 0.0
      %561 = vmatpush1.msra.mxu0 0.0
      %562 = vmatprep.subr.mxu0 0.0
      %563 = vmatpush1.msra.mxu0 0.0
      %564 = vmatprep.subr.mxu0 0.0
      %565 = vmatpush1.msra.mxu0 0.0
      %566 = vmatprep.subr.mxu0 0.0
      %567 = vmatpush1.msra.mxu0 0.0
      %568 = vmatprep.subr.mxu0 0.0
      %569 = vmatpush1.msra.mxu0 0.0
      %570 = vmatprep.subr.mxu0 0.0
      %571 = vmatpush1.msra.mxu0 0.0
      %572 = vmatprep.subr.mxu0 0.0
      %573 = vmatpush1.msra.mxu0 0.0
      %574 = vmatprep.subr.mxu0 0.0
      %575 = vmatpush1.msra.mxu0 0.0
      %576 = vmatprep.subr.mxu0 0.0
      %577 = vmatpush1.msra.mxu0 0.0
      %578 = vmatprep.subr.mxu0 0.0
      %579 = vmatpush1.msra.mxu0 0.0
      %580 = vmatprep.subr.mxu0 0.0
      %581 = vmatpush1.msra.mxu0 0.0
      %582 = vmatprep.subr.mxu0 0.0
      %583 = vmatpush1.msra.mxu0 0.0
      %584 = vmatprep.subr.mxu0 0.0
      %585 = vmatpush1.msra.mxu0 0.0
      %586 = vmatprep.subr.mxu0 0.0
      %587 = vmatpush1.msra.mxu0 0.0
      %588 = vmatprep.subr.mxu0 0.0
      %589 = vmatpush1.msra.mxu0 0.0
      %590 = vmatprep.subr.mxu0 0.0
      %591 = vmatpush1.msra.mxu0 0.0
      %592 = vmatprep.subr.mxu0 0.0
      %593 = vmatpush1.msra.mxu0 0.0
      %594 = vmatprep.subr.mxu0 0.0
      %595 = vmatpush1.msra.mxu0 0.0
      %596 = vmatprep.subr.mxu0 0.0
      %597 = vmatpush1.msra.mxu0 0.0
      %598 = vmatprep.subr.mxu0 0.0
      %599 = vmatpush1.msra.mxu0 0.0
      %600 = vmatprep.subr.mxu0 0.0
      %601 = vmatpush1.msra.mxu0 0.0
      %602 = vmatprep.subr.mxu0 0.0
      %603 = vmatpush1.msra.mxu0 0.0
      %604 = vmatprep.subr.mxu0 0.0
      %605 = vmatpush1.msra.mxu0 0.0
      %606 = vmatprep.mubr.f32.mxu0 0.0
      %607 = vmatmul.mubr.f32.gmra.mrb[0].mxu0 %v540
      %v608 = vpop.f32.mrb[0].mxu0
      %v609 = vadd.f32 0.0, %v608
      %v610 = vpop.f32.mrb[0].mxu0
      %611 = vdwg.mxu0
      %vm612 = vcmask 253952
      %613 = vst.msk [vmem:[%s293] sm:$0x1] %vm612, %v609
      %v614 = vsel %vm323, %v298, -inf
      %v615 = vrot.slane %v614, 4
      %v616 = vmax.f32 %v614, %v615
      %v617 = vrot.slane %v616, 2
      %v618 = vmax.f32 %v616, %v617
      %v619 = vrot.slane %v618, 1
      %v620 = vmax.f32 %v618, %v619
      %621 = vst.msk [vmem:[%s296] sm:$0x1] %vm612, %v620
      %p622 = scmp.lt.s32.totalorder %s21, 1
      %s623 = scalar_select %p622, %s21, 1
      %s624 = scalar_lea.vmem %s6, %s623
      %p625 = scmp.lt.s32.totalorder %s21, 1
      %s626 = scalar_select %p625, %s21, 1
      %s627 = scalar_lea.vmem %s7, %s626
      // Predicated region
      $region45: #{qaeasyconcept_forward.48} parent=43 // pred_check
        %p628 = pneg %p175
      $region46: #{qaeasyconcept_forward.48} parent=43 // pred_check_branch
        %630 = sbr.rel (%p628) target = $region48
      $region47: #{qaeasyconcept_forward.48} parent=43 // pred_region
        _
      $region48: #{qaeasyconcept_forward.48} parent=43 // pred_fallthru
        _
      // Predicated region
      $region49: #{qaeasyconcept_forward.48} parent=43 // pred_check
        %p631 = pneg %p201
      $region50: #{qaeasyconcept_forward.48} parent=43 // pred_check_branch
        %633 = sbr.rel (%p631) target = $region52
      $region51: #{qaeasyconcept_forward.48} parent=43 // pred_region
        _
      $region52: #{qaeasyconcept_forward.48} parent=43 // pred_fallthru
        _
    $region44: #{qaeasyconcept_forward.48} parent=5 // pred_fallthru
      _
    %p634 = scmp.le.s32.totalorder 2, %s16
    // Predicated region
    $region53: #{qaeasyconcept_forward.48} parent=5 // pred_check
      %p635 = pneg %p634
    $region54: #{qaeasyconcept_forward.48} parent=5 // pred_check_branch
      %637 = sbr.rel (%p635) target = $region56
    $region55: #{qaeasyconcept_forward.48} parent=5 // pred_region
      %s638 = ssub.s32 %s16, 2
      // Predicated region
      $region57: #{qaeasyconcept_forward.48} parent=55 // pred_check
        %p639 = pneg %p181
      $region58: #{qaeasyconcept_forward.48} parent=55 // pred_check_branch
        %641 = sbr.rel (%p639) target = $region60
      $region59: #{qaeasyconcept_forward.48} parent=55 // pred_region
        %p642 = scmp.lt.s32.totalorder %s22, 1
        %s643 = scalar_select %p642, %s22, 1
        %s644 = scalar_lea.vmem %s6, %s643
      $region60: #{qaeasyconcept_forward.48} parent=55 // pred_fallthru
        _
      // Predicated region
      $region61: #{qaeasyconcept_forward.48} parent=55 // pred_check
        %p645 = pneg %p207
      $region62: #{qaeasyconcept_forward.48} parent=55 // pred_check_branch
        %647 = sbr.rel (%p645) target = $region64
      $region63: #{qaeasyconcept_forward.48} parent=55 // pred_region
        %p648 = scmp.lt.s32.totalorder %s22, 1
        %s649 = scalar_select %p648, %s22, 1
        %s650 = scalar_lea.vmem %s7, %s649
      $region64: #{qaeasyconcept_forward.48} parent=55 // pred_fallthru
        _
    $region56: #{qaeasyconcept_forward.48} parent=5 // pred_fallthru
      _
  $region6: #{qaeasyconcept_forward.48} parent=0 // loop_footer
    %s20 = sadd.s32 1, %s16
  $region7: #{qaeasyconcept_forward.48} parent=0 // loop_footer_branch
    %15 = sbr.rel target = $region3
  $region8: #{qaeasyconcept_forward.48} parent=0 // loop_exit
    _

// kernel: qaeasyconcept_forward.49
$region0: #{qaeasyconcept_forward.49}
  #allocation0 [shape = 'u32[]', space=smem, size = 0x4, offset = 0x4, fixed_abs, tag = 'smem constant byte address 0x4 - core index']
  #allocation1 [shape = 'u32[144,128]{1,0:T(1,128)}', space=vmem, size = 0x12000, scoped, tag = 'internal scratch']
  %s0 = inlined_call_operand.vmem [shape: f32[2,32], index: 0, kind: input, shape index: {}]
  %s1 = inlined_call_operand.vmem [shape: f32[2,32], index: 1, kind: input, shape index: {}]
  %s2 = inlined_call_operand.vmem [shape: f32[2,32], index: 2, kind: input, shape index: {}]
  %s3 = inlined_call_operand.vmem [shape: f32[2,32], index: 3, kind: input, shape index: {}]
  %s4 = inlined_call_operand.vmem [shape: bf16[128,32], index: 4, kind: input, shape index: {}]
  %s5 = inlined_call_operand.vmem [shape: bf16[32,32], index: 5, kind: input, shape index: {}]
  %s6 = inlined_call_operand.vmem [shape: f32[1,32], index: 6, kind: input, shape index: {}]
  %s7 = inlined_call_operand.vmem [shape: bf16[32,3], index: 7, kind: input, shape index: {}]
  %s8 = inlined_call_operand.vmem [shape: f32[1,3], index: 8, kind: input, shape index: {}]
  %s9 = inlined_call_operand.hbm [shape: f32[2,3], index: 9, kind: output, shape index: {}]
  %s10 = sld [smem:[#allocation0]]
  $region46: #{qaeasyconcept_forward.49} parent=0
    _
  %s12 = ssub.s32 1, %s10
  %s13 = scalar_select 0, %s12, %s10
  $region1: #{qaeasyconcept_forward.49} parent=0
    #allocation2 [shape = 'u8[1024]{0}', space=vmem, size = 0x400, scoped, tag = 'output window, operand 0, single buffered']
    #allocation3 [shape = 's32[1]{0}', space=sflag, size = 0x4, scoped, tag = 'scoped memory for qaeasyconcept_forward.49']
    %14 = vsyncpa [#allocation3], 0
    // Predicated region
    $region2: #{qaeasyconcept_forward.49} parent=1 // pred_check
      _
    $region3: #{qaeasyconcept_forward.49} parent=1 // pred_check_branch
      %16 = sbr.rel (0) target = $region5
    $region4: #{qaeasyconcept_forward.49} parent=1 // pred_region
      _
    $region5: #{qaeasyconcept_forward.49} parent=1 // pred_fallthru
      _
    // Predicated region
    $region6: #{qaeasyconcept_forward.49} parent=1 // pred_check
      _
    $region7: #{qaeasyconcept_forward.49} parent=1 // pred_check_branch
      %18 = sbr.rel (0) target = $region9
    $region8: #{qaeasyconcept_forward.49} parent=1 // pred_region
      _
    $region9: #{qaeasyconcept_forward.49} parent=1 // pred_fallthru
      _
    // Predicated region
    $region10: #{qaeasyconcept_forward.49} parent=1 // pred_check
      _
    $region11: #{qaeasyconcept_forward.49} parent=1 // pred_check_branch
      %20 = sbr.rel (0) target = $region13
    $region12: #{qaeasyconcept_forward.49} parent=1 // pred_region
      _
    $region13: #{qaeasyconcept_forward.49} parent=1 // pred_fallthru
      _
    // Predicated region
    $region14: #{qaeasyconcept_forward.49} parent=1 // pred_check
      _
    $region15: #{qaeasyconcept_forward.49} parent=1 // pred_check_branch
      %22 = sbr.rel (0) target = $region17
    $region16: #{qaeasyconcept_forward.49} parent=1 // pred_region
      _
    $region17: #{qaeasyconcept_forward.49} parent=1 // pred_fallthru
      _
    // Predicated region
    $region18: #{qaeasyconcept_forward.49} parent=1 // pred_check
      _
    $region19: #{qaeasyconcept_forward.49} parent=1 // pred_check_branch
      %24 = sbr.rel (0) target = $region21
    $region20: #{qaeasyconcept_forward.49} parent=1 // pred_region
      _
    $region21: #{qaeasyconcept_forward.49} parent=1 // pred_fallthru
      _
    // Predicated region
    $region22: #{qaeasyconcept_forward.49} parent=1 // pred_check
      _
    $region23: #{qaeasyconcept_forward.49} parent=1 // pred_check_branch
      %26 = sbr.rel (0) target = $region25
    $region24: #{qaeasyconcept_forward.49} parent=1 // pred_region
      _
    $region25: #{qaeasyconcept_forward.49} parent=1 // pred_fallthru
      _
    // Predicated region
    $region26: #{qaeasyconcept_forward.49} parent=1 // pred_check
      _
    $region27: #{qaeasyconcept_forward.49} parent=1 // pred_check_branch
      %28 = sbr.rel (0) target = $region29
    $region28: #{qaeasyconcept_forward.49} parent=1 // pred_region
      _
    $region29: #{qaeasyconcept_forward.49} parent=1 // pred_fallthru
      _
    // Predicated region
    $region30: #{qaeasyconcept_forward.49} parent=1 // pred_check
      _
    $region31: #{qaeasyconcept_forward.49} parent=1 // pred_check_branch
      %30 = sbr.rel (0) target = $region33
    $region32: #{qaeasyconcept_forward.49} parent=1 // pred_region
      _
    $region33: #{qaeasyconcept_forward.49} parent=1 // pred_fallthru
      _
    // Predicated region
    $region34: #{qaeasyconcept_forward.49} parent=1 // pred_check
      _
    $region35: #{qaeasyconcept_forward.49} parent=1 // pred_check_branch
      %32 = sbr.rel (0) target = $region37
    $region36: #{qaeasyconcept_forward.49} parent=1 // pred_region
      _
    $region37: #{qaeasyconcept_forward.49} parent=1 // pred_fallthru
      _
    %v34 = vld [vmem:[%s4] sm:$0xf]
    %v35 = vld [vmem:[%s4 + $0x4] sm:$0xf]
    %v36 = vld [vmem:[%s4 + $0x8] sm:$0xf]
    %v37 = vld [vmem:[%s4 + $0xc] sm:$0xf]
    %v38 = vld [vmem:[%s4 + $0x10] sm:$0xf]
    %v39 = vld [vmem:[%s4 + $0x14] sm:$0xf]
    %v40 = vld [vmem:[%s4 + $0x18] sm:$0xf]
    %v41 = vld [vmem:[%s4 + $0x1c] sm:$0xf]
    %v42 = vld [vmem:[%s4 + $0x20] sm:$0xf]
    %v43 = vld [vmem:[%s4 + $0x24] sm:$0xf]
    %v44 = vld [vmem:[%s4 + $0x28] sm:$0xf]
    %v45 = vld [vmem:[%s4 + $0x2c] sm:$0xf]
    %v46 = vld [vmem:[%s4 + $0x30] sm:$0xf]
    %v47 = vld [vmem:[%s4 + $0x34] sm:$0xf]
    %v48 = vld [vmem:[%s4 + $0x38] sm:$0xf]
    %v49 = vld [vmem:[%s4 + $0x3c] sm:$0xf]
    %v50 = vld [vmem:[%s0] sm:$0x3]
    %v51 = vpack.c.bf16 %v50, %v50
    %v52 = vld [vmem:[%s1] sm:$0x3]
    %v53 = vpack.c.bf16 %v52, %v52
    %v58 = vunpack.c.l.b16 %v38
    %v59 = vunpack.c.l.b16 %v39
    %v60 = vunpack.c.l.b16 %v40
    %v61 = vunpack.c.l.b16 %v41
    %v62 = vpack.c.b16 %v59, %v58
    %v63 = vpack.c.b16 %v61, %v60
    %vm66 = vcmask 261120
    %v68 = vsel %vm66, %v53, 0
    %70 = vmatprep.subr.bf16.mxu0 0
    %71 = vmatpush1.bf16.msra.mxu0 %v62
    %72 = vmatprep.subr.bf16.mxu0 0
    %73 = vmatpush1.bf16.msra.mxu0 %v63
    %74 = vmatprep.subr.bf16.mxu0 0
    %75 = vmatpush1.bf16.msra.mxu0 0
    %76 = vmatprep.subr.bf16.mxu0 0
    %77 = vmatpush1.bf16.msra.mxu0 0
    %78 = vmatprep.subr.bf16.mxu0 0
    %79 = vmatpush1.bf16.msra.mxu0 0
    %80 = vmatprep.subr.bf16.mxu0 0
    %81 = vmatpush1.bf16.msra.mxu0 0
    %82 = vmatprep.subr.bf16.mxu0 0
    %83 = vmatpush1.bf16.msra.mxu0 0
    %84 = vmatprep.subr.bf16.mxu0 0
    %85 = vmatpush1.bf16.msra.mxu0 0
    %86 = vmatprep.subr.bf16.mxu0 0
    %87 = vmatpush1.bf16.msra.mxu0 0
    %88 = vmatprep.subr.bf16.mxu0 0
    %89 = vmatpush1.bf16.msra.mxu0 0
    %90 = vmatprep.subr.bf16.mxu0 0
    %91 = vmatpush1.bf16.msra.mxu0 0
    %92 = vmatprep.subr.bf16.mxu0 0
    %93 = vmatpush1.bf16.msra.mxu0 0
    %94 = vmatprep.subr.bf16.mxu0 0
    %95 = vmatpush1.bf16.msra.mxu0 0
    %96 = vmatprep.subr.bf16.mxu0 0
    %97 = vmatpush1.bf16.msra.mxu0 0
    %98 = vmatprep.subr.bf16.mxu0 0
    %99 = vmatpush1.bf16.msra.mxu0 0
    %100 = vmatprep.subr.bf16.mxu0 0
    %101 = vmatpush1.bf16.msra.mxu0 0
    %102 = vmatprep.mubr.bf16.mxu0 0
    %103 = vmatmul.mubr.bf16.gmra.mrb[0].mxu0 %v68
    %v104 = vpop.f32.mrb[0].mxu0
    %v105 = vadd.f32 0.0, %v104
    %v106 = vpop.f32.mrb[0].mxu0
    %v107 = vpop.f32.mrb[0].mxu0
    %v108 = vpop.f32.mrb[0].mxu0
    %109 = vdwg.mxu0
    %v114 = vunpack.c.l.b16 %v34
    %v115 = vunpack.c.l.b16 %v35
    %v116 = vunpack.c.l.b16 %v36
    %v117 = vunpack.c.l.b16 %v37
    %v118 = vpack.c.b16 %v115, %v114
    %v119 = vpack.c.b16 %v117, %v116
    %v123 = vsel %vm66, %v51, 0
    %125 = vmatprep.subr.bf16.mxu0 0
    %126 = vmatpush1.bf16.msra.mxu0 %v118
    %127 = vmatprep.subr.bf16.mxu0 0
    %128 = vmatpush1.bf16.msra.mxu0 %v119
    %129 = vmatprep.subr.bf16.mxu0 0
    %130 = vmatpush1.bf16.msra.mxu0 0
    %131 = vmatprep.subr.bf16.mxu0 0
    %132 = vmatpush1.bf16.msra.mxu0 0
    %133 = vmatprep.subr.bf16.mxu0 0
    %134 = vmatpush1.bf16.msra.mxu0 0
    %135 = vmatprep.subr.bf16.mxu0 0
    %136 = vmatpush1.bf16.msra.mxu0 0
    %137 = vmatprep.subr.bf16.mxu0 0
    %138 = vmatpush1.bf16.msra.mxu0 0
    %139 = vmatprep.subr.bf16.mxu0 0
    %140 = vmatpush1.bf16.msra.mxu0 0
    %141 = vmatprep.subr.bf16.mxu0 0
    %142 = vmatpush1.bf16.msra.mxu0 0
    %143 = vmatprep.subr.bf16.mxu0 0
    %144 = vmatpush1.bf16.msra.mxu0 0
    %145 = vmatprep.subr.bf16.mxu0 0
    %146 = vmatpush1.bf16.msra.mxu0 0
    %147 = vmatprep.subr.bf16.mxu0 0
    %148 = vmatpush1.bf16.msra.mxu0 0
    %149 = vmatprep.subr.bf16.mxu0 0
    %150 = vmatpush1.bf16.msra.mxu0 0
    %151 = vmatprep.subr.bf16.mxu0 0
    %152 = vmatpush1.bf16.msra.mxu0 0
    %153 = vmatprep.subr.bf16.mxu0 0
    %154 = vmatpush1.bf16.msra.mxu0 0
    %155 = vmatprep.subr.bf16.mxu0 0
    %156 = vmatpush1.bf16.msra.mxu0 0
    %157 = vmatprep.mubr.bf16.mxu0 0
    %158 = vmatmul.mubr.bf16.gmra.mrb[0].mxu0 %v123
    %v159 = vpop.f32.mrb[0].mxu0
    %v160 = vadd.f32 %v105, %v159
    %v161 = vpop.f32.mrb[0].mxu0
    %v162 = vpop.f32.mrb[0].mxu0
    %v163 = vpop.f32.mrb[0].mxu0
    %164 = vdwg.mxu0
    %v165 = vld [vmem:[%s2] sm:$0x3]
    %v166 = vpack.c.bf16 %v165, %v165
    %v171 = vunpack.c.l.b16 %v42
    %v172 = vunpack.c.l.b16 %v43
    %v173 = vunpack.c.l.b16 %v44
    %v174 = vunpack.c.l.b16 %v45
    %v175 = vpack.c.b16 %v172, %v171
    %v176 = vpack.c.b16 %v174, %v173
    %v180 = vsel %vm66, %v166, 0
    %182 = vmatprep.subr.bf16.mxu0 0
    %183 = vmatpush1.bf16.msra.mxu0 %v175
    %184 = vmatprep.subr.bf16.mxu0 0
    %185 = vmatpush1.bf16.msra.mxu0 %v176
    %186 = vmatprep.subr.bf16.mxu0 0
    %187 = vmatpush1.bf16.msra.mxu0 0
    %188 = vmatprep.subr.bf16.mxu0 0
    %189 = vmatpush1.bf16.msra.mxu0 0
    %190 = vmatprep.subr.bf16.mxu0 0
    %191 = vmatpush1.bf16.msra.mxu0 0
    %192 = vmatprep.subr.bf16.mxu0 0
    %193 = vmatpush1.bf16.msra.mxu0 0
    %194 = vmatprep.subr.bf16.mxu0 0
    %195 = vmatpush1.bf16.msra.mxu0 0
    %196 = vmatprep.subr.bf16.mxu0 0
    %197 = vmatpush1.bf16.msra.mxu0 0
    %198 = vmatprep.subr.bf16.mxu0 0
    %199 = vmatpush1.bf16.msra.mxu0 0
    %200 = vmatprep.subr.bf16.mxu0 0
    %201 = vmatpush1.bf16.msra.mxu0 0
    %202 = vmatprep.subr.bf16.mxu0 0
    %203 = vmatpush1.bf16.msra.mxu0 0
    %204 = vmatprep.subr.bf16.mxu0 0
    %205 = vmatpush1.bf16.msra.mxu0 0
    %206 = vmatprep.subr.bf16.mxu0 0
    %207 = vmatpush1.bf16.msra.mxu0 0
    %208 = vmatprep.subr.bf16.mxu0 0
    %209 = vmatpush1.bf16.msra.mxu0 0
    %210 = vmatprep.subr.bf16.mxu0 0
    %211 = vmatpush1.bf16.msra.mxu0 0
    %212 = vmatprep.subr.bf16.mxu0 0
    %213 = vmatpush1.bf16.msra.mxu0 0
    %214 = vmatprep.mubr.bf16.mxu0 0
    %215 = vmatmul.mubr.bf16.gmra.mrb[0].mxu0 %v180
    %v216 = vpop.f32.mrb[0].mxu0
    %v217 = vadd.f32 0.0, %v216
    %v218 = vpop.f32.mrb[0].mxu0
    %v219 = vpop.f32.mrb[0].mxu0
    %v220 = vpop.f32.mrb[0].mxu0
    %221 = vdwg.mxu0
    %v222 = vadd.f32 %v160, %v217
    %v223 = vld [vmem:[%s3] sm:$0x3]
    %v224 = vpack.c.bf16 %v223, %v223
    %v229 = vunpack.c.l.b16 %v46
    %v230 = vunpack.c.l.b16 %v47
    %v231 = vunpack.c.l.b16 %v48
    %v232 = vunpack.c.l.b16 %v49
    %v233 = vpack.c.b16 %v230, %v229
    %v234 = vpack.c.b16 %v232, %v231
    %v238 = vsel %vm66, %v224, 0
    %240 = vmatprep.subr.bf16.mxu0 0
    %241 = vmatpush1.bf16.msra.mxu0 %v233
    %242 = vmatprep.subr.bf16.mxu0 0
    %243 = vmatpush1.bf16.msra.mxu0 %v234
    %244 = vmatprep.subr.bf16.mxu0 0
    %245 = vmatpush1.bf16.msra.mxu0 0
    %246 = vmatprep.subr.bf16.mxu0 0
    %247 = vmatpush1.bf16.msra.mxu0 0
    %248 = vmatprep.subr.bf16.mxu0 0
    %249 = vmatpush1.bf16.msra.mxu0 0
    %250 = vmatprep.subr.bf16.mxu0 0
    %251 = vmatpush1.bf16.msra.mxu0 0
    %252 = vmatprep.subr.bf16.mxu0 0
    %253 = vmatpush1.bf16.msra.mxu0 0
    %254 = vmatprep.subr.bf16.mxu0 0
    %255 = vmatpush1.bf16.msra.mxu0 0
    %256 = vmatprep.subr.bf16.mxu0 0
    %257 = vmatpush1.bf16.msra.mxu0 0
    %258 = vmatprep.subr.bf16.mxu0 0
    %259 = vmatpush1.bf16.msra.mxu0 0
    %260 = vmatprep.subr.bf16.mxu0 0
    %261 = vmatpush1.bf16.msra.mxu0 0
    %262 = vmatprep.subr.bf16.mxu0 0
    %263 = vmatpush1.bf16.msra.mxu0 0
    %264 = vmatprep.subr.bf16.mxu0 0
    %265 = vmatpush1.bf16.msra.mxu0 0
    %266 = vmatprep.subr.bf16.mxu0 0
    %267 = vmatpush1.bf16.msra.mxu0 0
    %268 = vmatprep.subr.bf16.mxu0 0
    %269 = vmatpush1.bf16.msra.mxu0 0
    %270 = vmatprep.subr.bf16.mxu0 0
    %271 = vmatpush1.bf16.msra.mxu0 0
    %272 = vmatprep.mubr.bf16.mxu0 0
    %273 = vmatmul.mubr.bf16.gmra.mrb[0].mxu0 %v238
    %v274 = vpop.f32.mrb[0].mxu0
    %v275 = vadd.f32 0.0, %v274
    %v276 = vpop.f32.mrb[0].mxu0
    %v277 = vpop.f32.mrb[0].mxu0
    %v278 = vpop.f32.mrb[0].mxu0
    %279 = vdwg.mxu0
    %v280 = vadd.f32 %v222, %v275
    %v281 = vpack.c.bf16 %v280, %v280
    %v282 = vld [vmem:[%s5] sm:$0xf]
    %v283 = vld [vmem:[%s5 + $0x4] sm:$0xf]
    %v284 = vld [vmem:[%s5 + $0x8] sm:$0xf]
    %v285 = vld [vmem:[%s5 + $0xc] sm:$0xf]
    %v286 = vld [vmem:[%s6] sm:$0x1]
    %v288 = vlaneseq
    %v289 = vshrl.u32 %v288, 7
    %v290 = vsub.s32 0, %v289
    %v291 = vrot.slane %v286, %v290
    %v297 = vunpack.c.l.b16 %v282
    %v298 = vunpack.c.l.b16 %v283
    %v299 = vunpack.c.l.b16 %v284
    %v300 = vunpack.c.l.b16 %v285
    %v301 = vpack.c.b16 %v298, %v297
    %v302 = vpack.c.b16 %v300, %v299
    %v306 = vsel %vm66, %v281, 0
    %308 = vmatprep.subr.bf16.mxu0 0
    %309 = vmatpush1.bf16.msra.mxu0 %v301
    %310 = vmatprep.subr.bf16.mxu0 0
    %311 = vmatpush1.bf16.msra.mxu0 %v302
    %312 = vmatprep.subr.bf16.mxu0 0
    %313 = vmatpush1.bf16.msra.mxu0 0
    %314 = vmatprep.subr.bf16.mxu0 0
    %315 = vmatpush1.bf16.msra.mxu0 0
    %316 = vmatprep.subr.bf16.mxu0 0
    %317 = vmatpush1.bf16.msra.mxu0 0
    %318 = vmatprep.subr.bf16.mxu0 0
    %319 = vmatpush1.bf16.msra.mxu0 0
    %320 = vmatprep.subr.bf16.mxu0 0
    %321 = vmatpush1.bf16.msra.mxu0 0
    %322 = vmatprep.subr.bf16.mxu0 0
    %323 = vmatpush1.bf16.msra.mxu0 0
    %324 = vmatprep.subr.bf16.mxu0 0
    %325 = vmatpush1.bf16.msra.mxu0 0
    %326 = vmatprep.subr.bf16.mxu0 0
    %327 = vmatpush1.bf16.msra.mxu0 0
    %328 = vmatprep.subr.bf16.mxu0 0
    %329 = vmatpush1.bf16.msra.mxu0 0
    %330 = vmatprep.subr.bf16.mxu0 0
    %331 = vmatpush1.bf16.msra.mxu0 0
    %332 = vmatprep.subr.bf16.mxu0 0
    %333 = vmatpush1.bf16.msra.mxu0 0
    %334 = vmatprep.subr.bf16.mxu0 0
    %335 = vmatpush1.bf16.msra.mxu0 0
    %336 = vmatprep.subr.bf16.mxu0 0
    %337 = vmatpush1.bf16.msra.mxu0 0
    %338 = vmatprep.subr.bf16.mxu0 0
    %339 = vmatpush1.bf16.msra.mxu0 0
    %340 = vmatprep.mubr.bf16.mxu0 0
    %341 = vmatmul.mubr.bf16.gmra.mrb[0].mxu0 %v306
    %v342 = vpop.f32.mrb[0].mxu0
    %v343 = vadd.f32 %v291, %v342
    %v344 = vpop.f32.mrb[0].mxu0
    %v345 = vpop.f32.mrb[0].mxu0
    %v346 = vpop.f32.mrb[0].mxu0
    %347 = vdwg.mxu0
    %v348 = vtanh.pop %v343
    %v349 = vpack.c.bf16 %v348, %v348
    %v350 = vld [vmem:[%s7] sm:$0xf]
    %v351 = vld [vmem:[%s7 + $0x4] sm:$0xf]
    %v352 = vld [vmem:[%s7 + $0x8] sm:$0xf]
    %v353 = vld [vmem:[%s7 + $0xc] sm:$0xf]
    %v354 = vld [vmem:[%s8] sm:$0x1]
    %v356 = vlaneseq
    %v357 = vshrl.u32 %v356, 7
    %v358 = vsub.s32 0, %v357
    %v359 = vrot.slane %v354, %v358
    %v365 = vunpack.c.l.b16 %v350
    %v366 = vunpack.c.l.b16 %v351
    %v367 = vunpack.c.l.b16 %v352
    %v368 = vunpack.c.l.b16 %v353
    %v369 = vpack.c.b16 %v366, %v365
    %v370 = vpack.c.b16 %v368, %v367
    %v374 = vsel %vm66, %v349, 0
    %376 = vmatprep.subr.bf16.mxu0 0
    %377 = vmatpush1.bf16.msra.mxu0 %v369
    %378 = vmatprep.subr.bf16.mxu0 0
    %379 = vmatpush1.bf16.msra.mxu0 %v370
    %380 = vmatprep.subr.bf16.mxu0 0
    %381 = vmatpush1.bf16.msra.mxu0 0
    %382 = vmatprep.subr.bf16.mxu0 0
    %383 = vmatpush1.bf16.msra.mxu0 0
    %384 = vmatprep.subr.bf16.mxu0 0
    %385 = vmatpush1.bf16.msra.mxu0 0
    %386 = vmatprep.subr.bf16.mxu0 0
    %387 = vmatpush1.bf16.msra.mxu0 0
    %388 = vmatprep.subr.bf16.mxu0 0
    %389 = vmatpush1.bf16.msra.mxu0 0
    %390 = vmatprep.subr.bf16.mxu0 0
    %391 = vmatpush1.bf16.msra.mxu0 0
    %392 = vmatprep.subr.bf16.mxu0 0
    %393 = vmatpush1.bf16.msra.mxu0 0
    %394 = vmatprep.subr.bf16.mxu0 0
    %395 = vmatpush1.bf16.msra.mxu0 0
    %396 = vmatprep.subr.bf16.mxu0 0
    %397 = vmatpush1.bf16.msra.mxu0 0
    %398 = vmatprep.subr.bf16.mxu0 0
    %399 = vmatpush1.bf16.msra.mxu0 0
    %400 = vmatprep.subr.bf16.mxu0 0
    %401 = vmatpush1.bf16.msra.mxu0 0
    %402 = vmatprep.subr.bf16.mxu0 0
    %403 = vmatpush1.bf16.msra.mxu0 0
    %404 = vmatprep.subr.bf16.mxu0 0
    %405 = vmatpush1.bf16.msra.mxu0 0
    %406 = vmatprep.subr.bf16.mxu0 0
    %407 = vmatpush1.bf16.msra.mxu0 0
    %408 = vmatprep.mubr.bf16.mxu0 0
    %409 = vmatmul.mubr.bf16.gmra.mrb[0].mxu0 %v374
    %v410 = vpop.f32.mrb[0].mxu0
    %v411 = vadd.f32 %v359, %v410
    %v412 = vpop.f32.mrb[0].mxu0
    %v413 = vpop.f32.mrb[0].mxu0
    %v414 = vpop.f32.mrb[0].mxu0
    %415 = vdwg.mxu0
    %vm416 = vcmask 17408
    %417 = vst.msk [vmem:[#allocation2] sm:$0x3] %vm416, %v411
    // Predicated region
    $region38: #{qaeasyconcept_forward.49} parent=1 // pred_check
      _
    $region39: #{qaeasyconcept_forward.49} parent=1 // pred_check_branch
      %419 = sbr.rel (0) target = $region41
    $region40: #{qaeasyconcept_forward.49} parent=1 // pred_region
      %s421 = ssub.s32 32, 32
      %422 = vsyncadd [#allocation3], %s421
      %s424 = sshll.u32 [#allocation2], 4
      %s425 = int_to_ptr.vmem [resolvable:$true] %s424
      %427 = dma.vmem_to_hbm [thread:$0]  %s425, 32, %s9, [#allocation3]
    $region41: #{qaeasyconcept_forward.49} parent=1 // pred_fallthru
      _
    // Predicated region
    $region42: #{qaeasyconcept_forward.49} parent=1 // pred_check
      _
    $region43: #{qaeasyconcept_forward.49} parent=1 // pred_check_branch
      %429 = sbr.rel (0) target = $region45
    $region44: #{qaeasyconcept_forward.49} parent=1 // pred_region
      %430 = dma.done [#allocation3], 32
    $region45: #{qaeasyconcept_forward.49} parent=1 // pred_fallthru
      _
    %431 = vsyncpa [#allocation3], 1

</llo_original>
